<compile_context>
chip_gen: v6e
topology: v6e:2x2x1
jax: 0.10.0
libtpu: 0.0.40
codegen_flags: <defaults>
</compile_context>

<pallas_src>
import functools

import jax
import jax.numpy as jnp
from jax.experimental import pallas as pl
from jax.experimental.pallas import tpu as pltpu


# ---------------------------------------------------------------------------
# Pallas kernel: one batch of Wb windows per grid step.
# ---------------------------------------------------------------------------
def _self_attn_window_kernel(x_ref, vec_ref, wqkv_ref, wo_ref, o_ref, *,
                             num_heads, eps, compute_dtype):
    Wb, S, C = x_ref.shape
    dh = C // num_heads

    x = x_ref[...].reshape(Wb * S, C)                       # (Wb*S, C) f32

    # ---- LayerNorm over channels (f32) ----
    gamma = vec_ref[0:1, :]
    beta = vec_ref[1:2, :]
    mean = jnp.mean(x, axis=-1, keepdims=True)
    xc = x - mean
    var = jnp.mean(xc * xc, axis=-1, keepdims=True)
    xn = xc * jax.lax.rsqrt(var + eps) * gamma + beta

    # ---- fused QKV projection: one MXU push, bf16 operands, f32 accumulation ----
    qkv = jnp.dot(xn.astype(compute_dtype), wqkv_ref[...],
                  preferred_element_type=jnp.float32)       # (Wb*S, 3C)
    # 1/sqrt(dh) is already folded into the Q slice of Wqkv / bq.
    q = (qkv[:, 0:C] + vec_ref[2:3, :]).astype(compute_dtype).reshape(Wb, S, C)
    k = (qkv[:, C:2 * C] + vec_ref[3:4, :]).astype(compute_dtype).reshape(Wb, S, C)
    v = (qkv[:, 2 * C:3 * C] + vec_ref[4:5, :]).astype(compute_dtype).reshape(Wb, S, C)

    # ---- attention: short static loop over heads, each einsum batched over Wb ----
    head_outs = []
    for h in range(num_heads):                              # num_heads is small/static
        lo, hi = h * dh, (h + 1) * dh
        qh, kh, vh = q[:, :, lo:hi], k[:, :, lo:hi], v[:, :, lo:hi]
        s = jnp.einsum('wqd,wkd->wqk', qh, kh,
                       preferred_element_type=jnp.float32)  # (Wb, S, S) f32
        s = s - jnp.max(s, axis=-1, keepdims=True)
        p = jnp.exp(s)
        # reciprocal-multiply on the EUP slot instead of a VPU divide
        p = p * pl.reciprocal(jnp.sum(p, axis=-1, keepdims=True), approx=True)
        head_outs.append(
            jnp.einsum('wqk,wkd->wqd', p.astype(compute_dtype), vh,
                       preferred_element_type=jnp.float32))  # (Wb, S, dh)
    attn = jnp.concatenate(head_outs, axis=-1).reshape(Wb * S, C)

    # ---- output projection + residual ----
    proj = jnp.dot(attn.astype(compute_dtype), wo_ref[...],
                   preferred_element_type=jnp.float32) + vec_ref[5:6, :]
    o_ref[...] = (x + proj).reshape(Wb, S, C)


# ---------------------------------------------------------------------------
# Window partition / merge glue (same view ops the PyTorch module performs).
# ---------------------------------------------------------------------------
def _window_partition(x_pad, ws):
    B, C, Hp, Wp = x_pad.shape
    nh, nw = Hp // ws, Wp // ws
    xw = x_pad.reshape(B, C, nh, ws, nw, ws)
    xw = jnp.transpose(xw, (0, 2, 4, 3, 5, 1))              # (B, nh, nw, ws, ws, C)
    return xw.reshape(B * nh * nw, ws * ws, C), (B, nh, nw)


def _window_merge(windows, dims, ws, C):
    B, nh, nw = dims
    out = windows.reshape(B, nh, nw, ws, ws, C)
    out = jnp.transpose(out, (0, 5, 1, 3, 2, 4))            # (B, C, nh, ws, nw, ws)
    return out.reshape(B, C, nh * ws, nw * ws)


# ---------------------------------------------------------------------------
# Wrapper
# ---------------------------------------------------------------------------
def self_attention_2d(x, params, *, window_size, num_heads, eps=1e-5,
                      window_batch=16, compute_dtype=jnp.bfloat16):
    """x: [B, C, H, W] float32 -> [B, C, H, W] float32."""
    B, C, H, W = x.shape
    assert C % num_heads == 0, "channels must be divisible by num_heads"
    ws = window_size
    pad_h = (ws - H % ws) % ws
    pad_w = (ws - W % ws) % ws
    x_pad = (jnp.pad(x, ((0, 0), (0, 0), (0, pad_h), (0, pad_w)))
             if (pad_h or pad_w) else x)
    # TODO(synk): the NCHW -> (NW, S, C) transpose is XLA glue that round-trips HBM
    # once; pltpu.CompilerParams(allow_input_fusion=...) could fuse it into the
    # pallas_call input, left off here for portability.
    windows, dims = _window_partition(x_pad, ws)
    NW, S, _ = windows.shape

    vec, wqkv_t, wo_t = params

    # Windows per grid step: amortize per-step overhead but keep >= 2 grid steps
    # so both TensorCores on a v7x chip get parallel work.
    wb = max(1, min(window_batch, NW))
    if NW >= 2:
        wb = min(wb, max(1, NW // 2))
    nw_pad = pl.cdiv(NW, wb) * wb
    if nw_pad != NW:
        windows = jnp.pad(windows, ((0, nw_pad - NW), (0, 0), (0, 0)))

    kernel = functools.partial(_self_attn_window_kernel, num_heads=num_heads,
                               eps=eps, compute_dtype=compute_dtype)
    const2d = lambda i: (0, 0)
    out = pl.pallas_call(
        kernel,
        out_shape=jax.ShapeDtypeStruct((nw_pad, S, C), jnp.float32),
        grid_spec=pltpu.PrefetchScalarGridSpec(
            num_scalar_prefetch=0,
            grid=(nw_pad // wb,),
            in_specs=[
                pl.BlockSpec((wb, S, C), lambda i: (i, 0, 0)),   # window batch
                pl.BlockSpec((6, C), const2d),                   # [gamma,beta,bq,bk,bv,bo]
                pl.BlockSpec((C, 3 * C), const2d),               # fused Wqkv^T (bf16)
                pl.BlockSpec((C, C), const2d),                   # Wo^T (bf16)
            ],
            out_specs=pl.BlockSpec((wb, S, C), lambda i: (i, 0, 0)),
        ),
        compiler_params=pltpu.CompilerParams(
            dimension_semantics=("parallel",)),
    )(windows, vec, wqkv_t, wo_t)

    out = _window_merge(out[:NW], dims, ws, C)
    return out[:, :, :H, :W]


# ---------------------------------------------------------------------------
# Parameter prep: matches nn.LayerNorm(C) + nn.MultiheadAttention(C, num_heads),
# pre-packed for the kernel (fused QKV, scale folded into Q, vectors stacked).
# ---------------------------------------------------------------------------
def init_params(key, channels, num_heads, compute_dtype=jnp.bfloat16):
    C = channels
    assert C % num_heads == 0
    dh = C // num_heads
    scale = 1.0 / float(dh) ** 0.5
    k = jax.random.split(key, 4)
    gamma = jnp.ones((C,), jnp.float32)
    beta = jnp.zeros((C,), jnp.float32)
    in_proj = jax.random.normal(k[0], (3 * C, C), jnp.float32) * (1.0 / C ** 0.5)
    in_bias = jax.random.normal(k[1], (3 * C,), jnp.float32) * 0.02
    wq, wk, wv = in_proj[0:C], in_proj[C:2 * C], in_proj[2 * C:3 * C]
    bq, bk, bv = in_bias[0:C], in_bias[C:2 * C], in_bias[2 * C:3 * C]
    wq = wq * scale                      # fold 1/sqrt(head_dim) into the Q projection
    bq = bq * scale
    wo = jax.random.normal(k[2], (C, C), jnp.float32) * (1.0 / C ** 0.5)
    bo = jax.random.normal(k[3], (C,), jnp.float32) * 0.02

    wqkv_t = jnp.concatenate([wq.T, wk.T, wv.T], axis=1).astype(compute_dtype)  # (C, 3C)
    wo_t = wo.T.astype(compute_dtype)                                           # (C, C)
    vec = jnp.stack([gamma, beta, bq, bk, bv, bo], axis=0).astype(jnp.float32)  # (6, C)
    return (vec, wqkv_t, wo_t)


# ---------------------------------------------------------------------------
# Pure-JAX f32 reference (same packed params, weights up-cast to f32).
# ---------------------------------------------------------------------------
def reference_self_attention_2d(x, params, *, window_size, num_heads, eps=1e-5):
    vec, wqkv_t, wo_t = params
    vec = vec.astype(jnp.float32)
    wqkv_t = wqkv_t.astype(jnp.float32)
    wo_t = wo_t.astype(jnp.float32)
    B, C, H, W = x.shape
    ws = window_size
    pad_h = (ws - H % ws) % ws
    pad_w = (ws - W % ws) % ws
    x_pad = (jnp.pad(x, ((0, 0), (0, 0), (0, pad_h), (0, pad_w)))
             if (pad_h or pad_w) else x)
    windows, dims = _window_partition(x_pad, ws)
    NW, S, _ = windows.shape
    dh = C // num_heads

    gamma, beta, bq, bk, bv, bo = (vec[i] for i in range(6))
    mean = windows.mean(-1, keepdims=True)
    var = ((windows - mean) ** 2).mean(-1, keepdims=True)
    xn = (windows - mean) * jax.lax.rsqrt(var + eps) * gamma + beta

    q = xn @ wqkv_t[:, 0:C] + bq          # scale already folded in
    k = xn @ wqkv_t[:, C:2 * C] + bk
    v = xn @ wqkv_t[:, 2 * C:3 * C] + bv
    q = q.reshape(NW, S, num_heads, dh).transpose(0, 2, 1, 3)
    k = k.reshape(NW, S, num_heads, dh).transpose(0, 2, 1, 3)
    v = v.reshape(NW, S, num_heads, dh).transpose(0, 2, 1, 3)
    s = q @ jnp.swapaxes(k, -1, -2)
    p = jax.nn.softmax(s, axis=-1)
    o = (p @ v).transpose(0, 2, 1, 3).reshape(NW, S, C)
    out_w = windows + o @ wo_t + bo
    out = _window_merge(out_w, dims, ws, C)
    return out[:, :, :H, :W]


if __name__ == "__main__":
    key = jax.random.PRNGKey(0)
    B, C, H, W = 2, 32, 12, 12            # H, W not multiples of window -> exercises padding
    num_heads = 4
    window_size = 8

    k_x, k_p = jax.random.split(key)
    x = jax.random.normal(k_x, (B, C, H, W), jnp.float32)
    params = init_params(k_p, C, num_heads)

    fn = jax.jit(functools.partial(self_attention_2d, window_size=window_size,
                                   num_heads=num_heads))
    y = fn(x, params)
    jax.block_until_ready(y)

    assert y.shape == (B, C, H, W) and y.dtype == jnp.float32
    assert bool(jnp.isfinite(y).all())
    y_ref = reference_self_attention_2d(x, params, window_size=window_size,
                                        num_heads=num_heads)
    max_err = float(jnp.max(jnp.abs(y - y_ref)))
    assert max_err < 0.15, f"kernel/reference mismatch: max abs err {max_err}"
    print("KERNEL_OK")
</pallas_src>

<mosaic_0001>
module attributes {stable_mosaic.version = 11 : i64} {
  func.func @_self_attn_window_kernel(%arg0: i32, %arg1: memref<4x64x32xf32, #tpu.memory_space<vmem>>, %arg2: memref<6x32xf32, #tpu.memory_space<vmem>>, %arg3: memref<32x96xbf16, #tpu.memory_space<vmem>>, %arg4: memref<32x32xbf16, #tpu.memory_space<vmem>>, %arg5: memref<4x64x32xf32, #tpu.memory_space<vmem>>) attributes {dimension_semantics = [#tpu.dimension_semantics<parallel>], iteration_bounds = array<i64: 2>, scalar_prefetch = 0 : i64, scratch_operands = 0 : i64, tpu.core_type = #tpu.core_type<tc>, window_params = [{transform_indices = @transform_0, window_bounds = array<i64: 4, 64, 32>}, {pipeline_mode = #tpu.pipeline_mode<synchronous>, transform_indices = @transform_1, window_bounds = array<i64: 6, 32>}, {pipeline_mode = #tpu.pipeline_mode<synchronous>, transform_indices = @transform_2, window_bounds = array<i64: 32, 96>}, {pipeline_mode = #tpu.pipeline_mode<synchronous>, transform_indices = @transform_3, window_bounds = array<i64: 32, 32>}, {transform_indices = @transform_4, window_bounds = array<i64: 4, 64, 32>}]} {
    %c0 = arith.constant 0 : index
    %c0_0 = arith.constant 0 : index
    %c0_1 = arith.constant 0 : index
    %0 = vector.load %arg1[%c0, %c0_0, %c0_1] : memref<4x64x32xf32, #tpu.memory_space<vmem>>, vector<4x64x32xf32>
    %1 = vector.shape_cast %0 : vector<4x64x32xf32> to vector<256x32xf32>
    %c0_2 = arith.constant 0 : index
    %c0_3 = arith.constant 0 : index
    %2 = vector.load %arg2[%c0_2, %c0_3] : memref<6x32xf32, #tpu.memory_space<vmem>>, vector<1x32xf32>
    %c1 = arith.constant 1 : index
    %c0_4 = arith.constant 0 : index
    %3 = vector.load %arg2[%c1, %c0_4] : memref<6x32xf32, #tpu.memory_space<vmem>>, vector<1x32xf32>
    %cst = arith.constant dense<0.000000e+00> : vector<256xf32>
    %4 = vector.multi_reduction <add>, %1, %cst [1] : vector<256x32xf32> to vector<256xf32>
    %5 = vector.shape_cast %4 : vector<256xf32> to vector<256x1xf32>
    %cst_5 = arith.constant 3.200000e+01 : f32
    %6 = vector.broadcast %cst_5 : f32 to vector<256x1xf32>
    %7 = arith.divf %5, %6 : vector<256x1xf32>
    %8 = vector.broadcast %7 : vector<256x1xf32> to vector<256x32xf32>
    %9 = arith.subf %1, %8 : vector<256x32xf32>
    %10 = arith.mulf %9, %9 : vector<256x32xf32>
    %cst_6 = arith.constant dense<0.000000e+00> : vector<256xf32>
    %11 = vector.multi_reduction <add>, %10, %cst_6 [1] : vector<256x32xf32> to vector<256xf32>
    %12 = vector.shape_cast %11 : vector<256xf32> to vector<256x1xf32>
    %cst_7 = arith.constant 3.200000e+01 : f32
    %13 = vector.broadcast %cst_7 : f32 to vector<256x1xf32>
    %14 = arith.divf %12, %13 : vector<256x1xf32>
    %cst_8 = arith.constant 9.99999974E-6 : f32
    %15 = vector.broadcast %cst_8 : f32 to vector<256x1xf32>
    %16 = arith.addf %14, %15 : vector<256x1xf32>
    %17 = math.rsqrt %16 : vector<256x1xf32>
    %18 = vector.broadcast %17 : vector<256x1xf32> to vector<256x32xf32>
    %19 = arith.mulf %9, %18 : vector<256x32xf32>
    %20 = vector.broadcast %2 : vector<1x32xf32> to vector<256x32xf32>
    %21 = arith.mulf %19, %20 : vector<256x32xf32>
    %22 = vector.broadcast %3 : vector<1x32xf32> to vector<256x32xf32>
    %23 = arith.addf %21, %22 : vector<256x32xf32>
    %24 = arith.truncf %23 : vector<256x32xf32> to vector<256x32xbf16>
    %c0_9 = arith.constant 0 : index
    %c0_10 = arith.constant 0 : index
    %25 = vector.load %arg3[%c0_9, %c0_10] : memref<32x96xbf16, #tpu.memory_space<vmem>>, vector<32x96xbf16>
    %cst_11 = arith.constant dense<0.000000e+00> : vector<256x96xf32>
    %26 = tpu.matmul %24, %25, %cst_11 {dimension_numbers = #tpu.dot_dimension_numbers<[1], [0], [0], [1], [0, 0, 1, 1], [], []>} : vector<256x32xbf16>, vector<32x96xbf16>, vector<256x96xf32> -> vector<256x96xf32>
    %27 = vector.extract_strided_slice %26 {offsets = [0, 0], sizes = [256, 32], strides = [1, 1]} : vector<256x96xf32> to vector<256x32xf32>
    %c2 = arith.constant 2 : index
    %c0_12 = arith.constant 0 : index
    %28 = vector.load %arg2[%c2, %c0_12] : memref<6x32xf32, #tpu.memory_space<vmem>>, vector<1x32xf32>
    %29 = vector.broadcast %28 : vector<1x32xf32> to vector<256x32xf32>
    %30 = arith.addf %27, %29 : vector<256x32xf32>
    %31 = arith.truncf %30 : vector<256x32xf32> to vector<256x32xbf16>
    %32 = vector.shape_cast %31 : vector<256x32xbf16> to vector<4x64x32xbf16>
    %33 = vector.extract_strided_slice %26 {offsets = [0, 32], sizes = [256, 32], strides = [1, 1]} : vector<256x96xf32> to vector<256x32xf32>
    %c3 = arith.constant 3 : index
    %c0_13 = arith.constant 0 : index
    %34 = vector.load %arg2[%c3, %c0_13] : memref<6x32xf32, #tpu.memory_space<vmem>>, vector<1x32xf32>
    %35 = vector.broadcast %34 : vector<1x32xf32> to vector<256x32xf32>
    %36 = arith.addf %33, %35 : vector<256x32xf32>
    %37 = arith.truncf %36 : vector<256x32xf32> to vector<256x32xbf16>
    %38 = vector.shape_cast %37 : vector<256x32xbf16> to vector<4x64x32xbf16>
    %39 = vector.extract_strided_slice %26 {offsets = [0, 64], sizes = [256, 32], strides = [1, 1]} : vector<256x96xf32> to vector<256x32xf32>
    %c4 = arith.constant 4 : index
    %c0_14 = arith.constant 0 : index
    %40 = vector.load %arg2[%c4, %c0_14] : memref<6x32xf32, #tpu.memory_space<vmem>>, vector<1x32xf32>
    %41 = vector.broadcast %40 : vector<1x32xf32> to vector<256x32xf32>
    %42 = arith.addf %39, %41 : vector<256x32xf32>
    %43 = arith.truncf %42 : vector<256x32xf32> to vector<256x32xbf16>
    %44 = vector.shape_cast %43 : vector<256x32xbf16> to vector<4x64x32xbf16>
    %45 = vector.extract_strided_slice %32 {offsets = [0, 0, 0], sizes = [4, 64, 8], strides = [1, 1, 1]} : vector<4x64x32xbf16> to vector<4x64x8xbf16>
    %46 = vector.extract_strided_slice %38 {offsets = [0, 0, 0], sizes = [4, 64, 8], strides = [1, 1, 1]} : vector<4x64x32xbf16> to vector<4x64x8xbf16>
    %47 = vector.extract_strided_slice %44 {offsets = [0, 0, 0], sizes = [4, 64, 8], strides = [1, 1, 1]} : vector<4x64x32xbf16> to vector<4x64x8xbf16>
    "tpu.trace_start"() <{level = 10 : i32, message = "wqd,wkd->wqk"}> : () -> ()
    %cst_15 = arith.constant dense<0.000000e+00> : vector<4x64x64xf32>
    %48 = tpu.matmul %45, %46, %cst_15 {dimension_numbers = #tpu.dot_dimension_numbers<[2], [2], [1], [1], [0, 0, 0, 1, 1, 1], [0], [0]>} : vector<4x64x8xbf16>, vector<4x64x8xbf16>, vector<4x64x64xf32> -> vector<4x64x64xf32>
    "tpu.trace_stop"() : () -> ()
    %cst_16 = arith.constant dense<0xFF800000> : vector<4x64xf32>
    %49 = vector.multi_reduction <maximumf>, %48, %cst_16 [2] : vector<4x64x64xf32> to vector<4x64xf32>
    %50 = vector.shape_cast %49 : vector<4x64xf32> to vector<4x64x1xf32>
    %51 = vector.broadcast %50 : vector<4x64x1xf32> to vector<4x64x64xf32>
    %52 = arith.subf %48, %51 : vector<4x64x64xf32>
    %53 = math.exp %52 : vector<4x64x64xf32>
    %cst_17 = arith.constant dense<0.000000e+00> : vector<4x64xf32>
    %54 = vector.multi_reduction <add>, %53, %cst_17 [2] : vector<4x64x64xf32> to vector<4x64xf32>
    %55 = vector.shape_cast %54 : vector<4x64xf32> to vector<4x64x1xf32>
    %56 = tpu.reciprocal %55 {approx = true} : vector<4x64x1xf32> -> vector<4x64x1xf32>
    %57 = vector.broadcast %56 : vector<4x64x1xf32> to vector<4x64x64xf32>
    %58 = arith.mulf %53, %57 : vector<4x64x64xf32>
    %59 = arith.truncf %58 : vector<4x64x64xf32> to vector<4x64x64xbf16>
    "tpu.trace_start"() <{level = 10 : i32, message = "wqk,wkd->wqd"}> : () -> ()
    %cst_18 = arith.constant dense<0.000000e+00> : vector<4x64x8xf32>
    %60 = tpu.matmul %59, %47, %cst_18 {dimension_numbers = #tpu.dot_dimension_numbers<[2], [1], [1], [2], [0, 0, 0, 1, 1, 2], [0], [0]>} : vector<4x64x64xbf16>, vector<4x64x8xbf16>, vector<4x64x8xf32> -> vector<4x64x8xf32>
    "tpu.trace_stop"() : () -> ()
    %61 = vector.extract_strided_slice %32 {offsets = [0, 0, 8], sizes = [4, 64, 8], strides = [1, 1, 1]} : vector<4x64x32xbf16> to vector<4x64x8xbf16>
    %62 = vector.extract_strided_slice %38 {offsets = [0, 0, 8], sizes = [4, 64, 8], strides = [1, 1, 1]} : vector<4x64x32xbf16> to vector<4x64x8xbf16>
    %63 = vector.extract_strided_slice %44 {offsets = [0, 0, 8], sizes = [4, 64, 8], strides = [1, 1, 1]} : vector<4x64x32xbf16> to vector<4x64x8xbf16>
    "tpu.trace_start"() <{level = 10 : i32, message = "wqd,wkd->wqk"}> : () -> ()
    %cst_19 = arith.constant dense<0.000000e+00> : vector<4x64x64xf32>
    %64 = tpu.matmul %61, %62, %cst_19 {dimension_numbers = #tpu.dot_dimension_numbers<[2], [2], [1], [1], [0, 0, 0, 1, 1, 1], [0], [0]>} : vector<4x64x8xbf16>, vector<4x64x8xbf16>, vector<4x64x64xf32> -> vector<4x64x64xf32>
    "tpu.trace_stop"() : () -> ()
    %cst_20 = arith.constant dense<0xFF800000> : vector<4x64xf32>
    %65 = vector.multi_reduction <maximumf>, %64, %cst_20 [2] : vector<4x64x64xf32> to vector<4x64xf32>
    %66 = vector.shape_cast %65 : vector<4x64xf32> to vector<4x64x1xf32>
    %67 = vector.broadcast %66 : vector<4x64x1xf32> to vector<4x64x64xf32>
    %68 = arith.subf %64, %67 : vector<4x64x64xf32>
    %69 = math.exp %68 : vector<4x64x64xf32>
    %cst_21 = arith.constant dense<0.000000e+00> : vector<4x64xf32>
    %70 = vector.multi_reduction <add>, %69, %cst_21 [2] : vector<4x64x64xf32> to vector<4x64xf32>
    %71 = vector.shape_cast %70 : vector<4x64xf32> to vector<4x64x1xf32>
    %72 = tpu.reciprocal %71 {approx = true} : vector<4x64x1xf32> -> vector<4x64x1xf32>
    %73 = vector.broadcast %72 : vector<4x64x1xf32> to vector<4x64x64xf32>
    %74 = arith.mulf %69, %73 : vector<4x64x64xf32>
    %75 = arith.truncf %74 : vector<4x64x64xf32> to vector<4x64x64xbf16>
    "tpu.trace_start"() <{level = 10 : i32, message = "wqk,wkd->wqd"}> : () -> ()
    %cst_22 = arith.constant dense<0.000000e+00> : vector<4x64x8xf32>
    %76 = tpu.matmul %75, %63, %cst_22 {dimension_numbers = #tpu.dot_dimension_numbers<[2], [1], [1], [2], [0, 0, 0, 1, 1, 2], [0], [0]>} : vector<4x64x64xbf16>, vector<4x64x8xbf16>, vector<4x64x8xf32> -> vector<4x64x8xf32>
    "tpu.trace_stop"() : () -> ()
    %77 = vector.extract_strided_slice %32 {offsets = [0, 0, 16], sizes = [4, 64, 8], strides = [1, 1, 1]} : vector<4x64x32xbf16> to vector<4x64x8xbf16>
    %78 = vector.extract_strided_slice %38 {offsets = [0, 0, 16], sizes = [4, 64, 8], strides = [1, 1, 1]} : vector<4x64x32xbf16> to vector<4x64x8xbf16>
    %79 = vector.extract_strided_slice %44 {offsets = [0, 0, 16], sizes = [4, 64, 8], strides = [1, 1, 1]} : vector<4x64x32xbf16> to vector<4x64x8xbf16>
    "tpu.trace_start"() <{level = 10 : i32, message = "wqd,wkd->wqk"}> : () -> ()
    %cst_23 = arith.constant dense<0.000000e+00> : vector<4x64x64xf32>
    %80 = tpu.matmul %77, %78, %cst_23 {dimension_numbers = #tpu.dot_dimension_numbers<[2], [2], [1], [1], [0, 0, 0, 1, 1, 1], [0], [0]>} : vector<4x64x8xbf16>, vector<4x64x8xbf16>, vector<4x64x64xf32> -> vector<4x64x64xf32>
    "tpu.trace_stop"() : () -> ()
    %cst_24 = arith.constant dense<0xFF800000> : vector<4x64xf32>
    %81 = vector.multi_reduction <maximumf>, %80, %cst_24 [2] : vector<4x64x64xf32> to vector<4x64xf32>
    %82 = vector.shape_cast %81 : vector<4x64xf32> to vector<4x64x1xf32>
    %83 = vector.broadcast %82 : vector<4x64x1xf32> to vector<4x64x64xf32>
    %84 = arith.subf %80, %83 : vector<4x64x64xf32>
    %85 = math.exp %84 : vector<4x64x64xf32>
    %cst_25 = arith.constant dense<0.000000e+00> : vector<4x64xf32>
    %86 = vector.multi_reduction <add>, %85, %cst_25 [2] : vector<4x64x64xf32> to vector<4x64xf32>
    %87 = vector.shape_cast %86 : vector<4x64xf32> to vector<4x64x1xf32>
    %88 = tpu.reciprocal %87 {approx = true} : vector<4x64x1xf32> -> vector<4x64x1xf32>
    %89 = vector.broadcast %88 : vector<4x64x1xf32> to vector<4x64x64xf32>
    %90 = arith.mulf %85, %89 : vector<4x64x64xf32>
    %91 = arith.truncf %90 : vector<4x64x64xf32> to vector<4x64x64xbf16>
    "tpu.trace_start"() <{level = 10 : i32, message = "wqk,wkd->wqd"}> : () -> ()
    %cst_26 = arith.constant dense<0.000000e+00> : vector<4x64x8xf32>
    %92 = tpu.matmul %91, %79, %cst_26 {dimension_numbers = #tpu.dot_dimension_numbers<[2], [1], [1], [2], [0, 0, 0, 1, 1, 2], [0], [0]>} : vector<4x64x64xbf16>, vector<4x64x8xbf16>, vector<4x64x8xf32> -> vector<4x64x8xf32>
    "tpu.trace_stop"() : () -> ()
    %93 = vector.extract_strided_slice %32 {offsets = [0, 0, 24], sizes = [4, 64, 8], strides = [1, 1, 1]} : vector<4x64x32xbf16> to vector<4x64x8xbf16>
    %94 = vector.extract_strided_slice %38 {offsets = [0, 0, 24], sizes = [4, 64, 8], strides = [1, 1, 1]} : vector<4x64x32xbf16> to vector<4x64x8xbf16>
    %95 = vector.extract_strided_slice %44 {offsets = [0, 0, 24], sizes = [4, 64, 8], strides = [1, 1, 1]} : vector<4x64x32xbf16> to vector<4x64x8xbf16>
    "tpu.trace_start"() <{level = 10 : i32, message = "wqd,wkd->wqk"}> : () -> ()
    %cst_27 = arith.constant dense<0.000000e+00> : vector<4x64x64xf32>
    %96 = tpu.matmul %93, %94, %cst_27 {dimension_numbers = #tpu.dot_dimension_numbers<[2], [2], [1], [1], [0, 0, 0, 1, 1, 1], [0], [0]>} : vector<4x64x8xbf16>, vector<4x64x8xbf16>, vector<4x64x64xf32> -> vector<4x64x64xf32>
    "tpu.trace_stop"() : () -> ()
    %cst_28 = arith.constant dense<0xFF800000> : vector<4x64xf32>
    %97 = vector.multi_reduction <maximumf>, %96, %cst_28 [2] : vector<4x64x64xf32> to vector<4x64xf32>
    %98 = vector.shape_cast %97 : vector<4x64xf32> to vector<4x64x1xf32>
    %99 = vector.broadcast %98 : vector<4x64x1xf32> to vector<4x64x64xf32>
    %100 = arith.subf %96, %99 : vector<4x64x64xf32>
    %101 = math.exp %100 : vector<4x64x64xf32>
    %cst_29 = arith.constant dense<0.000000e+00> : vector<4x64xf32>
    %102 = vector.multi_reduction <add>, %101, %cst_29 [2] : vector<4x64x64xf32> to vector<4x64xf32>
    %103 = vector.shape_cast %102 : vector<4x64xf32> to vector<4x64x1xf32>
    %104 = tpu.reciprocal %103 {approx = true} : vector<4x64x1xf32> -> vector<4x64x1xf32>
    %105 = vector.broadcast %104 : vector<4x64x1xf32> to vector<4x64x64xf32>
    %106 = arith.mulf %101, %105 : vector<4x64x64xf32>
    %107 = arith.truncf %106 : vector<4x64x64xf32> to vector<4x64x64xbf16>
    "tpu.trace_start"() <{level = 10 : i32, message = "wqk,wkd->wqd"}> : () -> ()
    %cst_30 = arith.constant dense<0.000000e+00> : vector<4x64x8xf32>
    %108 = tpu.matmul %107, %95, %cst_30 {dimension_numbers = #tpu.dot_dimension_numbers<[2], [1], [1], [2], [0, 0, 0, 1, 1, 2], [0], [0]>} : vector<4x64x64xbf16>, vector<4x64x8xbf16>, vector<4x64x8xf32> -> vector<4x64x8xf32>
    "tpu.trace_stop"() : () -> ()
    %109 = tpu.concatenate %60, %76, %92, %108 in 2 : vector<4x64x8xf32>, vector<4x64x8xf32>, vector<4x64x8xf32>, vector<4x64x8xf32> -> vector<4x64x32xf32>
    %110 = vector.shape_cast %109 : vector<4x64x32xf32> to vector<256x32xf32>
    %111 = arith.truncf %110 : vector<256x32xf32> to vector<256x32xbf16>
    %c0_31 = arith.constant 0 : index
    %c0_32 = arith.constant 0 : index
    %112 = vector.load %arg4[%c0_31, %c0_32] : memref<32x32xbf16, #tpu.memory_space<vmem>>, vector<32x32xbf16>
    %cst_33 = arith.constant dense<0.000000e+00> : vector<256x32xf32>
    %113 = tpu.matmul %111, %112, %cst_33 {dimension_numbers = #tpu.dot_dimension_numbers<[1], [0], [0], [1], [0, 0, 1, 1], [], []>} : vector<256x32xbf16>, vector<32x32xbf16>, vector<256x32xf32> -> vector<256x32xf32>
    %c5 = arith.constant 5 : index
    %c0_34 = arith.constant 0 : index
    %114 = vector.load %arg2[%c5, %c0_34] : memref<6x32xf32, #tpu.memory_space<vmem>>, vector<1x32xf32>
    %115 = vector.broadcast %114 : vector<1x32xf32> to vector<256x32xf32>
    %116 = arith.addf %113, %115 : vector<256x32xf32>
    %117 = arith.addf %1, %116 : vector<256x32xf32>
    %118 = vector.shape_cast %117 : vector<256x32xf32> to vector<4x64x32xf32>
    %c0_35 = arith.constant 0 : index
    %c0_36 = arith.constant 0 : index
    %c0_37 = arith.constant 0 : index
    %119 = vector.load %arg5[%c0_35, %c0_36, %c0_37] : memref<4x64x32xf32, #tpu.memory_space<vmem>>, vector<4x64x32xf32>
    tpu.vector_store %arg5[%c0_35, %c0_36, %c0_37], %118 {strides = array<i32>} : memref<4x64x32xf32, #tpu.memory_space<vmem>>, vector<4x64x32xf32>,
    return
  }
  func.func @transform_0(%arg0: i32) -> (i32, i32, i32) {
    %c0_i32 = arith.constant 0 : i32
    %c0_i32_0 = arith.constant 0 : i32
    %c0_i32_1 = arith.constant 0 : i32
    return %arg0, %c0_i32, %c0_i32_0 : i32, i32, i32
  }
  func.func @transform_1(%arg0: i32) -> (i32, i32) {
    %c0_i32 = arith.constant 0 : i32
    %c0_i32_0 = arith.constant 0 : i32
    %c0_i32_1 = arith.constant 0 : i32
    return %c0_i32, %c0_i32_0 : i32, i32
  }
  func.func @transform_2(%arg0: i32) -> (i32, i32) {
    %c0_i32 = arith.constant 0 : i32
    %c0_i32_0 = arith.constant 0 : i32
    %c0_i32_1 = arith.constant 0 : i32
    return %c0_i32, %c0_i32_0 : i32, i32
  }
  func.func @transform_3(%arg0: i32) -> (i32, i32) {
    %c0_i32 = arith.constant 0 : i32
    %c0_i32_0 = arith.constant 0 : i32
    %c0_i32_1 = arith.constant 0 : i32
    return %c0_i32, %c0_i32_0 : i32, i32
  }
  func.func @transform_4(%arg0: i32) -> (i32, i32, i32) {
    %c0_i32 = arith.constant 0 : i32
    %c0_i32_0 = arith.constant 0 : i32
    %c0_i32_1 = arith.constant 0 : i32
    return %arg0, %c0_i32, %c0_i32_0 : i32, i32, i32
  }
}

</mosaic_0001>

<llo_original>
// kernel: self_attention_2d.1
$region0: #{self_attention_2d.1}
  #allocation0 [shape = 'u32[]', space=smem, size = 0x4, offset = 0x4, fixed_abs, tag = 'smem constant byte address 0x4 - core index']
  #allocation1 [shape = 'u32[144,128]{1,0:T(1,128)}', space=vmem, size = 0x12000, scoped, tag = 'internal scratch']
  %s0 = inlined_call_operand.vmem [shape: f32[8,64,32], index: 0, kind: input, shape index: {}]
  %s1 = inlined_call_operand.vmem [shape: f32[6,32], index: 1, kind: input, shape index: {}]
  %s2 = inlined_call_operand.vmem [shape: bf16[32,96], index: 2, kind: input, shape index: {}]
  %s3 = inlined_call_operand.vmem [shape: bf16[32,32], index: 3, kind: input, shape index: {}]
  %s4 = inlined_call_operand.vmem [shape: f32[8,64,32], index: 4, kind: output, shape index: {}]
  %s5 = sld [smem:[#allocation0]]
  $region49: #{self_attention_2d.1} parent=0
    _
  %s7 = ssub.s32 1, %s5
  %s8 = scalar_select 0, %s7, %s5
  loop: start=0, step=1, limit=4
  $region2: #{self_attention_2d.1} parent=0 // loop_pre_header
    _
  $region3: #{self_attention_2d.1} parent=0 // loop_header
    %s10 = sphi 0, %s14
    %p11 = scmp.ge.s32.totalorder %s10, 4
    %s20 = sphi 0, %s22
    %s23 = sphi 0, %s20
    %s24 = sphi 0, %s23
    %s40 = sphi 0, %s24
    %s44 = sphi 0, %s44
    %s46 = sphi 0, %s44
    %s47 = sphi 0, %s46
    %s61 = sphi 0, %s47
    %s65 = sphi 0, %s65
    %s67 = sphi 0, %s65
    %s68 = sphi 0, %s67
    %s82 = sphi 0, %s68
    %s86 = sphi 0, %s86
    %s88 = sphi 0, %s86
    %s89 = sphi 0, %s88
    %s103 = sphi 0, %s89
    %s109 = sphi 0, %s111
    %s112 = sphi 0, %s109
    %s113 = sphi 0, %s112
    %s129 = sphi 0, %s113
  $region4: #{self_attention_2d.1} parent=0 // loop_header_branch
    %13 = sbr.rel (%p11) target = $region8
  $region5: #{self_attention_2d.1} parent=0 // loop_body
    %s15 = ssub.s32 %s10, 1
    %s16 = ssub.s32 %s10, 2
    %s17 = sadd.s32 %s10, 1
    %s18 = ssub.s32 %s10, %s17
    %p19 = scmp.eq.s32.totalorder %s18, 0
    %s21 = sadd.s32 %s20, 1
    %s22 = scalar_select %p19, %s20, %s21
    %p25 = pneg %p19
    %p26 = scmp.eq.s32.totalorder %s10, 1
    %p27 = por %p25, %p26
    %p28 = scmp.ne.s32.totalorder %s20, %s23
    %p29 = scmp.eq.s32.totalorder %s10, 0
    %p30 = por %p28, %p29
    %p31 = scmp.ne.s32.totalorder %s20, %s23
    %p32 = scmp.eq.s32.totalorder %s15, 1
    %p33 = por %p31, %p32
    %p34 = scmp.ne.s32.totalorder %s23, %s24
    %p35 = scmp.eq.s32.totalorder %s15, 0
    %p36 = por %p34, %p35
    %p37 = scmp.ne.s32.totalorder %s23, %s24
    %p38 = scmp.eq.s32.totalorder %s16, 1
    %p39 = por %p37, %p38
    %p41 = scmp.ne.s32.totalorder %s24, %s40
    %p42 = scmp.eq.s32.totalorder %s16, 0
    %p43 = por %p41, %p42
    %s45 = sadd.s32 %s44, 1
    %p48 = scmp.eq.s32.totalorder %s10, 1
    %p49 = scmp.ne.s32.totalorder %s44, %s46
    %p50 = scmp.eq.s32.totalorder %s10, 0
    %p51 = por %p49, %p50
    %p52 = scmp.ne.s32.totalorder %s44, %s46
    %p53 = scmp.eq.s32.totalorder %s15, 1
    %p54 = por %p52, %p53
    %p55 = scmp.ne.s32.totalorder %s46, %s47
    %p56 = scmp.eq.s32.totalorder %s15, 0
    %p57 = por %p55, %p56
    %p58 = scmp.ne.s32.totalorder %s46, %s47
    %p59 = scmp.eq.s32.totalorder %s16, 1
    %p60 = por %p58, %p59
    %p62 = scmp.ne.s32.totalorder %s47, %s61
    %p63 = scmp.eq.s32.totalorder %s16, 0
    %p64 = por %p62, %p63
    %s66 = sadd.s32 %s65, 1
    %p69 = scmp.eq.s32.totalorder %s10, 1
    %p70 = scmp.ne.s32.totalorder %s65, %s67
    %p71 = scmp.eq.s32.totalorder %s10, 0
    %p72 = por %p70, %p71
    %p73 = scmp.ne.s32.totalorder %s65, %s67
    %p74 = scmp.eq.s32.totalorder %s15, 1
    %p75 = por %p73, %p74
    %p76 = scmp.ne.s32.totalorder %s67, %s68
    %p77 = scmp.eq.s32.totalorder %s15, 0
    %p78 = por %p76, %p77
    %p79 = scmp.ne.s32.totalorder %s67, %s68
    %p80 = scmp.eq.s32.totalorder %s16, 1
    %p81 = por %p79, %p80
    %p83 = scmp.ne.s32.totalorder %s68, %s82
    %p84 = scmp.eq.s32.totalorder %s16, 0
    %p85 = por %p83, %p84
    %s87 = sadd.s32 %s86, 1
    %p90 = scmp.eq.s32.totalorder %s10, 1
    %p91 = scmp.ne.s32.totalorder %s86, %s88
    %p92 = scmp.eq.s32.totalorder %s10, 0
    %p93 = por %p91, %p92
    %p94 = scmp.ne.s32.totalorder %s86, %s88
    %p95 = scmp.eq.s32.totalorder %s15, 1
    %p96 = por %p94, %p95
    %p97 = scmp.ne.s32.totalorder %s88, %s89
    %p98 = scmp.eq.s32.totalorder %s15, 0
    %p99 = por %p97, %p98
    %p100 = scmp.ne.s32.totalorder %s88, %s89
    %p101 = scmp.eq.s32.totalorder %s16, 1
    %p102 = por %p100, %p101
    %p104 = scmp.ne.s32.totalorder %s89, %s103
    %p105 = scmp.eq.s32.totalorder %s16, 0
    %p106 = por %p104, %p105
    %s107 = ssub.s32 %s10, %s17
    %p108 = scmp.eq.s32.totalorder %s107, 0
    %s110 = sadd.s32 %s109, 1
    %s111 = scalar_select %p108, %s109, %s110
    %p114 = pneg %p108
    %p115 = scmp.eq.s32.totalorder %s10, 1
    %p116 = por %p114, %p115
    %p117 = scmp.ne.s32.totalorder %s109, %s112
    %p118 = scmp.eq.s32.totalorder %s10, 0
    %p119 = por %p117, %p118
    %p120 = scmp.ne.s32.totalorder %s109, %s112
    %p121 = scmp.eq.s32.totalorder %s15, 1
    %p122 = por %p120, %p121
    %p123 = scmp.ne.s32.totalorder %s112, %s113
    %p124 = scmp.eq.s32.totalorder %s15, 0
    %p125 = por %p123, %p124
    %p126 = scmp.ne.s32.totalorder %s112, %s113
    %p127 = scmp.eq.s32.totalorder %s16, 1
    %p128 = por %p126, %p127
    %p130 = scmp.ne.s32.totalorder %s113, %s129
    %p131 = scmp.eq.s32.totalorder %s16, 0
    %p132 = por %p130, %p131
    %p133 = scmp.le.s32.totalorder 1, %s10
    %p134 = scmp.lt.s32.totalorder %s10, 3
    %p135 = pnand %p133, %p134
    %p136 = pneg %p135
    // Predicated region
    $region9: #{self_attention_2d.1} parent=5 // pred_check
      _
    $region10: #{self_attention_2d.1} parent=5 // pred_check_branch
      %138 = sbr.rel (%p135) target = $region12
    $region11: #{self_attention_2d.1} parent=5 // pred_region
      %s139 = ssub.s32 %s10, 1
      // Predicated region
      $region13: #{self_attention_2d.1} parent=11 // pred_check
        %p140 = pneg %p57
      $region14: #{self_attention_2d.1} parent=11 // pred_check_branch
        %142 = sbr.rel (%p140) target = $region16
      $region15: #{self_attention_2d.1} parent=11 // pred_region
        _
      $region16: #{self_attention_2d.1} parent=11 // pred_fallthru
        _
      // Predicated region
      $region17: #{self_attention_2d.1} parent=11 // pred_check
        %p143 = pneg %p78
      $region18: #{self_attention_2d.1} parent=11 // pred_check_branch
        %145 = sbr.rel (%p143) target = $region20
      $region19: #{self_attention_2d.1} parent=11 // pred_region
        _
      $region20: #{self_attention_2d.1} parent=11 // pred_fallthru
        _
      // Predicated region
      $region21: #{self_attention_2d.1} parent=11 // pred_check
        %p146 = pneg %p99
      $region22: #{self_attention_2d.1} parent=11 // pred_check_branch
        %148 = sbr.rel (%p146) target = $region24
      $region23: #{self_attention_2d.1} parent=11 // pred_region
        _
      $region24: #{self_attention_2d.1} parent=11 // pred_fallthru
        _
    $region12: #{self_attention_2d.1} parent=5 // pred_fallthru
      _
    %p149 = scmp.lt.s32.totalorder %s10, 2
    // Predicated region
    $region25: #{self_attention_2d.1} parent=5 // pred_check
      %p150 = pneg %p149
    $region26: #{self_attention_2d.1} parent=5 // pred_check_branch
      %152 = sbr.rel (%p150) target = $region28
    $region27: #{self_attention_2d.1} parent=5 // pred_region
      // Predicated region
      $region29: #{self_attention_2d.1} parent=27 // pred_check
        %p153 = pneg %p30
      $region30: #{self_attention_2d.1} parent=27 // pred_check_branch
        %155 = sbr.rel (%p153) target = $region32
      $region31: #{self_attention_2d.1} parent=27 // pred_region
        %s156 = smul.u32 4, %s10
        %p157 = scmp.lt.s32.totalorder %s156, 7
        %s158 = scalar_select %p157, %s156, 7
        %s159 = smul.addr %s158, 8
        %s160 = smul.addr %s159, 8
        %s161 = scalar_lea.vmem %s0, %s160
        %s162 = smul.u32 4, %s10
      $region32: #{self_attention_2d.1} parent=27 // pred_fallthru
        _
    $region28: #{self_attention_2d.1} parent=5 // pred_fallthru
      _
    %p163 = scmp.le.s32.totalorder 1, %s10
    %p164 = scmp.lt.s32.totalorder %s10, 3
    %p165 = pnand %p163, %p164
    %p166 = pneg %p165
    // Predicated region
    $region33: #{self_attention_2d.1} parent=5 // pred_check
      _
    $region34: #{self_attention_2d.1} parent=5 // pred_check_branch
      %168 = sbr.rel (%p165) target = $region36
    $region35: #{self_attention_2d.1} parent=5 // pred_region
      %s169 = ssub.s32 %s10, 1
      %s170 = smul.u32 4, %s15
      %p171 = scmp.lt.s32.totalorder %s170, 7
      %s172 = scalar_select %p171, %s170, 7
      %s173 = smul.addr %s172, 8
      %s174 = smul.addr %s173, 8
      %s175 = scalar_lea.vmem %s0, %s174
      %p176 = pneg %p36
      %p177 = pneg %p33
      %p178 = pneg %p57
      %p179 = pneg %p54
      %p180 = pneg %p78
      %p181 = pneg %p75
      %p182 = pneg %p99
      %p183 = pneg %p96
      %p184 = pneg %p125
      %p185 = pneg %p122
      %s186 = smul.u32 4, %s15
      %p187 = scmp.lt.s32.totalorder %s186, 7
      %s188 = scalar_select %p187, %s186, 7
      %s189 = smul.addr %s188, 8
      %s190 = smul.addr %s189, 8
      %s191 = scalar_lea.vmem %s4, %s190
      %s192 = smul.u32 4, %s15
      %p193 = scmp.lt.s32.totalorder %s192, 7
      %s194 = scalar_select %p193, %s192, 7
      %s195 = smul.addr %s194, 8
      %s196 = smul.addr %s195, 8
      %s197 = scalar_lea.vmem %s0, %s196
      %s198 = smul.u32 4, %s15
      %s199 = smul.u32 4, %s15
      %p200 = scmp.lt.s32.totalorder %s199, 7
      %s201 = scalar_select %p200, %s199, 7
      %s202 = smul.addr %s201, 8
      %s203 = smul.addr %s202, 8
      %s204 = scalar_lea.vmem %s4, %s203
      %s205 = smul.u32 4, %s15
      %v207 = vld [vmem:[%s197] sm:$0xff]
      %v208 = vld [vmem:[%s197 + $0x8] sm:$0xff]
      %v209 = vld [vmem:[%s197 + $0x10] sm:$0xff]
      %v210 = vld [vmem:[%s197 + $0x18] sm:$0xff]
      %v211 = vld [vmem:[%s197 + $0x20] sm:$0xff]
      %v212 = vld [vmem:[%s197 + $0x28] sm:$0xff]
      %v213 = vld [vmem:[%s197 + $0x30] sm:$0xff]
      %v214 = vld [vmem:[%s197 + $0x38] sm:$0xff]
      %v215 = vld [vmem:[%s197 + $0x40] sm:$0xff]
      %v216 = vld [vmem:[%s197 + $0x48] sm:$0xff]
      %v217 = vld [vmem:[%s197 + $0x50] sm:$0xff]
      %v218 = vld [vmem:[%s197 + $0x58] sm:$0xff]
      %v219 = vld [vmem:[%s197 + $0x60] sm:$0xff]
      %v220 = vld [vmem:[%s197 + $0x68] sm:$0xff]
      %v221 = vld [vmem:[%s197 + $0x70] sm:$0xff]
      %v222 = vld [vmem:[%s197 + $0x78] sm:$0xff]
      %v223 = vld [vmem:[%s197 + $0x80] sm:$0xff]
      %v224 = vld [vmem:[%s197 + $0x88] sm:$0xff]
      %v225 = vld [vmem:[%s197 + $0x90] sm:$0xff]
      %v226 = vld [vmem:[%s197 + $0x98] sm:$0xff]
      %v227 = vld [vmem:[%s197 + $0xa0] sm:$0xff]
      %v228 = vld [vmem:[%s197 + $0xa8] sm:$0xff]
      %v229 = vld [vmem:[%s197 + $0xb0] sm:$0xff]
      %v230 = vld [vmem:[%s197 + $0xb8] sm:$0xff]
      %v231 = vld [vmem:[%s197 + $0xc0] sm:$0xff]
      %v232 = vld [vmem:[%s197 + $0xc8] sm:$0xff]
      %v233 = vld [vmem:[%s197 + $0xd0] sm:$0xff]
      %v234 = vld [vmem:[%s197 + $0xd8] sm:$0xff]
      %v235 = vld [vmem:[%s197 + $0xe0] sm:$0xff]
      %v236 = vld [vmem:[%s197 + $0xe8] sm:$0xff]
      %v237 = vld [vmem:[%s197 + $0xf0] sm:$0xff]
      %v238 = vld [vmem:[%s197 + $0xf8] sm:$0xff]
      %v239 = vld [vmem:[%s1] sm:$0x1]
      %v240 = vld [vmem:[%s1 + $0x1] sm:$0x1]
      %vm241 = vcmask 261120
      %v242 = vsel %vm241, %v207, 0.0
      %243 = vadd.xlane.f32.xlu0 %v242
      %v244 = vpop.xlane.xlu0 %243
      %v245 = vsel %vm241, %v208, 0.0
      %246 = vadd.xlane.f32.xlu0 %v245
      %v247 = vpop.xlane.xlu0 %246
      %v248 = vsel %vm241, %v209, 0.0
      %249 = vadd.xlane.f32.xlu0 %v248
      %v250 = vpop.xlane.xlu0 %249
      %v251 = vsel %vm241, %v210, 0.0
      %252 = vadd.xlane.f32.xlu0 %v251
      %v253 = vpop.xlane.xlu0 %252
      %v254 = vsel %vm241, %v211, 0.0
      %255 = vadd.xlane.f32.xlu0 %v254
      %v256 = vpop.xlane.xlu0 %255
      %v257 = vsel %vm241, %v212, 0.0
      %258 = vadd.xlane.f32.xlu0 %v257
      %v259 = vpop.xlane.xlu0 %258
      %v260 = vsel %vm241, %v213, 0.0
      %261 = vadd.xlane.f32.xlu0 %v260
      %v262 = vpop.xlane.xlu0 %261
      %v263 = vsel %vm241, %v214, 0.0
      %264 = vadd.xlane.f32.xlu0 %v263
      %v265 = vpop.xlane.xlu0 %264
      %v266 = vsel %vm241, %v215, 0.0
      %267 = vadd.xlane.f32.xlu0 %v266
      %v268 = vpop.xlane.xlu0 %267
      %v269 = vsel %vm241, %v216, 0.0
      %270 = vadd.xlane.f32.xlu0 %v269
      %v271 = vpop.xlane.xlu0 %270
      %v272 = vsel %vm241, %v217, 0.0
      %273 = vadd.xlane.f32.xlu0 %v272
      %v274 = vpop.xlane.xlu0 %273
      %v275 = vsel %vm241, %v218, 0.0
      %276 = vadd.xlane.f32.xlu0 %v275
      %v277 = vpop.xlane.xlu0 %276
      %v278 = vsel %vm241, %v219, 0.0
      %279 = vadd.xlane.f32.xlu0 %v278
      %v280 = vpop.xlane.xlu0 %279
      %v281 = vsel %vm241, %v220, 0.0
      %282 = vadd.xlane.f32.xlu0 %v281
      %v283 = vpop.xlane.xlu0 %282
      %v284 = vsel %vm241, %v221, 0.0
      %285 = vadd.xlane.f32.xlu0 %v284
      %v286 = vpop.xlane.xlu0 %285
      %v287 = vsel %vm241, %v222, 0.0
      %288 = vadd.xlane.f32.xlu0 %v287
      %v289 = vpop.xlane.xlu0 %288
      %v290 = vsel %vm241, %v223, 0.0
      %291 = vadd.xlane.f32.xlu0 %v290
      %v292 = vpop.xlane.xlu0 %291
      %v293 = vsel %vm241, %v224, 0.0
      %294 = vadd.xlane.f32.xlu0 %v293
      %v295 = vpop.xlane.xlu0 %294
      %v296 = vsel %vm241, %v225, 0.0
      %297 = vadd.xlane.f32.xlu0 %v296
      %v298 = vpop.xlane.xlu0 %297
      %v299 = vsel %vm241, %v226, 0.0
      %300 = vadd.xlane.f32.xlu0 %v299
      %v301 = vpop.xlane.xlu0 %300
      %v302 = vsel %vm241, %v227, 0.0
      %303 = vadd.xlane.f32.xlu0 %v302
      %v304 = vpop.xlane.xlu0 %303
      %v305 = vsel %vm241, %v228, 0.0
      %306 = vadd.xlane.f32.xlu0 %v305
      %v307 = vpop.xlane.xlu0 %306
      %v308 = vsel %vm241, %v229, 0.0
      %309 = vadd.xlane.f32.xlu0 %v308
      %v310 = vpop.xlane.xlu0 %309
      %v311 = vsel %vm241, %v230, 0.0
      %312 = vadd.xlane.f32.xlu0 %v311
      %v313 = vpop.xlane.xlu0 %312
      %v314 = vsel %vm241, %v231, 0.0
      %315 = vadd.xlane.f32.xlu0 %v314
      %v316 = vpop.xlane.xlu0 %315
      %v317 = vsel %vm241, %v232, 0.0
      %318 = vadd.xlane.f32.xlu0 %v317
      %v319 = vpop.xlane.xlu0 %318
      %v320 = vsel %vm241, %v233, 0.0
      %321 = vadd.xlane.f32.xlu0 %v320
      %v322 = vpop.xlane.xlu0 %321
      %v323 = vsel %vm241, %v234, 0.0
      %324 = vadd.xlane.f32.xlu0 %v323
      %v325 = vpop.xlane.xlu0 %324
      %v326 = vsel %vm241, %v235, 0.0
      %327 = vadd.xlane.f32.xlu0 %v326
      %v328 = vpop.xlane.xlu0 %327
      %v329 = vsel %vm241, %v236, 0.0
      %330 = vadd.xlane.f32.xlu0 %v329
      %v331 = vpop.xlane.xlu0 %330
      %v332 = vsel %vm241, %v237, 0.0
      %333 = vadd.xlane.f32.xlu0 %v332
      %v334 = vpop.xlane.xlu0 %333
      %v335 = vsel %vm241, %v238, 0.0
      %336 = vadd.xlane.f32.xlu0 %v335
      %v337 = vpop.xlane.xlu0 %336
      %v338 = vrcp.pop 32.0
      %v339 = vmul.f32 %v244, %v338
      %v340 = vmul.f32 %v247, %v338
      %v341 = vmul.f32 %v250, %v338
      %v342 = vmul.f32 %v253, %v338
      %v343 = vmul.f32 %v256, %v338
      %v344 = vmul.f32 %v259, %v338
      %v345 = vmul.f32 %v262, %v338
      %v346 = vmul.f32 %v265, %v338
      %v347 = vmul.f32 %v268, %v338
      %v348 = vmul.f32 %v271, %v338
      %v349 = vmul.f32 %v274, %v338
      %v350 = vmul.f32 %v277, %v338
      %v351 = vmul.f32 %v280, %v338
      %v352 = vmul.f32 %v283, %v338
      %v353 = vmul.f32 %v286, %v338
      %v354 = vmul.f32 %v289, %v338
      %v355 = vmul.f32 %v292, %v338
      %v356 = vmul.f32 %v295, %v338
      %v357 = vmul.f32 %v298, %v338
      %v358 = vmul.f32 %v301, %v338
      %v359 = vmul.f32 %v304, %v338
      %v360 = vmul.f32 %v307, %v338
      %v361 = vmul.f32 %v310, %v338
      %v362 = vmul.f32 %v313, %v338
      %v363 = vmul.f32 %v316, %v338
      %v364 = vmul.f32 %v319, %v338
      %v365 = vmul.f32 %v322, %v338
      %v366 = vmul.f32 %v325, %v338
      %v367 = vmul.f32 %v328, %v338
      %v368 = vmul.f32 %v331, %v338
      %v369 = vmul.f32 %v334, %v338
      %v370 = vmul.f32 %v337, %v338
      %v371 = vsub.f32 %v207, %v339
      %v372 = vsub.f32 %v208, %v340
      %v373 = vsub.f32 %v209, %v341
      %v374 = vsub.f32 %v210, %v342
      %v375 = vsub.f32 %v211, %v343
      %v376 = vsub.f32 %v212, %v344
      %v377 = vsub.f32 %v213, %v345
      %v378 = vsub.f32 %v214, %v346
      %v379 = vsub.f32 %v215, %v347
      %v380 = vsub.f32 %v216, %v348
      %v381 = vsub.f32 %v217, %v349
      %v382 = vsub.f32 %v218, %v350
      %v383 = vsub.f32 %v219, %v351
      %v384 = vsub.f32 %v220, %v352
      %v385 = vsub.f32 %v221, %v353
      %v386 = vsub.f32 %v222, %v354
      %v387 = vsub.f32 %v223, %v355
      %v388 = vsub.f32 %v224, %v356
      %v389 = vsub.f32 %v225, %v357
      %v390 = vsub.f32 %v226, %v358
      %v391 = vsub.f32 %v227, %v359
      %v392 = vsub.f32 %v228, %v360
      %v393 = vsub.f32 %v229, %v361
      %v394 = vsub.f32 %v230, %v362
      %v395 = vsub.f32 %v231, %v363
      %v396 = vsub.f32 %v232, %v364
      %v397 = vsub.f32 %v233, %v365
      %v398 = vsub.f32 %v234, %v366
      %v399 = vsub.f32 %v235, %v367
      %v400 = vsub.f32 %v236, %v368
      %v401 = vsub.f32 %v237, %v369
      %v402 = vsub.f32 %v238, %v370
      %v403 = vmul.f32 %v371, %v371
      %v404 = vmul.f32 %v372, %v372
      %v405 = vmul.f32 %v373, %v373
      %v406 = vmul.f32 %v374, %v374
      %v407 = vmul.f32 %v375, %v375
      %v408 = vmul.f32 %v376, %v376
      %v409 = vmul.f32 %v377, %v377
      %v410 = vmul.f32 %v378, %v378
      %v411 = vmul.f32 %v379, %v379
      %v412 = vmul.f32 %v380, %v380
      %v413 = vmul.f32 %v381, %v381
      %v414 = vmul.f32 %v382, %v382
      %v415 = vmul.f32 %v383, %v383
      %v416 = vmul.f32 %v384, %v384
      %v417 = vmul.f32 %v385, %v385
      %v418 = vmul.f32 %v386, %v386
      %v419 = vmul.f32 %v387, %v387
      %v420 = vmul.f32 %v388, %v388
      %v421 = vmul.f32 %v389, %v389
      %v422 = vmul.f32 %v390, %v390
      %v423 = vmul.f32 %v391, %v391
      %v424 = vmul.f32 %v392, %v392
      %v425 = vmul.f32 %v393, %v393
      %v426 = vmul.f32 %v394, %v394
      %v427 = vmul.f32 %v395, %v395
      %v428 = vmul.f32 %v396, %v396
      %v429 = vmul.f32 %v397, %v397
      %v430 = vmul.f32 %v398, %v398
      %v431 = vmul.f32 %v399, %v399
      %v432 = vmul.f32 %v400, %v400
      %v433 = vmul.f32 %v401, %v401
      %v434 = vmul.f32 %v402, %v402
      %v435 = vsel %vm241, %v403, 0.0
      %436 = vadd.xlane.f32.xlu0 %v435
      %v437 = vpop.xlane.xlu0 %436
      %v438 = vsel %vm241, %v404, 0.0
      %439 = vadd.xlane.f32.xlu0 %v438
      %v440 = vpop.xlane.xlu0 %439
      %v441 = vsel %vm241, %v405, 0.0
      %442 = vadd.xlane.f32.xlu0 %v441
      %v443 = vpop.xlane.xlu0 %442
      %v444 = vsel %vm241, %v406, 0.0
      %445 = vadd.xlane.f32.xlu0 %v444
      %v446 = vpop.xlane.xlu0 %445
      %v447 = vsel %vm241, %v407, 0.0
      %448 = vadd.xlane.f32.xlu0 %v447
      %v449 = vpop.xlane.xlu0 %448
      %v450 = vsel %vm241, %v408, 0.0
      %451 = vadd.xlane.f32.xlu0 %v450
      %v452 = vpop.xlane.xlu0 %451
      %v453 = vsel %vm241, %v409, 0.0
      %454 = vadd.xlane.f32.xlu0 %v453
      %v455 = vpop.xlane.xlu0 %454
      %v456 = vsel %vm241, %v410, 0.0
      %457 = vadd.xlane.f32.xlu0 %v456
      %v458 = vpop.xlane.xlu0 %457
      %v459 = vsel %vm241, %v411, 0.0
      %460 = vadd.xlane.f32.xlu0 %v459
      %v461 = vpop.xlane.xlu0 %460
      %v462 = vsel %vm241, %v412, 0.0
      %463 = vadd.xlane.f32.xlu0 %v462
      %v464 = vpop.xlane.xlu0 %463
      %v465 = vsel %vm241, %v413, 0.0
      %466 = vadd.xlane.f32.xlu0 %v465
      %v467 = vpop.xlane.xlu0 %466
      %v468 = vsel %vm241, %v414, 0.0
      %469 = vadd.xlane.f32.xlu0 %v468
      %v470 = vpop.xlane.xlu0 %469
      %v471 = vsel %vm241, %v415, 0.0
      %472 = vadd.xlane.f32.xlu0 %v471
      %v473 = vpop.xlane.xlu0 %472
      %v474 = vsel %vm241, %v416, 0.0
      %475 = vadd.xlane.f32.xlu0 %v474
      %v476 = vpop.xlane.xlu0 %475
      %v477 = vsel %vm241, %v417, 0.0
      %478 = vadd.xlane.f32.xlu0 %v477
      %v479 = vpop.xlane.xlu0 %478
      %v480 = vsel %vm241, %v418, 0.0
      %481 = vadd.xlane.f32.xlu0 %v480
      %v482 = vpop.xlane.xlu0 %481
      %v483 = vsel %vm241, %v419, 0.0
      %484 = vadd.xlane.f32.xlu0 %v483
      %v485 = vpop.xlane.xlu0 %484
      %v486 = vsel %vm241, %v420, 0.0
      %487 = vadd.xlane.f32.xlu0 %v486
      %v488 = vpop.xlane.xlu0 %487
      %v489 = vsel %vm241, %v421, 0.0
      %490 = vadd.xlane.f32.xlu0 %v489
      %v491 = vpop.xlane.xlu0 %490
      %v492 = vsel %vm241, %v422, 0.0
      %493 = vadd.xlane.f32.xlu0 %v492
      %v494 = vpop.xlane.xlu0 %493
      %v495 = vsel %vm241, %v423, 0.0
      %496 = vadd.xlane.f32.xlu0 %v495
      %v497 = vpop.xlane.xlu0 %496
      %v498 = vsel %vm241, %v424, 0.0
      %499 = vadd.xlane.f32.xlu0 %v498
      %v500 = vpop.xlane.xlu0 %499
      %v501 = vsel %vm241, %v425, 0.0
      %502 = vadd.xlane.f32.xlu0 %v501
      %v503 = vpop.xlane.xlu0 %502
      %v504 = vsel %vm241, %v426, 0.0
      %505 = vadd.xlane.f32.xlu0 %v504
      %v506 = vpop.xlane.xlu0 %505
      %v507 = vsel %vm241, %v427, 0.0
      %508 = vadd.xlane.f32.xlu0 %v507
      %v509 = vpop.xlane.xlu0 %508
      %v510 = vsel %vm241, %v428, 0.0
      %511 = vadd.xlane.f32.xlu0 %v510
      %v512 = vpop.xlane.xlu0 %511
      %v513 = vsel %vm241, %v429, 0.0
      %514 = vadd.xlane.f32.xlu0 %v513
      %v515 = vpop.xlane.xlu0 %514
      %v516 = vsel %vm241, %v430, 0.0
      %517 = vadd.xlane.f32.xlu0 %v516
      %v518 = vpop.xlane.xlu0 %517
      %v519 = vsel %vm241, %v431, 0.0
      %520 = vadd.xlane.f32.xlu0 %v519
      %v521 = vpop.xlane.xlu0 %520
      %v522 = vsel %vm241, %v432, 0.0
      %523 = vadd.xlane.f32.xlu0 %v522
      %v524 = vpop.xlane.xlu0 %523
      %v525 = vsel %vm241, %v433, 0.0
      %526 = vadd.xlane.f32.xlu0 %v525
      %v527 = vpop.xlane.xlu0 %526
      %v528 = vsel %vm241, %v434, 0.0
      %529 = vadd.xlane.f32.xlu0 %v528
      %v530 = vpop.xlane.xlu0 %529
      %v531 = vmul.f32 %v437, %v338
      %v532 = vmul.f32 %v440, %v338
      %v533 = vmul.f32 %v443, %v338
      %v534 = vmul.f32 %v446, %v338
      %v535 = vmul.f32 %v449, %v338
      %v536 = vmul.f32 %v452, %v338
      %v537 = vmul.f32 %v455, %v338
      %v538 = vmul.f32 %v458, %v338
      %v539 = vmul.f32 %v461, %v338
      %v540 = vmul.f32 %v464, %v338
      %v541 = vmul.f32 %v467, %v338
      %v542 = vmul.f32 %v470, %v338
      %v543 = vmul.f32 %v473, %v338
      %v544 = vmul.f32 %v476, %v338
      %v545 = vmul.f32 %v479, %v338
      %v546 = vmul.f32 %v482, %v338
      %v547 = vmul.f32 %v485, %v338
      %v548 = vmul.f32 %v488, %v338
      %v549 = vmul.f32 %v491, %v338
      %v550 = vmul.f32 %v494, %v338
      %v551 = vmul.f32 %v497, %v338
      %v552 = vmul.f32 %v500, %v338
      %v553 = vmul.f32 %v503, %v338
      %v554 = vmul.f32 %v506, %v338
      %v555 = vmul.f32 %v509, %v338
      %v556 = vmul.f32 %v512, %v338
      %v557 = vmul.f32 %v515, %v338
      %v558 = vmul.f32 %v518, %v338
      %v559 = vmul.f32 %v521, %v338
      %v560 = vmul.f32 %v524, %v338
      %v561 = vmul.f32 %v527, %v338
      %v562 = vmul.f32 %v530, %v338
      %v563 = vadd.f32 %v531, 1e-05
      %v564 = vadd.f32 %v532, 1e-05
      %v565 = vadd.f32 %v533, 1e-05
      %v566 = vadd.f32 %v534, 1e-05
      %v567 = vadd.f32 %v535, 1e-05
      %v568 = vadd.f32 %v536, 1e-05
      %v569 = vadd.f32 %v537, 1e-05
      %v570 = vadd.f32 %v538, 1e-05
      %v571 = vadd.f32 %v539, 1e-05
      %v572 = vadd.f32 %v540, 1e-05
      %v573 = vadd.f32 %v541, 1e-05
      %v574 = vadd.f32 %v542, 1e-05
      %v575 = vadd.f32 %v543, 1e-05
      %v576 = vadd.f32 %v544, 1e-05
      %v577 = vadd.f32 %v545, 1e-05
      %v578 = vadd.f32 %v546, 1e-05
      %v579 = vadd.f32 %v547, 1e-05
      %v580 = vadd.f32 %v548, 1e-05
      %v581 = vadd.f32 %v549, 1e-05
      %v582 = vadd.f32 %v550, 1e-05
      %v583 = vadd.f32 %v551, 1e-05
      %v584 = vadd.f32 %v552, 1e-05
      %v585 = vadd.f32 %v553, 1e-05
      %v586 = vadd.f32 %v554, 1e-05
      %v587 = vadd.f32 %v555, 1e-05
      %v588 = vadd.f32 %v556, 1e-05
      %v589 = vadd.f32 %v557, 1e-05
      %v590 = vadd.f32 %v558, 1e-05
      %v591 = vadd.f32 %v559, 1e-05
      %v592 = vadd.f32 %v560, 1e-05
      %v593 = vadd.f32 %v561, 1e-05
      %v594 = vadd.f32 %v562, 1e-05
      %v595 = vrsqrt.pop %v563
      %v596 = vrsqrt.pop %v564
      %v597 = vrsqrt.pop %v565
      %v598 = vrsqrt.pop %v566
      %v599 = vrsqrt.pop %v567
      %v600 = vrsqrt.pop %v568
      %v601 = vrsqrt.pop %v569
      %v602 = vrsqrt.pop %v570
      %v603 = vrsqrt.pop %v571
      %v604 = vrsqrt.pop %v572
      %v605 = vrsqrt.pop %v573
      %v606 = vrsqrt.pop %v574
      %v607 = vrsqrt.pop %v575
      %v608 = vrsqrt.pop %v576
      %v609 = vrsqrt.pop %v577
      %v610 = vrsqrt.pop %v578
      %v611 = vrsqrt.pop %v579
      %v612 = vrsqrt.pop %v580
      %v613 = vrsqrt.pop %v581
      %v614 = vrsqrt.pop %v582
      %v615 = vrsqrt.pop %v583
      %v616 = vrsqrt.pop %v584
      %v617 = vrsqrt.pop %v585
      %v618 = vrsqrt.pop %v586
      %v619 = vrsqrt.pop %v587
      %v620 = vrsqrt.pop %v588
      %v621 = vrsqrt.pop %v589
      %v622 = vrsqrt.pop %v590
      %v623 = vrsqrt.pop %v591
      %v624 = vrsqrt.pop %v592
      %v625 = vrsqrt.pop %v593
      %v626 = vrsqrt.pop %v594
      %v627 = vmul.f32 %v371, %v595
      %v628 = vmul.f32 %v372, %v596
      %v629 = vmul.f32 %v373, %v597
      %v630 = vmul.f32 %v374, %v598
      %v631 = vmul.f32 %v375, %v599
      %v632 = vmul.f32 %v376, %v600
      %v633 = vmul.f32 %v377, %v601
      %v634 = vmul.f32 %v378, %v602
      %v635 = vmul.f32 %v379, %v603
      %v636 = vmul.f32 %v380, %v604
      %v637 = vmul.f32 %v381, %v605
      %v638 = vmul.f32 %v382, %v606
      %v639 = vmul.f32 %v383, %v607
      %v640 = vmul.f32 %v384, %v608
      %v641 = vmul.f32 %v385, %v609
      %v642 = vmul.f32 %v386, %v610
      %v643 = vmul.f32 %v387, %v611
      %v644 = vmul.f32 %v388, %v612
      %v645 = vmul.f32 %v389, %v613
      %v646 = vmul.f32 %v390, %v614
      %v647 = vmul.f32 %v391, %v615
      %v648 = vmul.f32 %v392, %v616
      %v649 = vmul.f32 %v393, %v617
      %v650 = vmul.f32 %v394, %v618
      %v651 = vmul.f32 %v395, %v619
      %v652 = vmul.f32 %v396, %v620
      %v653 = vmul.f32 %v397, %v621
      %v654 = vmul.f32 %v398, %v622
      %v655 = vmul.f32 %v399, %v623
      %v656 = vmul.f32 %v400, %v624
      %v657 = vmul.f32 %v401, %v625
      %v658 = vmul.f32 %v402, %v626
      %v659 = vlaneseq
      %v660 = vshrl.u32 %v659, 7
      %v661 = vsub.s32 0, %v660
      %v662 = vrot.slane %v239, %v661
      %v663 = vmul.f32 %v627, %v662
      %v664 = vmul.f32 %v628, %v662
      %v665 = vmul.f32 %v629, %v662
      %v666 = vmul.f32 %v630, %v662
      %v667 = vmul.f32 %v631, %v662
      %v668 = vmul.f32 %v632, %v662
      %v669 = vmul.f32 %v633, %v662
      %v670 = vmul.f32 %v634, %v662
      %v671 = vmul.f32 %v635, %v662
      %v672 = vmul.f32 %v636, %v662
      %v673 = vmul.f32 %v637, %v662
      %v674 = vmul.f32 %v638, %v662
      %v675 = vmul.f32 %v639, %v662
      %v676 = vmul.f32 %v640, %v662
      %v677 = vmul.f32 %v641, %v662
      %v678 = vmul.f32 %v642, %v662
      %v679 = vmul.f32 %v643, %v662
      %v680 = vmul.f32 %v644, %v662
      %v681 = vmul.f32 %v645, %v662
      %v682 = vmul.f32 %v646, %v662
      %v683 = vmul.f32 %v647, %v662
      %v684 = vmul.f32 %v648, %v662
      %v685 = vmul.f32 %v649, %v662
      %v686 = vmul.f32 %v650, %v662
      %v687 = vmul.f32 %v651, %v662
      %v688 = vmul.f32 %v652, %v662
      %v689 = vmul.f32 %v653, %v662
      %v690 = vmul.f32 %v654, %v662
      %v691 = vmul.f32 %v655, %v662
      %v692 = vmul.f32 %v656, %v662
      %v693 = vmul.f32 %v657, %v662
      %v694 = vmul.f32 %v658, %v662
      %v695 = vlaneseq
      %v696 = vshrl.u32 %v695, 7
      %v697 = vsub.s32 0, %v696
      %v698 = vrot.slane %v240, %v697
      %v699 = vadd.f32 %v663, %v698
      %v700 = vadd.f32 %v664, %v698
      %v701 = vadd.f32 %v665, %v698
      %v702 = vadd.f32 %v666, %v698
      %v703 = vadd.f32 %v667, %v698
      %v704 = vadd.f32 %v668, %v698
      %v705 = vadd.f32 %v669, %v698
      %v706 = vadd.f32 %v670, %v698
      %v707 = vadd.f32 %v671, %v698
      %v708 = vadd.f32 %v672, %v698
      %v709 = vadd.f32 %v673, %v698
      %v710 = vadd.f32 %v674, %v698
      %v711 = vadd.f32 %v675, %v698
      %v712 = vadd.f32 %v676, %v698
      %v713 = vadd.f32 %v677, %v698
      %v714 = vadd.f32 %v678, %v698
      %v715 = vadd.f32 %v679, %v698
      %v716 = vadd.f32 %v680, %v698
      %v717 = vadd.f32 %v681, %v698
      %v718 = vadd.f32 %v682, %v698
      %v719 = vadd.f32 %v683, %v698
      %v720 = vadd.f32 %v684, %v698
      %v721 = vadd.f32 %v685, %v698
      %v722 = vadd.f32 %v686, %v698
      %v723 = vadd.f32 %v687, %v698
      %v724 = vadd.f32 %v688, %v698
      %v725 = vadd.f32 %v689, %v698
      %v726 = vadd.f32 %v690, %v698
      %v727 = vadd.f32 %v691, %v698
      %v728 = vadd.f32 %v692, %v698
      %v729 = vadd.f32 %v693, %v698
      %v730 = vadd.f32 %v694, %v698
      %v731 = vpack.c.bf16 %v700, %v699
      %v732 = vpack.c.bf16 %v702, %v701
      %v733 = vpack.c.bf16 %v704, %v703
      %v734 = vpack.c.bf16 %v706, %v705
      %v735 = vpack.c.bf16 %v708, %v707
      %v736 = vpack.c.bf16 %v710, %v709
      %v737 = vpack.c.bf16 %v712, %v711
      %v738 = vpack.c.bf16 %v714, %v713
      %v739 = vpack.c.bf16 %v716, %v715
      %v740 = vpack.c.bf16 %v718, %v717
      %v741 = vpack.c.bf16 %v720, %v719
      %v742 = vpack.c.bf16 %v722, %v721
      %v743 = vpack.c.bf16 %v724, %v723
      %v744 = vpack.c.bf16 %v726, %v725
      %v745 = vpack.c.bf16 %v728, %v727
      %v746 = vpack.c.bf16 %v730, %v729
      %v747 = vld [vmem:[%s2] sm:$0xf]
      %v748 = vld [vmem:[%s2 + $0x4] sm:$0xf]
      %v749 = vld [vmem:[%s2 + $0x8] sm:$0xf]
      %v750 = vld [vmem:[%s2 + $0xc] sm:$0xf]
      %v755 = vunpack.c.l.b16 %v747
      %v756 = vunpack.c.l.b16 %v748
      %v757 = vunpack.c.l.b16 %v749
      %v758 = vunpack.c.l.b16 %v750
      %v759 = vpack.c.b16 %v756, %v755
      %v760 = vpack.c.b16 %v758, %v757
      %v764 = vsel %vm241, %v731, 0
      %v767 = vsel %vm241, %v732, 0
      %v770 = vsel %vm241, %v733, 0
      %v773 = vsel %vm241, %v734, 0
      %v776 = vsel %vm241, %v735, 0
      %v779 = vsel %vm241, %v736, 0
      %v782 = vsel %vm241, %v737, 0
      %v785 = vsel %vm241, %v738, 0
      %v788 = vsel %vm241, %v739, 0
      %v791 = vsel %vm241, %v740, 0
      %v794 = vsel %vm241, %v741, 0
      %v797 = vsel %vm241, %v742, 0
      %v800 = vsel %vm241, %v743, 0
      %v803 = vsel %vm241, %v744, 0
      %v806 = vsel %vm241, %v745, 0
      %v809 = vsel %vm241, %v746, 0
      %811 = vmatprep.subr.bf16.mxu0 0
      %812 = vmatpush1.bf16.msra.mxu0 0
      %813 = vmatprep.subr.bf16.mxu0 0
      %814 = vmatpush1.bf16.msra.mxu0 0
      %815 = vmatprep.subr.bf16.mxu0 0
      %816 = vmatpush1.bf16.msra.mxu0 0
      %817 = vmatprep.subr.bf16.mxu0 0
      %818 = vmatpush1.bf16.msra.mxu0 0
      %819 = vmatprep.subr.bf16.mxu0 0
      %820 = vmatpush1.bf16.msra.mxu0 0
      %821 = vmatprep.subr.bf16.mxu0 0
      %822 = vmatpush1.bf16.msra.mxu0 0
      %823 = vmatprep.subr.bf16.mxu0 0
      %824 = vmatpush1.bf16.msra.mxu0 %v760
      %825 = vmatprep.subr.bf16.mxu0 0
      %826 = vmatpush1.bf16.msra.mxu0 %v759
      %827 = vmatprep.subr.bf16.mxu0 0
      %828 = vmatpush2.bf16.msra.mxu0 0
      %829 = vmatprep.subr.bf16.mxu0 0
      %830 = vmatpush2.bf16.msra.mxu0 0
      %831 = vmatprep.subr.bf16.mxu0 0
      %832 = vmatpush2.bf16.msra.mxu0 0
      %833 = vmatprep.subr.bf16.mxu0 0
      %834 = vmatpush2.bf16.msra.mxu0 0
      %835 = vmatprep.subr.bf16.mxu0 0
      %836 = vmatpush2.bf16.msra.mxu0 0
      %837 = vmatprep.subr.bf16.mxu0 0
      %838 = vmatpush2.bf16.msra.mxu0 0
      %839 = vmatprep.subr.bf16.mxu0 0
      %840 = vmatpush2.bf16.msra.mxu0 0
      %841 = vmatprep.subr.bf16.mxu0 0
      %842 = vmatpush2.bf16.msra.mxu0 0
      %843 = vmatprep.mubr.bf16.mxu0 0
      %844 = vmatmul.mubr.bf16.gmra.mxu0 %v764
      %v845 = vpop.f32.mrf.mxu0
      %v846 = vadd.f32 0.0, %v845
      %v847 = vpop.f32.mrf.mxu0
      %v848 = vpop.f32.mrf.mxu0
      %v849 = vadd.f32 0.0, %v848
      %v850 = vpop.f32.mrf.mxu0
      %851 = vmatprep.mubr.bf16.mxu0 0
      %852 = vmatmul.mubr.bf16.gmra.mxu0 %v767
      %v853 = vpop.f32.mrf.mxu0
      %v854 = vadd.f32 0.0, %v853
      %v855 = vpop.f32.mrf.mxu0
      %v856 = vpop.f32.mrf.mxu0
      %v857 = vadd.f32 0.0, %v856
      %v858 = vpop.f32.mrf.mxu0
      %859 = vmatprep.mubr.bf16.mxu0 0
      %860 = vmatmul.mubr.bf16.gmra.mxu0 %v770
      %v861 = vpop.f32.mrf.mxu0
      %v862 = vadd.f32 0.0, %v861
      %v863 = vpop.f32.mrf.mxu0
      %v864 = vpop.f32.mrf.mxu0
      %v865 = vadd.f32 0.0, %v864
      %v866 = vpop.f32.mrf.mxu0
      %867 = vmatprep.mubr.bf16.mxu0 0
      %868 = vmatmul.mubr.bf16.gmra.mxu0 %v773
      %v869 = vpop.f32.mrf.mxu0
      %v870 = vadd.f32 0.0, %v869
      %v871 = vpop.f32.mrf.mxu0
      %v872 = vpop.f32.mrf.mxu0
      %v873 = vadd.f32 0.0, %v872
      %v874 = vpop.f32.mrf.mxu0
      %875 = vmatprep.mubr.bf16.mxu0 0
      %876 = vmatmul.mubr.bf16.gmra.mxu0 %v776
      %v877 = vpop.f32.mrf.mxu0
      %v878 = vadd.f32 0.0, %v877
      %v879 = vpop.f32.mrf.mxu0
      %v880 = vpop.f32.mrf.mxu0
      %v881 = vadd.f32 0.0, %v880
      %v882 = vpop.f32.mrf.mxu0
      %883 = vmatprep.mubr.bf16.mxu0 0
      %884 = vmatmul.mubr.bf16.gmra.mxu0 %v779
      %v885 = vpop.f32.mrf.mxu0
      %v886 = vadd.f32 0.0, %v885
      %v887 = vpop.f32.mrf.mxu0
      %v888 = vpop.f32.mrf.mxu0
      %v889 = vadd.f32 0.0, %v888
      %v890 = vpop.f32.mrf.mxu0
      %891 = vmatprep.mubr.bf16.mxu0 0
      %892 = vmatmul.mubr.bf16.gmra.mxu0 %v782
      %v893 = vpop.f32.mrf.mxu0
      %v894 = vadd.f32 0.0, %v893
      %v895 = vpop.f32.mrf.mxu0
      %v896 = vpop.f32.mrf.mxu0
      %v897 = vadd.f32 0.0, %v896
      %v898 = vpop.f32.mrf.mxu0
      %899 = vmatprep.mubr.bf16.mxu0 0
      %900 = vmatmul.mubr.bf16.gmra.mxu0 %v785
      %v901 = vpop.f32.mrf.mxu0
      %v902 = vadd.f32 0.0, %v901
      %v903 = vpop.f32.mrf.mxu0
      %v904 = vpop.f32.mrf.mxu0
      %v905 = vadd.f32 0.0, %v904
      %v906 = vpop.f32.mrf.mxu0
      %907 = vmatprep.mubr.bf16.mxu0 0
      %908 = vmatmul.mubr.bf16.gmra.mxu0 %v788
      %v909 = vpop.f32.mrf.mxu0
      %v910 = vadd.f32 0.0, %v909
      %v911 = vpop.f32.mrf.mxu0
      %v912 = vpop.f32.mrf.mxu0
      %v913 = vadd.f32 0.0, %v912
      %v914 = vpop.f32.mrf.mxu0
      %915 = vmatprep.mubr.bf16.mxu0 0
      %916 = vmatmul.mubr.bf16.gmra.mxu0 %v791
      %v917 = vpop.f32.mrf.mxu0
      %v918 = vadd.f32 0.0, %v917
      %v919 = vpop.f32.mrf.mxu0
      %v920 = vpop.f32.mrf.mxu0
      %v921 = vadd.f32 0.0, %v920
      %v922 = vpop.f32.mrf.mxu0
      %923 = vmatprep.mubr.bf16.mxu0 0
      %924 = vmatmul.mubr.bf16.gmra.mxu0 %v794
      %v925 = vpop.f32.mrf.mxu0
      %v926 = vadd.f32 0.0, %v925
      %v927 = vpop.f32.mrf.mxu0
      %v928 = vpop.f32.mrf.mxu0
      %v929 = vadd.f32 0.0, %v928
      %v930 = vpop.f32.mrf.mxu0
      %931 = vmatprep.mubr.bf16.mxu0 0
      %932 = vmatmul.mubr.bf16.gmra.mxu0 %v797
      %v933 = vpop.f32.mrf.mxu0
      %v934 = vadd.f32 0.0, %v933
      %v935 = vpop.f32.mrf.mxu0
      %v936 = vpop.f32.mrf.mxu0
      %v937 = vadd.f32 0.0, %v936
      %v938 = vpop.f32.mrf.mxu0
      %939 = vmatprep.mubr.bf16.mxu0 0
      %940 = vmatmul.mubr.bf16.gmra.mxu0 %v800
      %v941 = vpop.f32.mrf.mxu0
      %v942 = vadd.f32 0.0, %v941
      %v943 = vpop.f32.mrf.mxu0
      %v944 = vpop.f32.mrf.mxu0
      %v945 = vadd.f32 0.0, %v944
      %v946 = vpop.f32.mrf.mxu0
      %947 = vmatprep.mubr.bf16.mxu0 0
      %948 = vmatmul.mubr.bf16.gmra.mxu0 %v803
      %v949 = vpop.f32.mrf.mxu0
      %v950 = vadd.f32 0.0, %v949
      %v951 = vpop.f32.mrf.mxu0
      %v952 = vpop.f32.mrf.mxu0
      %v953 = vadd.f32 0.0, %v952
      %v954 = vpop.f32.mrf.mxu0
      %955 = vmatprep.mubr.bf16.mxu0 0
      %956 = vmatmul.mubr.bf16.gmra.mxu0 %v806
      %v957 = vpop.f32.mrf.mxu0
      %v958 = vadd.f32 0.0, %v957
      %v959 = vpop.f32.mrf.mxu0
      %v960 = vpop.f32.mrf.mxu0
      %v961 = vadd.f32 0.0, %v960
      %v962 = vpop.f32.mrf.mxu0
      %963 = vmatprep.mubr.bf16.mxu0 0
      %964 = vmatmul.mubr.bf16.gmra.mxu0 %v809
      %v965 = vpop.f32.mrf.mxu0
      %v966 = vadd.f32 0.0, %v965
      %v967 = vpop.f32.mrf.mxu0
      %v968 = vpop.f32.mrf.mxu0
      %v969 = vadd.f32 0.0, %v968
      %v970 = vpop.f32.mrf.mxu0
      %971 = vdwg.mxu0
      %v972 = vld [vmem:[%s1 + $0x2] sm:$0x1]
      %v973 = vlaneseq
      %v974 = vshrl.u32 %v973, 7
      %v975 = vsub.s32 0, %v974
      %v976 = vrot.slane %v972, %v975
      %v977 = vadd.f32 %v846, %v976
      %v978 = vadd.f32 %v849, %v976
      %v979 = vadd.f32 %v854, %v976
      %v980 = vadd.f32 %v857, %v976
      %v981 = vadd.f32 %v862, %v976
      %v982 = vadd.f32 %v865, %v976
      %v983 = vadd.f32 %v870, %v976
      %v984 = vadd.f32 %v873, %v976
      %v985 = vadd.f32 %v878, %v976
      %v986 = vadd.f32 %v881, %v976
      %v987 = vadd.f32 %v886, %v976
      %v988 = vadd.f32 %v889, %v976
      %v989 = vadd.f32 %v894, %v976
      %v990 = vadd.f32 %v897, %v976
      %v991 = vadd.f32 %v902, %v976
      %v992 = vadd.f32 %v905, %v976
      %v993 = vadd.f32 %v910, %v976
      %v994 = vadd.f32 %v913, %v976
      %v995 = vadd.f32 %v918, %v976
      %v996 = vadd.f32 %v921, %v976
      %v997 = vadd.f32 %v926, %v976
      %v998 = vadd.f32 %v929, %v976
      %v999 = vadd.f32 %v934, %v976
      %v1000 = vadd.f32 %v937, %v976
      %v1001 = vadd.f32 %v942, %v976
      %v1002 = vadd.f32 %v945, %v976
      %v1003 = vadd.f32 %v950, %v976
      %v1004 = vadd.f32 %v953, %v976
      %v1005 = vadd.f32 %v958, %v976
      %v1006 = vadd.f32 %v961, %v976
      %v1007 = vadd.f32 %v966, %v976
      %v1008 = vadd.f32 %v969, %v976
      %v1009 = vpack.c.bf16 %v978, %v977
      %v1010 = vpack.c.bf16 %v980, %v979
      %v1011 = vpack.c.bf16 %v982, %v981
      %v1012 = vpack.c.bf16 %v984, %v983
      %v1013 = vpack.c.bf16 %v986, %v985
      %v1014 = vpack.c.bf16 %v988, %v987
      %v1015 = vpack.c.bf16 %v990, %v989
      %v1016 = vpack.c.bf16 %v992, %v991
      %v1017 = vpack.c.bf16 %v994, %v993
      %v1018 = vpack.c.bf16 %v996, %v995
      %v1019 = vpack.c.bf16 %v998, %v997
      %v1020 = vpack.c.bf16 %v1000, %v999
      %v1021 = vpack.c.bf16 %v1002, %v1001
      %v1022 = vpack.c.bf16 %v1004, %v1003
      %v1023 = vpack.c.bf16 %v1006, %v1005
      %v1024 = vpack.c.bf16 %v1008, %v1007
      %v1025 = vld [vmem:[%s1 + $0x3] sm:$0x1]
      %v1026 = vlaneseq
      %v1027 = vshrl.u32 %v1026, 7
      %v1028 = vsub.s32 0, %v1027
      %v1029 = vrot.slane %v1025, %v1028
      %1031 = vrot.lane.b32.xlu0 %v1029, 32
      %v1032 = vpop.permute.xlu0 %1031
      %v1034 = vadd.f32 %v846, %v1032
      %v1035 = vadd.f32 %v849, %v1032
      %v1036 = vadd.f32 %v854, %v1032
      %v1037 = vadd.f32 %v857, %v1032
      %v1038 = vadd.f32 %v862, %v1032
      %v1039 = vadd.f32 %v865, %v1032
      %v1040 = vadd.f32 %v870, %v1032
      %v1041 = vadd.f32 %v873, %v1032
      %v1042 = vadd.f32 %v878, %v1032
      %v1043 = vadd.f32 %v881, %v1032
      %v1044 = vadd.f32 %v886, %v1032
      %v1045 = vadd.f32 %v889, %v1032
      %v1046 = vadd.f32 %v894, %v1032
      %v1047 = vadd.f32 %v897, %v1032
      %v1048 = vadd.f32 %v902, %v1032
      %v1049 = vadd.f32 %v905, %v1032
      %v1050 = vadd.f32 %v910, %v1032
      %v1051 = vadd.f32 %v913, %v1032
      %v1052 = vadd.f32 %v918, %v1032
      %v1053 = vadd.f32 %v921, %v1032
      %v1054 = vadd.f32 %v926, %v1032
      %v1055 = vadd.f32 %v929, %v1032
      %v1056 = vadd.f32 %v934, %v1032
      %v1057 = vadd.f32 %v937, %v1032
      %v1058 = vadd.f32 %v942, %v1032
      %v1059 = vadd.f32 %v945, %v1032
      %v1060 = vadd.f32 %v950, %v1032
      %v1061 = vadd.f32 %v953, %v1032
      %v1062 = vadd.f32 %v958, %v1032
      %v1063 = vadd.f32 %v961, %v1032
      %v1064 = vadd.f32 %v966, %v1032
      %v1065 = vadd.f32 %v969, %v1032
      %v1066 = vpack.c.bf16 %v1035, %v1034
      %v1067 = vpack.c.bf16 %v1037, %v1036
      %v1068 = vpack.c.bf16 %v1039, %v1038
      %v1069 = vpack.c.bf16 %v1041, %v1040
      %v1070 = vpack.c.bf16 %v1043, %v1042
      %v1071 = vpack.c.bf16 %v1045, %v1044
      %v1072 = vpack.c.bf16 %v1047, %v1046
      %v1073 = vpack.c.bf16 %v1049, %v1048
      %v1074 = vpack.c.bf16 %v1051, %v1050
      %v1075 = vpack.c.bf16 %v1053, %v1052
      %v1076 = vpack.c.bf16 %v1055, %v1054
      %v1077 = vpack.c.bf16 %v1057, %v1056
      %v1078 = vpack.c.bf16 %v1059, %v1058
      %v1079 = vpack.c.bf16 %v1061, %v1060
      %v1080 = vpack.c.bf16 %v1063, %v1062
      %v1081 = vpack.c.bf16 %v1065, %v1064
      %v1082 = vld [vmem:[%s1 + $0x4] sm:$0x1]
      %v1083 = vlaneseq
      %v1084 = vshrl.u32 %v1083, 7
      %v1085 = vsub.s32 0, %v1084
      %v1086 = vrot.slane %v1082, %v1085
      %1088 = vrot.lane.b32.xlu0 %v1086, 64
      %v1089 = vpop.permute.xlu0 %1088
      %v1091 = vadd.f32 %v846, %v1089
      %v1092 = vadd.f32 %v849, %v1089
      %v1093 = vadd.f32 %v854, %v1089
      %v1094 = vadd.f32 %v857, %v1089
      %v1095 = vadd.f32 %v862, %v1089
      %v1096 = vadd.f32 %v865, %v1089
      %v1097 = vadd.f32 %v870, %v1089
      %v1098 = vadd.f32 %v873, %v1089
      %v1099 = vadd.f32 %v878, %v1089
      %v1100 = vadd.f32 %v881, %v1089
      %v1101 = vadd.f32 %v886, %v1089
      %v1102 = vadd.f32 %v889, %v1089
      %v1103 = vadd.f32 %v894, %v1089
      %v1104 = vadd.f32 %v897, %v1089
      %v1105 = vadd.f32 %v902, %v1089
      %v1106 = vadd.f32 %v905, %v1089
      %v1107 = vadd.f32 %v910, %v1089
      %v1108 = vadd.f32 %v913, %v1089
      %v1109 = vadd.f32 %v918, %v1089
      %v1110 = vadd.f32 %v921, %v1089
      %v1111 = vadd.f32 %v926, %v1089
      %v1112 = vadd.f32 %v929, %v1089
      %v1113 = vadd.f32 %v934, %v1089
      %v1114 = vadd.f32 %v937, %v1089
      %v1115 = vadd.f32 %v942, %v1089
      %v1116 = vadd.f32 %v945, %v1089
      %v1117 = vadd.f32 %v950, %v1089
      %v1118 = vadd.f32 %v953, %v1089
      %v1119 = vadd.f32 %v958, %v1089
      %v1120 = vadd.f32 %v961, %v1089
      %v1121 = vadd.f32 %v966, %v1089
      %v1122 = vadd.f32 %v969, %v1089
      %v1123 = vpack.c.bf16 %v1092, %v1091
      %v1124 = vpack.c.bf16 %v1094, %v1093
      %v1125 = vpack.c.bf16 %v1096, %v1095
      %v1126 = vpack.c.bf16 %v1098, %v1097
      %v1127 = vpack.c.bf16 %v1100, %v1099
      %v1128 = vpack.c.bf16 %v1102, %v1101
      %v1129 = vpack.c.bf16 %v1104, %v1103
      %v1130 = vpack.c.bf16 %v1106, %v1105
      %v1131 = vpack.c.bf16 %v1108, %v1107
      %v1132 = vpack.c.bf16 %v1110, %v1109
      %v1133 = vpack.c.bf16 %v1112, %v1111
      %v1134 = vpack.c.bf16 %v1114, %v1113
      %v1135 = vpack.c.bf16 %v1116, %v1115
      %v1136 = vpack.c.bf16 %v1118, %v1117
      %v1137 = vpack.c.bf16 %v1120, %v1119
      %v1138 = vpack.c.bf16 %v1122, %v1121
      %1143 = vrot.lane.b32.xlu0 %v1066, 96
      %v1144 = vpop.permute.xlu0 %1143
      %1145 = vrot.lane.b32.xlu0 %v1067, 96
      %v1146 = vpop.permute.xlu0 %1145
      %1147 = vrot.lane.b32.xlu0 %v1068, 96
      %v1148 = vpop.permute.xlu0 %1147
      %1149 = vrot.lane.b32.xlu0 %v1069, 96
      %v1150 = vpop.permute.xlu0 %1149
      %vm1151 = vcmask 64512
      %v1153 = vsel %vm1151, %v1009, 0
      %v1156 = vsel %vm1151, %v1010, 0
      %v1159 = vsel %vm1151, %v1011, 0
      %v1162 = vsel %vm1151, %v1012, 0
      %v1165 = vsel %vm1151, %v1144, 0
      %v1168 = vsel %vm1151, %v1146, 0
      %v1171 = vsel %vm1151, %v1148, 0
      %v1174 = vsel %vm1151, %v1150, 0
      %1176 = vmatprep.subr.bf16.mxu0 0
      %1177 = vmatpush1.bf16.xpose.msra.mxu0 0
      %1178 = vmatprep.subr.bf16.mxu0 0
      %1179 = vmatpush1.bf16.xpose.msra.mxu0 0
      %1180 = vmatprep.subr.bf16.mxu0 0
      %1181 = vmatpush1.bf16.xpose.msra.mxu0 0
      %1182 = vmatprep.subr.bf16.mxu0 0
      %1183 = vmatpush1.bf16.xpose.msra.mxu0 0
      %1184 = vmatprep.subr.bf16.mxu0 0
      %1185 = vmatpush1.bf16.xpose.msra.mxu0 %v1174
      %1186 = vmatprep.subr.bf16.mxu0 0
      %1187 = vmatpush1.bf16.xpose.msra.mxu0 %v1171
      %1188 = vmatprep.subr.bf16.mxu0 0
      %1189 = vmatpush1.bf16.xpose.msra.mxu0 %v1168
      %1190 = vmatprep.subr.bf16.mxu0 0
      %1191 = vmatpush1.bf16.xpose.msra.mxu0 %v1165
      %1192 = vmatprep.subr.bf16.mxu0 0
      %1193 = vmatpush2.bf16.xpose.msra.mxu0 0
      %1194 = vmatprep.subr.bf16.mxu0 0
      %1195 = vmatpush2.bf16.xpose.msra.mxu0 0
      %1196 = vmatprep.subr.bf16.mxu0 0
      %1197 = vmatpush2.bf16.xpose.msra.mxu0 0
      %1198 = vmatprep.subr.bf16.mxu0 0
      %1199 = vmatpush2.bf16.xpose.msra.mxu0 0
      %1200 = vmatprep.subr.bf16.mxu0 0
      %1201 = vmatpush2.bf16.xpose.msra.mxu0 0
      %1202 = vmatprep.subr.bf16.mxu0 0
      %1203 = vmatpush2.bf16.xpose.msra.mxu0 0
      %1204 = vmatprep.subr.bf16.mxu0 0
      %1205 = vmatpush2.bf16.xpose.msra.mxu0 0
      %1206 = vmatprep.subr.bf16.mxu0 0
      %1207 = vmatpush2.bf16.xpose.msra.mxu0 0
      %1208 = vmatprep.mubr.bf16.mxu0 0
      %1209 = vmatmul.mubr.bf16.gmra.mxu0 %v1153
      %v1210 = vpop.f32.mrf.mxu0
      %v1211 = vadd.f32 0.0, %v1210
      %v1212 = vpop.f32.mrf.mxu0
      %v1213 = vpop.f32.mrf.mxu0
      %v1214 = vadd.f32 0.0, %v1213
      %v1215 = vpop.f32.mrf.mxu0
      %1216 = vmatprep.mubr.bf16.mxu0 0
      %1217 = vmatmul.mubr.bf16.gmra.mxu0 %v1156
      %v1218 = vpop.f32.mrf.mxu0
      %v1219 = vadd.f32 0.0, %v1218
      %v1220 = vpop.f32.mrf.mxu0
      %v1221 = vpop.f32.mrf.mxu0
      %v1222 = vadd.f32 0.0, %v1221
      %v1223 = vpop.f32.mrf.mxu0
      %1224 = vmatprep.mubr.bf16.mxu0 0
      %1225 = vmatmul.mubr.bf16.gmra.mxu0 %v1159
      %v1226 = vpop.f32.mrf.mxu0
      %v1227 = vadd.f32 0.0, %v1226
      %v1228 = vpop.f32.mrf.mxu0
      %v1229 = vpop.f32.mrf.mxu0
      %v1230 = vadd.f32 0.0, %v1229
      %v1231 = vpop.f32.mrf.mxu0
      %1232 = vmatprep.mubr.bf16.mxu0 0
      %1233 = vmatmul.mubr.bf16.gmra.mxu0 %v1162
      %v1234 = vpop.f32.mrf.mxu0
      %v1235 = vadd.f32 0.0, %v1234
      %v1236 = vpop.f32.mrf.mxu0
      %v1237 = vpop.f32.mrf.mxu0
      %v1238 = vadd.f32 0.0, %v1237
      %v1239 = vpop.f32.mrf.mxu0
      %1240 = vdwg.mxu0
      %1245 = vrot.lane.b32.xlu0 %v1070, 96
      %v1246 = vpop.permute.xlu0 %1245
      %1247 = vrot.lane.b32.xlu0 %v1071, 96
      %v1248 = vpop.permute.xlu0 %1247
      %1249 = vrot.lane.b32.xlu0 %v1072, 96
      %v1250 = vpop.permute.xlu0 %1249
      %1251 = vrot.lane.b32.xlu0 %v1073, 96
      %v1252 = vpop.permute.xlu0 %1251
      %v1254 = vsel %vm1151, %v1013, 0
      %v1257 = vsel %vm1151, %v1014, 0
      %v1260 = vsel %vm1151, %v1015, 0
      %v1263 = vsel %vm1151, %v1016, 0
      %v1266 = vsel %vm1151, %v1246, 0
      %v1269 = vsel %vm1151, %v1248, 0
      %v1272 = vsel %vm1151, %v1250, 0
      %v1275 = vsel %vm1151, %v1252, 0
      %1277 = vmatprep.subr.bf16.mxu0 0
      %1278 = vmatpush1.bf16.xpose.msra.mxu0 0
      %1279 = vmatprep.subr.bf16.mxu0 0
      %1280 = vmatpush1.bf16.xpose.msra.mxu0 0
      %1281 = vmatprep.subr.bf16.mxu0 0
      %1282 = vmatpush1.bf16.xpose.msra.mxu0 0
      %1283 = vmatprep.subr.bf16.mxu0 0
      %1284 = vmatpush1.bf16.xpose.msra.mxu0 0
      %1285 = vmatprep.subr.bf16.mxu0 0
      %1286 = vmatpush1.bf16.xpose.msra.mxu0 %v1275
      %1287 = vmatprep.subr.bf16.mxu0 0
      %1288 = vmatpush1.bf16.xpose.msra.mxu0 %v1272
      %1289 = vmatprep.subr.bf16.mxu0 0
      %1290 = vmatpush1.bf16.xpose.msra.mxu0 %v1269
      %1291 = vmatprep.subr.bf16.mxu0 0
      %1292 = vmatpush1.bf16.xpose.msra.mxu0 %v1266
      %1293 = vmatprep.subr.bf16.mxu0 0
      %1294 = vmatpush2.bf16.xpose.msra.mxu0 0
      %1295 = vmatprep.subr.bf16.mxu0 0
      %1296 = vmatpush2.bf16.xpose.msra.mxu0 0
      %1297 = vmatprep.subr.bf16.mxu0 0
      %1298 = vmatpush2.bf16.xpose.msra.mxu0 0
      %1299 = vmatprep.subr.bf16.mxu0 0
      %1300 = vmatpush2.bf16.xpose.msra.mxu0 0
      %1301 = vmatprep.subr.bf16.mxu0 0
      %1302 = vmatpush2.bf16.xpose.msra.mxu0 0
      %1303 = vmatprep.subr.bf16.mxu0 0
      %1304 = vmatpush2.bf16.xpose.msra.mxu0 0
      %1305 = vmatprep.subr.bf16.mxu0 0
      %1306 = vmatpush2.bf16.xpose.msra.mxu0 0
      %1307 = vmatprep.subr.bf16.mxu0 0
      %1308 = vmatpush2.bf16.xpose.msra.mxu0 0
      %1309 = vmatprep.mubr.bf16.mxu0 0
      %1310 = vmatmul.mubr.bf16.gmra.mxu0 %v1254
      %v1311 = vpop.f32.mrf.mxu0
      %v1312 = vadd.f32 0.0, %v1311
      %v1313 = vpop.f32.mrf.mxu0
      %v1314 = vpop.f32.mrf.mxu0
      %v1315 = vadd.f32 0.0, %v1314
      %v1316 = vpop.f32.mrf.mxu0
      %1317 = vmatprep.mubr.bf16.mxu0 0
      %1318 = vmatmul.mubr.bf16.gmra.mxu0 %v1257
      %v1319 = vpop.f32.mrf.mxu0
      %v1320 = vadd.f32 0.0, %v1319
      %v1321 = vpop.f32.mrf.mxu0
      %v1322 = vpop.f32.mrf.mxu0
      %v1323 = vadd.f32 0.0, %v1322
      %v1324 = vpop.f32.mrf.mxu0
      %1325 = vmatprep.mubr.bf16.mxu0 0
      %1326 = vmatmul.mubr.bf16.gmra.mxu0 %v1260
      %v1327 = vpop.f32.mrf.mxu0
      %v1328 = vadd.f32 0.0, %v1327
      %v1329 = vpop.f32.mrf.mxu0
      %v1330 = vpop.f32.mrf.mxu0
      %v1331 = vadd.f32 0.0, %v1330
      %v1332 = vpop.f32.mrf.mxu0
      %1333 = vmatprep.mubr.bf16.mxu0 0
      %1334 = vmatmul.mubr.bf16.gmra.mxu0 %v1263
      %v1335 = vpop.f32.mrf.mxu0
      %v1336 = vadd.f32 0.0, %v1335
      %v1337 = vpop.f32.mrf.mxu0
      %v1338 = vpop.f32.mrf.mxu0
      %v1339 = vadd.f32 0.0, %v1338
      %v1340 = vpop.f32.mrf.mxu0
      %1341 = vdwg.mxu0
      %1346 = vrot.lane.b32.xlu0 %v1074, 96
      %v1347 = vpop.permute.xlu0 %1346
      %1348 = vrot.lane.b32.xlu0 %v1075, 96
      %v1349 = vpop.permute.xlu0 %1348
      %1350 = vrot.lane.b32.xlu0 %v1076, 96
      %v1351 = vpop.permute.xlu0 %1350
      %1352 = vrot.lane.b32.xlu0 %v1077, 96
      %v1353 = vpop.permute.xlu0 %1352
      %v1355 = vsel %vm1151, %v1017, 0
      %v1358 = vsel %vm1151, %v1018, 0
      %v1361 = vsel %vm1151, %v1019, 0
      %v1364 = vsel %vm1151, %v1020, 0
      %v1367 = vsel %vm1151, %v1347, 0
      %v1370 = vsel %vm1151, %v1349, 0
      %v1373 = vsel %vm1151, %v1351, 0
      %v1376 = vsel %vm1151, %v1353, 0
      %1378 = vmatprep.subr.bf16.mxu0 0
      %1379 = vmatpush1.bf16.xpose.msra.mxu0 0
      %1380 = vmatprep.subr.bf16.mxu0 0
      %1381 = vmatpush1.bf16.xpose.msra.mxu0 0
      %1382 = vmatprep.subr.bf16.mxu0 0
      %1383 = vmatpush1.bf16.xpose.msra.mxu0 0
      %1384 = vmatprep.subr.bf16.mxu0 0
      %1385 = vmatpush1.bf16.xpose.msra.mxu0 0
      %1386 = vmatprep.subr.bf16.mxu0 0
      %1387 = vmatpush1.bf16.xpose.msra.mxu0 %v1376
      %1388 = vmatprep.subr.bf16.mxu0 0
      %1389 = vmatpush1.bf16.xpose.msra.mxu0 %v1373
      %1390 = vmatprep.subr.bf16.mxu0 0
      %1391 = vmatpush1.bf16.xpose.msra.mxu0 %v1370
      %1392 = vmatprep.subr.bf16.mxu0 0
      %1393 = vmatpush1.bf16.xpose.msra.mxu0 %v1367
      %1394 = vmatprep.subr.bf16.mxu0 0
      %1395 = vmatpush2.bf16.xpose.msra.mxu0 0
      %1396 = vmatprep.subr.bf16.mxu0 0
      %1397 = vmatpush2.bf16.xpose.msra.mxu0 0
      %1398 = vmatprep.subr.bf16.mxu0 0
      %1399 = vmatpush2.bf16.xpose.msra.mxu0 0
      %1400 = vmatprep.subr.bf16.mxu0 0
      %1401 = vmatpush2.bf16.xpose.msra.mxu0 0
      %1402 = vmatprep.subr.bf16.mxu0 0
      %1403 = vmatpush2.bf16.xpose.msra.mxu0 0
      %1404 = vmatprep.subr.bf16.mxu0 0
      %1405 = vmatpush2.bf16.xpose.msra.mxu0 0
      %1406 = vmatprep.subr.bf16.mxu0 0
      %1407 = vmatpush2.bf16.xpose.msra.mxu0 0
      %1408 = vmatprep.subr.bf16.mxu0 0
      %1409 = vmatpush2.bf16.xpose.msra.mxu0 0
      %1410 = vmatprep.mubr.bf16.mxu0 0
      %1411 = vmatmul.mubr.bf16.gmra.mxu0 %v1355
      %v1412 = vpop.f32.mrf.mxu0
      %v1413 = vadd.f32 0.0, %v1412
      %v1414 = vpop.f32.mrf.mxu0
      %v1415 = vpop.f32.mrf.mxu0
      %v1416 = vadd.f32 0.0, %v1415
      %v1417 = vpop.f32.mrf.mxu0
      %1418 = vmatprep.mubr.bf16.mxu0 0
      %1419 = vmatmul.mubr.bf16.gmra.mxu0 %v1358
      %v1420 = vpop.f32.mrf.mxu0
      %v1421 = vadd.f32 0.0, %v1420
      %v1422 = vpop.f32.mrf.mxu0
      %v1423 = vpop.f32.mrf.mxu0
      %v1424 = vadd.f32 0.0, %v1423
      %v1425 = vpop.f32.mrf.mxu0
      %1426 = vmatprep.mubr.bf16.mxu0 0
      %1427 = vmatmul.mubr.bf16.gmra.mxu0 %v1361
      %v1428 = vpop.f32.mrf.mxu0
      %v1429 = vadd.f32 0.0, %v1428
      %v1430 = vpop.f32.mrf.mxu0
      %v1431 = vpop.f32.mrf.mxu0
      %v1432 = vadd.f32 0.0, %v1431
      %v1433 = vpop.f32.mrf.mxu0
      %1434 = vmatprep.mubr.bf16.mxu0 0
      %1435 = vmatmul.mubr.bf16.gmra.mxu0 %v1364
      %v1436 = vpop.f32.mrf.mxu0
      %v1437 = vadd.f32 0.0, %v1436
      %v1438 = vpop.f32.mrf.mxu0
      %v1439 = vpop.f32.mrf.mxu0
      %v1440 = vadd.f32 0.0, %v1439
      %v1441 = vpop.f32.mrf.mxu0
      %1442 = vdwg.mxu0
      %1447 = vrot.lane.b32.xlu0 %v1078, 96
      %v1448 = vpop.permute.xlu0 %1447
      %1449 = vrot.lane.b32.xlu0 %v1079, 96
      %v1450 = vpop.permute.xlu0 %1449
      %1451 = vrot.lane.b32.xlu0 %v1080, 96
      %v1452 = vpop.permute.xlu0 %1451
      %1453 = vrot.lane.b32.xlu0 %v1081, 96
      %v1454 = vpop.permute.xlu0 %1453
      %v1456 = vsel %vm1151, %v1021, 0
      %v1459 = vsel %vm1151, %v1022, 0
      %v1462 = vsel %vm1151, %v1023, 0
      %v1465 = vsel %vm1151, %v1024, 0
      %v1468 = vsel %vm1151, %v1448, 0
      %v1471 = vsel %vm1151, %v1450, 0
      %v1474 = vsel %vm1151, %v1452, 0
      %v1477 = vsel %vm1151, %v1454, 0
      %1479 = vmatprep.subr.bf16.mxu0 0
      %1480 = vmatpush1.bf16.xpose.msra.mxu0 0
      %1481 = vmatprep.subr.bf16.mxu0 0
      %1482 = vmatpush1.bf16.xpose.msra.mxu0 0
      %1483 = vmatprep.subr.bf16.mxu0 0
      %1484 = vmatpush1.bf16.xpose.msra.mxu0 0
      %1485 = vmatprep.subr.bf16.mxu0 0
      %1486 = vmatpush1.bf16.xpose.msra.mxu0 0
      %1487 = vmatprep.subr.bf16.mxu0 0
      %1488 = vmatpush1.bf16.xpose.msra.mxu0 %v1477
      %1489 = vmatprep.subr.bf16.mxu0 0
      %1490 = vmatpush1.bf16.xpose.msra.mxu0 %v1474
      %1491 = vmatprep.subr.bf16.mxu0 0
      %1492 = vmatpush1.bf16.xpose.msra.mxu0 %v1471
      %1493 = vmatprep.subr.bf16.mxu0 0
      %1494 = vmatpush1.bf16.xpose.msra.mxu0 %v1468
      %1495 = vmatprep.subr.bf16.mxu0 0
      %1496 = vmatpush2.bf16.xpose.msra.mxu0 0
      %1497 = vmatprep.subr.bf16.mxu0 0
      %1498 = vmatpush2.bf16.xpose.msra.mxu0 0
      %1499 = vmatprep.subr.bf16.mxu0 0
      %1500 = vmatpush2.bf16.xpose.msra.mxu0 0
      %1501 = vmatprep.subr.bf16.mxu0 0
      %1502 = vmatpush2.bf16.xpose.msra.mxu0 0
      %1503 = vmatprep.subr.bf16.mxu0 0
      %1504 = vmatpush2.bf16.xpose.msra.mxu0 0
      %1505 = vmatprep.subr.bf16.mxu0 0
      %1506 = vmatpush2.bf16.xpose.msra.mxu0 0
      %1507 = vmatprep.subr.bf16.mxu0 0
      %1508 = vmatpush2.bf16.xpose.msra.mxu0 0
      %1509 = vmatprep.subr.bf16.mxu0 0
      %1510 = vmatpush2.bf16.xpose.msra.mxu0 0
      %1511 = vmatprep.mubr.bf16.mxu0 0
      %1512 = vmatmul.mubr.bf16.gmra.mxu0 %v1456
      %v1513 = vpop.f32.mrf.mxu0
      %v1514 = vadd.f32 0.0, %v1513
      %v1515 = vpop.f32.mrf.mxu0
      %v1516 = vpop.f32.mrf.mxu0
      %v1517 = vadd.f32 0.0, %v1516
      %v1518 = vpop.f32.mrf.mxu0
      %1519 = vmatprep.mubr.bf16.mxu0 0
      %1520 = vmatmul.mubr.bf16.gmra.mxu0 %v1459
      %v1521 = vpop.f32.mrf.mxu0
      %v1522 = vadd.f32 0.0, %v1521
      %v1523 = vpop.f32.mrf.mxu0
      %v1524 = vpop.f32.mrf.mxu0
      %v1525 = vadd.f32 0.0, %v1524
      %v1526 = vpop.f32.mrf.mxu0
      %1527 = vmatprep.mubr.bf16.mxu0 0
      %1528 = vmatmul.mubr.bf16.gmra.mxu0 %v1462
      %v1529 = vpop.f32.mrf.mxu0
      %v1530 = vadd.f32 0.0, %v1529
      %v1531 = vpop.f32.mrf.mxu0
      %v1532 = vpop.f32.mrf.mxu0
      %v1533 = vadd.f32 0.0, %v1532
      %v1534 = vpop.f32.mrf.mxu0
      %1535 = vmatprep.mubr.bf16.mxu0 0
      %1536 = vmatmul.mubr.bf16.gmra.mxu0 %v1465
      %v1537 = vpop.f32.mrf.mxu0
      %v1538 = vadd.f32 0.0, %v1537
      %v1539 = vpop.f32.mrf.mxu0
      %v1540 = vpop.f32.mrf.mxu0
      %v1541 = vadd.f32 0.0, %v1540
      %v1542 = vpop.f32.mrf.mxu0
      %1543 = vdwg.mxu0
      %vm1544 = vcmask 523264
      %v1545 = vsel %vm1544, %v1211, -inf
      %1546 = vmax.xlane.f32.xlu0 %v1545
      %v1547 = vpop.xlane.xlu0 %1546
      %v1548 = vsel %vm1544, %v1214, -inf
      %1549 = vmax.xlane.f32.xlu0 %v1548
      %v1550 = vpop.xlane.xlu0 %1549
      %v1551 = vsel %vm1544, %v1219, -inf
      %1552 = vmax.xlane.f32.xlu0 %v1551
      %v1553 = vpop.xlane.xlu0 %1552
      %v1554 = vsel %vm1544, %v1222, -inf
      %1555 = vmax.xlane.f32.xlu0 %v1554
      %v1556 = vpop.xlane.xlu0 %1555
      %v1557 = vsel %vm1544, %v1227, -inf
      %1558 = vmax.xlane.f32.xlu0 %v1557
      %v1559 = vpop.xlane.xlu0 %1558
      %v1560 = vsel %vm1544, %v1230, -inf
      %1561 = vmax.xlane.f32.xlu0 %v1560
      %v1562 = vpop.xlane.xlu0 %1561
      %v1563 = vsel %vm1544, %v1235, -inf
      %1564 = vmax.xlane.f32.xlu0 %v1563
      %v1565 = vpop.xlane.xlu0 %1564
      %v1566 = vsel %vm1544, %v1238, -inf
      %1567 = vmax.xlane.f32.xlu0 %v1566
      %v1568 = vpop.xlane.xlu0 %1567
      %v1569 = vsel %vm1544, %v1312, -inf
      %1570 = vmax.xlane.f32.xlu0 %v1569
      %v1571 = vpop.xlane.xlu0 %1570
      %v1572 = vsel %vm1544, %v1315, -inf
      %1573 = vmax.xlane.f32.xlu0 %v1572
      %v1574 = vpop.xlane.xlu0 %1573
      %v1575 = vsel %vm1544, %v1320, -inf
      %1576 = vmax.xlane.f32.xlu0 %v1575
      %v1577 = vpop.xlane.xlu0 %1576
      %v1578 = vsel %vm1544, %v1323, -inf
      %1579 = vmax.xlane.f32.xlu0 %v1578
      %v1580 = vpop.xlane.xlu0 %1579
      %v1581 = vsel %vm1544, %v1328, -inf
      %1582 = vmax.xlane.f32.xlu0 %v1581
      %v1583 = vpop.xlane.xlu0 %1582
      %v1584 = vsel %vm1544, %v1331, -inf
      %1585 = vmax.xlane.f32.xlu0 %v1584
      %v1586 = vpop.xlane.xlu0 %1585
      %v1587 = vsel %vm1544, %v1336, -inf
      %1588 = vmax.xlane.f32.xlu0 %v1587
      %v1589 = vpop.xlane.xlu0 %1588
      %v1590 = vsel %vm1544, %v1339, -inf
      %1591 = vmax.xlane.f32.xlu0 %v1590
      %v1592 = vpop.xlane.xlu0 %1591
      %v1593 = vsel %vm1544, %v1413, -inf
      %1594 = vmax.xlane.f32.xlu0 %v1593
      %v1595 = vpop.xlane.xlu0 %1594
      %v1596 = vsel %vm1544, %v1416, -inf
      %1597 = vmax.xlane.f32.xlu0 %v1596
      %v1598 = vpop.xlane.xlu0 %1597
      %v1599 = vsel %vm1544, %v1421, -inf
      %1600 = vmax.xlane.f32.xlu0 %v1599
      %v1601 = vpop.xlane.xlu0 %1600
      %v1602 = vsel %vm1544, %v1424, -inf
      %1603 = vmax.xlane.f32.xlu0 %v1602
      %v1604 = vpop.xlane.xlu0 %1603
      %v1605 = vsel %vm1544, %v1429, -inf
      %1606 = vmax.xlane.f32.xlu0 %v1605
      %v1607 = vpop.xlane.xlu0 %1606
      %v1608 = vsel %vm1544, %v1432, -inf
      %1609 = vmax.xlane.f32.xlu0 %v1608
      %v1610 = vpop.xlane.xlu0 %1609
      %v1611 = vsel %vm1544, %v1437, -inf
      %1612 = vmax.xlane.f32.xlu0 %v1611
      %v1613 = vpop.xlane.xlu0 %1612
      %v1614 = vsel %vm1544, %v1440, -inf
      %1615 = vmax.xlane.f32.xlu0 %v1614
      %v1616 = vpop.xlane.xlu0 %1615
      %v1617 = vsel %vm1544, %v1514, -inf
      %1618 = vmax.xlane.f32.xlu0 %v1617
      %v1619 = vpop.xlane.xlu0 %1618
      %v1620 = vsel %vm1544, %v1517, -inf
      %1621 = vmax.xlane.f32.xlu0 %v1620
      %v1622 = vpop.xlane.xlu0 %1621
      %v1623 = vsel %vm1544, %v1522, -inf
      %1624 = vmax.xlane.f32.xlu0 %v1623
      %v1625 = vpop.xlane.xlu0 %1624
      %v1626 = vsel %vm1544, %v1525, -inf
      %1627 = vmax.xlane.f32.xlu0 %v1626
      %v1628 = vpop.xlane.xlu0 %1627
      %v1629 = vsel %vm1544, %v1530, -inf
      %1630 = vmax.xlane.f32.xlu0 %v1629
      %v1631 = vpop.xlane.xlu0 %1630
      %v1632 = vsel %vm1544, %v1533, -inf
      %1633 = vmax.xlane.f32.xlu0 %v1632
      %v1634 = vpop.xlane.xlu0 %1633
      %v1635 = vsel %vm1544, %v1538, -inf
      %1636 = vmax.xlane.f32.xlu0 %v1635
      %v1637 = vpop.xlane.xlu0 %1636
      %v1638 = vsel %vm1544, %v1541, -inf
      %1639 = vmax.xlane.f32.xlu0 %v1638
      %v1640 = vpop.xlane.xlu0 %1639
      %v1641 = vsub.f32 %v1211, %v1547
      %v1642 = vsub.f32 %v1214, %v1550
      %v1643 = vsub.f32 %v1219, %v1553
      %v1644 = vsub.f32 %v1222, %v1556
      %v1645 = vsub.f32 %v1227, %v1559
      %v1646 = vsub.f32 %v1230, %v1562
      %v1647 = vsub.f32 %v1235, %v1565
      %v1648 = vsub.f32 %v1238, %v1568
      %v1649 = vsub.f32 %v1312, %v1571
      %v1650 = vsub.f32 %v1315, %v1574
      %v1651 = vsub.f32 %v1320, %v1577
      %v1652 = vsub.f32 %v1323, %v1580
      %v1653 = vsub.f32 %v1328, %v1583
      %v1654 = vsub.f32 %v1331, %v1586
      %v1655 = vsub.f32 %v1336, %v1589
      %v1656 = vsub.f32 %v1339, %v1592
      %v1657 = vsub.f32 %v1413, %v1595
      %v1658 = vsub.f32 %v1416, %v1598
      %v1659 = vsub.f32 %v1421, %v1601
      %v1660 = vsub.f32 %v1424, %v1604
      %v1661 = vsub.f32 %v1429, %v1607
      %v1662 = vsub.f32 %v1432, %v1610
      %v1663 = vsub.f32 %v1437, %v1613
      %v1664 = vsub.f32 %v1440, %v1616
      %v1665 = vsub.f32 %v1514, %v1619
      %v1666 = vsub.f32 %v1517, %v1622
      %v1667 = vsub.f32 %v1522, %v1625
      %v1668 = vsub.f32 %v1525, %v1628
      %v1669 = vsub.f32 %v1530, %v1631
      %v1670 = vsub.f32 %v1533, %v1634
      %v1671 = vsub.f32 %v1538, %v1637
      %v1672 = vsub.f32 %v1541, %v1640
      %v1673 = vmul.f32 %v1641, 1.442695
      %v1674 = vpow.pop %v1673
      %v1675 = vmul.f32 %v1642, 1.442695
      %v1676 = vpow.pop %v1675
      %v1677 = vmul.f32 %v1643, 1.442695
      %v1678 = vpow.pop %v1677
      %v1679 = vmul.f32 %v1644, 1.442695
      %v1680 = vpow.pop %v1679
      %v1681 = vmul.f32 %v1645, 1.442695
      %v1682 = vpow.pop %v1681
      %v1683 = vmul.f32 %v1646, 1.442695
      %v1684 = vpow.pop %v1683
      %v1685 = vmul.f32 %v1647, 1.442695
      %v1686 = vpow.pop %v1685
      %v1687 = vmul.f32 %v1648, 1.442695
      %v1688 = vpow.pop %v1687
      %v1689 = vmul.f32 %v1649, 1.442695
      %v1690 = vpow.pop %v1689
      %v1691 = vmul.f32 %v1650, 1.442695
      %v1692 = vpow.pop %v1691
      %v1693 = vmul.f32 %v1651, 1.442695
      %v1694 = vpow.pop %v1693
      %v1695 = vmul.f32 %v1652, 1.442695
      %v1696 = vpow.pop %v1695
      %v1697 = vmul.f32 %v1653, 1.442695
      %v1698 = vpow.pop %v1697
      %v1699 = vmul.f32 %v1654, 1.442695
      %v1700 = vpow.pop %v1699
      %v1701 = vmul.f32 %v1655, 1.442695
      %v1702 = vpow.pop %v1701
      %v1703 = vmul.f32 %v1656, 1.442695
      %v1704 = vpow.pop %v1703
      %v1705 = vmul.f32 %v1657, 1.442695
      %v1706 = vpow.pop %v1705
      %v1707 = vmul.f32 %v1658, 1.442695
      %v1708 = vpow.pop %v1707
      %v1709 = vmul.f32 %v1659, 1.442695
      %v1710 = vpow.pop %v1709
      %v1711 = vmul.f32 %v1660, 1.442695
      %v1712 = vpow.pop %v1711
      %v1713 = vmul.f32 %v1661, 1.442695
      %v1714 = vpow.pop %v1713
      %v1715 = vmul.f32 %v1662, 1.442695
      %v1716 = vpow.pop %v1715
      %v1717 = vmul.f32 %v1663, 1.442695
      %v1718 = vpow.pop %v1717
      %v1719 = vmul.f32 %v1664, 1.442695
      %v1720 = vpow.pop %v1719
      %v1721 = vmul.f32 %v1665, 1.442695
      %v1722 = vpow.pop %v1721
      %v1723 = vmul.f32 %v1666, 1.442695
      %v1724 = vpow.pop %v1723
      %v1725 = vmul.f32 %v1667, 1.442695
      %v1726 = vpow.pop %v1725
      %v1727 = vmul.f32 %v1668, 1.442695
      %v1728 = vpow.pop %v1727
      %v1729 = vmul.f32 %v1669, 1.442695
      %v1730 = vpow.pop %v1729
      %v1731 = vmul.f32 %v1670, 1.442695
      %v1732 = vpow.pop %v1731
      %v1733 = vmul.f32 %v1671, 1.442695
      %v1734 = vpow.pop %v1733
      %v1735 = vmul.f32 %v1672, 1.442695
      %v1736 = vpow.pop %v1735
      %v1737 = vsel %vm1544, %v1674, 0.0
      %1738 = vadd.xlane.f32.xlu0 %v1737
      %v1739 = vpop.xlane.xlu0 %1738
      %v1740 = vsel %vm1544, %v1676, 0.0
      %1741 = vadd.xlane.f32.xlu0 %v1740
      %v1742 = vpop.xlane.xlu0 %1741
      %v1743 = vsel %vm1544, %v1678, 0.0
      %1744 = vadd.xlane.f32.xlu0 %v1743
      %v1745 = vpop.xlane.xlu0 %1744
      %v1746 = vsel %vm1544, %v1680, 0.0
      %1747 = vadd.xlane.f32.xlu0 %v1746
      %v1748 = vpop.xlane.xlu0 %1747
      %v1749 = vsel %vm1544, %v1682, 0.0
      %1750 = vadd.xlane.f32.xlu0 %v1749
      %v1751 = vpop.xlane.xlu0 %1750
      %v1752 = vsel %vm1544, %v1684, 0.0
      %1753 = vadd.xlane.f32.xlu0 %v1752
      %v1754 = vpop.xlane.xlu0 %1753
      %v1755 = vsel %vm1544, %v1686, 0.0
      %1756 = vadd.xlane.f32.xlu0 %v1755
      %v1757 = vpop.xlane.xlu0 %1756
      %v1758 = vsel %vm1544, %v1688, 0.0
      %1759 = vadd.xlane.f32.xlu0 %v1758
      %v1760 = vpop.xlane.xlu0 %1759
      %v1761 = vsel %vm1544, %v1690, 0.0
      %1762 = vadd.xlane.f32.xlu0 %v1761
      %v1763 = vpop.xlane.xlu0 %1762
      %v1764 = vsel %vm1544, %v1692, 0.0
      %1765 = vadd.xlane.f32.xlu0 %v1764
      %v1766 = vpop.xlane.xlu0 %1765
      %v1767 = vsel %vm1544, %v1694, 0.0
      %1768 = vadd.xlane.f32.xlu0 %v1767
      %v1769 = vpop.xlane.xlu0 %1768
      %v1770 = vsel %vm1544, %v1696, 0.0
      %1771 = vadd.xlane.f32.xlu0 %v1770
      %v1772 = vpop.xlane.xlu0 %1771
      %v1773 = vsel %vm1544, %v1698, 0.0
      %1774 = vadd.xlane.f32.xlu0 %v1773
      %v1775 = vpop.xlane.xlu0 %1774
      %v1776 = vsel %vm1544, %v1700, 0.0
      %1777 = vadd.xlane.f32.xlu0 %v1776
      %v1778 = vpop.xlane.xlu0 %1777
      %v1779 = vsel %vm1544, %v1702, 0.0
      %1780 = vadd.xlane.f32.xlu0 %v1779
      %v1781 = vpop.xlane.xlu0 %1780
      %v1782 = vsel %vm1544, %v1704, 0.0
      %1783 = vadd.xlane.f32.xlu0 %v1782
      %v1784 = vpop.xlane.xlu0 %1783
      %v1785 = vsel %vm1544, %v1706, 0.0
      %1786 = vadd.xlane.f32.xlu0 %v1785
      %v1787 = vpop.xlane.xlu0 %1786
      %v1788 = vsel %vm1544, %v1708, 0.0
      %1789 = vadd.xlane.f32.xlu0 %v1788
      %v1790 = vpop.xlane.xlu0 %1789
      %v1791 = vsel %vm1544, %v1710, 0.0
      %1792 = vadd.xlane.f32.xlu0 %v1791
      %v1793 = vpop.xlane.xlu0 %1792
      %v1794 = vsel %vm1544, %v1712, 0.0
      %1795 = vadd.xlane.f32.xlu0 %v1794
      %v1796 = vpop.xlane.xlu0 %1795
      %v1797 = vsel %vm1544, %v1714, 0.0
      %1798 = vadd.xlane.f32.xlu0 %v1797
      %v1799 = vpop.xlane.xlu0 %1798
      %v1800 = vsel %vm1544, %v1716, 0.0
      %1801 = vadd.xlane.f32.xlu0 %v1800
      %v1802 = vpop.xlane.xlu0 %1801
      %v1803 = vsel %vm1544, %v1718, 0.0
      %1804 = vadd.xlane.f32.xlu0 %v1803
      %v1805 = vpop.xlane.xlu0 %1804
      %v1806 = vsel %vm1544, %v1720, 0.0
      %1807 = vadd.xlane.f32.xlu0 %v1806
      %v1808 = vpop.xlane.xlu0 %1807
      %v1809 = vsel %vm1544, %v1722, 0.0
      %1810 = vadd.xlane.f32.xlu0 %v1809
      %v1811 = vpop.xlane.xlu0 %1810
      %v1812 = vsel %vm1544, %v1724, 0.0
      %1813 = vadd.xlane.f32.xlu0 %v1812
      %v1814 = vpop.xlane.xlu0 %1813
      %v1815 = vsel %vm1544, %v1726, 0.0
      %1816 = vadd.xlane.f32.xlu0 %v1815
      %v1817 = vpop.xlane.xlu0 %1816
      %v1818 = vsel %vm1544, %v1728, 0.0
      %1819 = vadd.xlane.f32.xlu0 %v1818
      %v1820 = vpop.xlane.xlu0 %1819
      %v1821 = vsel %vm1544, %v1730, 0.0
      %1822 = vadd.xlane.f32.xlu0 %v1821
      %v1823 = vpop.xlane.xlu0 %1822
      %v1824 = vsel %vm1544, %v1732, 0.0
      %1825 = vadd.xlane.f32.xlu0 %v1824
      %v1826 = vpop.xlane.xlu0 %1825
      %v1827 = vsel %vm1544, %v1734, 0.0
      %1828 = vadd.xlane.f32.xlu0 %v1827
      %v1829 = vpop.xlane.xlu0 %1828
      %v1830 = vsel %vm1544, %v1736, 0.0
      %1831 = vadd.xlane.f32.xlu0 %v1830
      %v1832 = vpop.xlane.xlu0 %1831
      %v1833 = vrcp.pop %v1739
      %v1834 = vrcp.pop %v1742
      %v1835 = vrcp.pop %v1745
      %v1836 = vrcp.pop %v1748
      %v1837 = vrcp.pop %v1751
      %v1838 = vrcp.pop %v1754
      %v1839 = vrcp.pop %v1757
      %v1840 = vrcp.pop %v1760
      %v1841 = vrcp.pop %v1763
      %v1842 = vrcp.pop %v1766
      %v1843 = vrcp.pop %v1769
      %v1844 = vrcp.pop %v1772
      %v1845 = vrcp.pop %v1775
      %v1846 = vrcp.pop %v1778
      %v1847 = vrcp.pop %v1781
      %v1848 = vrcp.pop %v1784
      %v1849 = vrcp.pop %v1787
      %v1850 = vrcp.pop %v1790
      %v1851 = vrcp.pop %v1793
      %v1852 = vrcp.pop %v1796
      %v1853 = vrcp.pop %v1799
      %v1854 = vrcp.pop %v1802
      %v1855 = vrcp.pop %v1805
      %v1856 = vrcp.pop %v1808
      %v1857 = vrcp.pop %v1811
      %v1858 = vrcp.pop %v1814
      %v1859 = vrcp.pop %v1817
      %v1860 = vrcp.pop %v1820
      %v1861 = vrcp.pop %v1823
      %v1862 = vrcp.pop %v1826
      %v1863 = vrcp.pop %v1829
      %v1864 = vrcp.pop %v1832
      %v1865 = vmul.f32 %v1674, %v1833
      %v1866 = vmul.f32 %v1676, %v1834
      %v1867 = vmul.f32 %v1678, %v1835
      %v1868 = vmul.f32 %v1680, %v1836
      %v1869 = vmul.f32 %v1682, %v1837
      %v1870 = vmul.f32 %v1684, %v1838
      %v1871 = vmul.f32 %v1686, %v1839
      %v1872 = vmul.f32 %v1688, %v1840
      %v1873 = vmul.f32 %v1690, %v1841
      %v1874 = vmul.f32 %v1692, %v1842
      %v1875 = vmul.f32 %v1694, %v1843
      %v1876 = vmul.f32 %v1696, %v1844
      %v1877 = vmul.f32 %v1698, %v1845
      %v1878 = vmul.f32 %v1700, %v1846
      %v1879 = vmul.f32 %v1702, %v1847
      %v1880 = vmul.f32 %v1704, %v1848
      %v1881 = vmul.f32 %v1706, %v1849
      %v1882 = vmul.f32 %v1708, %v1850
      %v1883 = vmul.f32 %v1710, %v1851
      %v1884 = vmul.f32 %v1712, %v1852
      %v1885 = vmul.f32 %v1714, %v1853
      %v1886 = vmul.f32 %v1716, %v1854
      %v1887 = vmul.f32 %v1718, %v1855
      %v1888 = vmul.f32 %v1720, %v1856
      %v1889 = vmul.f32 %v1722, %v1857
      %v1890 = vmul.f32 %v1724, %v1858
      %v1891 = vmul.f32 %v1726, %v1859
      %v1892 = vmul.f32 %v1728, %v1860
      %v1893 = vmul.f32 %v1730, %v1861
      %v1894 = vmul.f32 %v1732, %v1862
      %v1895 = vmul.f32 %v1734, %v1863
      %v1896 = vmul.f32 %v1736, %v1864
      %v1897 = vpack.c.bf16 %v1866, %v1865
      %v1898 = vpack.c.bf16 %v1868, %v1867
      %v1899 = vpack.c.bf16 %v1870, %v1869
      %v1900 = vpack.c.bf16 %v1872, %v1871
      %v1901 = vpack.c.bf16 %v1874, %v1873
      %v1902 = vpack.c.bf16 %v1876, %v1875
      %v1903 = vpack.c.bf16 %v1878, %v1877
      %v1904 = vpack.c.bf16 %v1880, %v1879
      %v1905 = vpack.c.bf16 %v1882, %v1881
      %v1906 = vpack.c.bf16 %v1884, %v1883
      %v1907 = vpack.c.bf16 %v1886, %v1885
      %v1908 = vpack.c.bf16 %v1888, %v1887
      %v1909 = vpack.c.bf16 %v1890, %v1889
      %v1910 = vpack.c.bf16 %v1892, %v1891
      %v1911 = vpack.c.bf16 %v1894, %v1893
      %v1912 = vpack.c.bf16 %v1896, %v1895
      %1917 = vrot.lane.b32.xlu0 %v1123, 64
      %v1918 = vpop.permute.xlu0 %1917
      %1919 = vrot.lane.b32.xlu0 %v1124, 64
      %v1920 = vpop.permute.xlu0 %1919
      %1921 = vrot.lane.b32.xlu0 %v1125, 64
      %v1922 = vpop.permute.xlu0 %1921
      %1923 = vrot.lane.b32.xlu0 %v1126, 64
      %v1924 = vpop.permute.xlu0 %1923
      %v1930 = vsel %vm1544, %v1897, 0
      %v1933 = vsel %vm1544, %v1898, 0
      %v1936 = vsel %vm1544, %v1899, 0
      %v1939 = vsel %vm1544, %v1900, 0
      %1941 = vmatprep.subr.bf16.mxu0 0
      %1942 = vmatpush1.bf16.msra.mxu0 0
      %1943 = vmatprep.subr.bf16.mxu0 0
      %1944 = vmatpush1.bf16.msra.mxu0 0
      %1945 = vmatprep.subr.bf16.mxu0 0
      %1946 = vmatpush1.bf16.msra.mxu0 0
      %1947 = vmatprep.subr.bf16.mxu0 0
      %1948 = vmatpush1.bf16.msra.mxu0 0
      %1949 = vmatprep.subr.bf16.mxu0 0
      %1950 = vmatpush1.bf16.msra.mxu0 %v1924
      %1951 = vmatprep.subr.bf16.mxu0 0
      %1952 = vmatpush1.bf16.msra.mxu0 %v1922
      %1953 = vmatprep.subr.bf16.mxu0 0
      %1954 = vmatpush1.bf16.msra.mxu0 %v1920
      %1955 = vmatprep.subr.bf16.mxu0 0
      %1956 = vmatpush1.bf16.msra.mxu0 %v1918
      %1957 = vmatprep.subr.bf16.mxu0 0
      %1958 = vmatpush2.bf16.msra.mxu0 0
      %1959 = vmatprep.subr.bf16.mxu0 0
      %1960 = vmatpush2.bf16.msra.mxu0 0
      %1961 = vmatprep.subr.bf16.mxu0 0
      %1962 = vmatpush2.bf16.msra.mxu0 0
      %1963 = vmatprep.subr.bf16.mxu0 0
      %1964 = vmatpush2.bf16.msra.mxu0 0
      %1965 = vmatprep.subr.bf16.mxu0 0
      %1966 = vmatpush2.bf16.msra.mxu0 0
      %1967 = vmatprep.subr.bf16.mxu0 0
      %1968 = vmatpush2.bf16.msra.mxu0 0
      %1969 = vmatprep.subr.bf16.mxu0 0
      %1970 = vmatpush2.bf16.msra.mxu0 0
      %1971 = vmatprep.subr.bf16.mxu0 0
      %1972 = vmatpush2.bf16.msra.mxu0 0
      %1973 = vmatprep.mubr.bf16.mxu0 0
      %1974 = vmatmul.mubr.bf16.gmra.mxu0 %v1930
      %v1975 = vpop.f32.mrf.mxu0
      %v1976 = vadd.f32 0.0, %v1975
      %v1977 = vpop.f32.mrf.mxu0
      %v1978 = vpop.f32.mrf.mxu0
      %v1979 = vadd.f32 0.0, %v1978
      %v1980 = vpop.f32.mrf.mxu0
      %1981 = vmatprep.mubr.bf16.mxu0 0
      %1982 = vmatmul.mubr.bf16.gmra.mxu0 %v1933
      %v1983 = vpop.f32.mrf.mxu0
      %v1984 = vadd.f32 0.0, %v1983
      %v1985 = vpop.f32.mrf.mxu0
      %v1986 = vpop.f32.mrf.mxu0
      %v1987 = vadd.f32 0.0, %v1986
      %v1988 = vpop.f32.mrf.mxu0
      %1989 = vmatprep.mubr.bf16.mxu0 0
      %1990 = vmatmul.mubr.bf16.gmra.mxu0 %v1936
      %v1991 = vpop.f32.mrf.mxu0
      %v1992 = vadd.f32 0.0, %v1991
      %v1993 = vpop.f32.mrf.mxu0
      %v1994 = vpop.f32.mrf.mxu0
      %v1995 = vadd.f32 0.0, %v1994
      %v1996 = vpop.f32.mrf.mxu0
      %1997 = vmatprep.mubr.bf16.mxu0 0
      %1998 = vmatmul.mubr.bf16.gmra.mxu0 %v1939
      %v1999 = vpop.f32.mrf.mxu0
      %v2000 = vadd.f32 0.0, %v1999
      %v2001 = vpop.f32.mrf.mxu0
      %v2002 = vpop.f32.mrf.mxu0
      %v2003 = vadd.f32 0.0, %v2002
      %v2004 = vpop.f32.mrf.mxu0
      %2005 = vdwg.mxu0
      %2010 = vrot.lane.b32.xlu0 %v1127, 64
      %v2011 = vpop.permute.xlu0 %2010
      %2012 = vrot.lane.b32.xlu0 %v1128, 64
      %v2013 = vpop.permute.xlu0 %2012
      %2014 = vrot.lane.b32.xlu0 %v1129, 64
      %v2015 = vpop.permute.xlu0 %2014
      %2016 = vrot.lane.b32.xlu0 %v1130, 64
      %v2017 = vpop.permute.xlu0 %2016
      %v2023 = vsel %vm1544, %v1901, 0
      %v2026 = vsel %vm1544, %v1902, 0
      %v2029 = vsel %vm1544, %v1903, 0
      %v2032 = vsel %vm1544, %v1904, 0
      %2034 = vmatprep.subr.bf16.mxu0 0
      %2035 = vmatpush1.bf16.msra.mxu0 0
      %2036 = vmatprep.subr.bf16.mxu0 0
      %2037 = vmatpush1.bf16.msra.mxu0 0
      %2038 = vmatprep.subr.bf16.mxu0 0
      %2039 = vmatpush1.bf16.msra.mxu0 0
      %2040 = vmatprep.subr.bf16.mxu0 0
      %2041 = vmatpush1.bf16.msra.mxu0 0
      %2042 = vmatprep.subr.bf16.mxu0 0
      %2043 = vmatpush1.bf16.msra.mxu0 %v2017
      %2044 = vmatprep.subr.bf16.mxu0 0
      %2045 = vmatpush1.bf16.msra.mxu0 %v2015
      %2046 = vmatprep.subr.bf16.mxu0 0
      %2047 = vmatpush1.bf16.msra.mxu0 %v2013
      %2048 = vmatprep.subr.bf16.mxu0 0
      %2049 = vmatpush1.bf16.msra.mxu0 %v2011
      %2050 = vmatprep.subr.bf16.mxu0 0
      %2051 = vmatpush2.bf16.msra.mxu0 0
      %2052 = vmatprep.subr.bf16.mxu0 0
      %2053 = vmatpush2.bf16.msra.mxu0 0
      %2054 = vmatprep.subr.bf16.mxu0 0
      %2055 = vmatpush2.bf16.msra.mxu0 0
      %2056 = vmatprep.subr.bf16.mxu0 0
      %2057 = vmatpush2.bf16.msra.mxu0 0
      %2058 = vmatprep.subr.bf16.mxu0 0
      %2059 = vmatpush2.bf16.msra.mxu0 0
      %2060 = vmatprep.subr.bf16.mxu0 0
      %2061 = vmatpush2.bf16.msra.mxu0 0
      %2062 = vmatprep.subr.bf16.mxu0 0
      %2063 = vmatpush2.bf16.msra.mxu0 0
      %2064 = vmatprep.subr.bf16.mxu0 0
      %2065 = vmatpush2.bf16.msra.mxu0 0
      %2066 = vmatprep.mubr.bf16.mxu0 0
      %2067 = vmatmul.mubr.bf16.gmra.mxu0 %v2023
      %v2068 = vpop.f32.mrf.mxu0
      %v2069 = vadd.f32 0.0, %v2068
      %v2070 = vpop.f32.mrf.mxu0
      %v2071 = vpop.f32.mrf.mxu0
      %v2072 = vadd.f32 0.0, %v2071
      %v2073 = vpop.f32.mrf.mxu0
      %2074 = vmatprep.mubr.bf16.mxu0 0
      %2075 = vmatmul.mubr.bf16.gmra.mxu0 %v2026
      %v2076 = vpop.f32.mrf.mxu0
      %v2077 = vadd.f32 0.0, %v2076
      %v2078 = vpop.f32.mrf.mxu0
      %v2079 = vpop.f32.mrf.mxu0
      %v2080 = vadd.f32 0.0, %v2079
      %v2081 = vpop.f32.mrf.mxu0
      %2082 = vmatprep.mubr.bf16.mxu0 0
      %2083 = vmatmul.mubr.bf16.gmra.mxu0 %v2029
      %v2084 = vpop.f32.mrf.mxu0
      %v2085 = vadd.f32 0.0, %v2084
      %v2086 = vpop.f32.mrf.mxu0
      %v2087 = vpop.f32.mrf.mxu0
      %v2088 = vadd.f32 0.0, %v2087
      %v2089 = vpop.f32.mrf.mxu0
      %2090 = vmatprep.mubr.bf16.mxu0 0
      %2091 = vmatmul.mubr.bf16.gmra.mxu0 %v2032
      %v2092 = vpop.f32.mrf.mxu0
      %v2093 = vadd.f32 0.0, %v2092
      %v2094 = vpop.f32.mrf.mxu0
      %v2095 = vpop.f32.mrf.mxu0
      %v2096 = vadd.f32 0.0, %v2095
      %v2097 = vpop.f32.mrf.mxu0
      %2098 = vdwg.mxu0
      %2103 = vrot.lane.b32.xlu0 %v1131, 64
      %v2104 = vpop.permute.xlu0 %2103
      %2105 = vrot.lane.b32.xlu0 %v1132, 64
      %v2106 = vpop.permute.xlu0 %2105
      %2107 = vrot.lane.b32.xlu0 %v1133, 64
      %v2108 = vpop.permute.xlu0 %2107
      %2109 = vrot.lane.b32.xlu0 %v1134, 64
      %v2110 = vpop.permute.xlu0 %2109
      %v2116 = vsel %vm1544, %v1905, 0
      %v2119 = vsel %vm1544, %v1906, 0
      %v2122 = vsel %vm1544, %v1907, 0
      %v2125 = vsel %vm1544, %v1908, 0
      %2127 = vmatprep.subr.bf16.mxu0 0
      %2128 = vmatpush1.bf16.msra.mxu0 0
      %2129 = vmatprep.subr.bf16.mxu0 0
      %2130 = vmatpush1.bf16.msra.mxu0 0
      %2131 = vmatprep.subr.bf16.mxu0 0
      %2132 = vmatpush1.bf16.msra.mxu0 0
      %2133 = vmatprep.subr.bf16.mxu0 0
      %2134 = vmatpush1.bf16.msra.mxu0 0
      %2135 = vmatprep.subr.bf16.mxu0 0
      %2136 = vmatpush1.bf16.msra.mxu0 %v2110
      %2137 = vmatprep.subr.bf16.mxu0 0
      %2138 = vmatpush1.bf16.msra.mxu0 %v2108
      %2139 = vmatprep.subr.bf16.mxu0 0
      %2140 = vmatpush1.bf16.msra.mxu0 %v2106
      %2141 = vmatprep.subr.bf16.mxu0 0
      %2142 = vmatpush1.bf16.msra.mxu0 %v2104
      %2143 = vmatprep.subr.bf16.mxu0 0
      %2144 = vmatpush2.bf16.msra.mxu0 0
      %2145 = vmatprep.subr.bf16.mxu0 0
      %2146 = vmatpush2.bf16.msra.mxu0 0
      %2147 = vmatprep.subr.bf16.mxu0 0
      %2148 = vmatpush2.bf16.msra.mxu0 0
      %2149 = vmatprep.subr.bf16.mxu0 0
      %2150 = vmatpush2.bf16.msra.mxu0 0
      %2151 = vmatprep.subr.bf16.mxu0 0
      %2152 = vmatpush2.bf16.msra.mxu0 0
      %2153 = vmatprep.subr.bf16.mxu0 0
      %2154 = vmatpush2.bf16.msra.mxu0 0
      %2155 = vmatprep.subr.bf16.mxu0 0
      %2156 = vmatpush2.bf16.msra.mxu0 0
      %2157 = vmatprep.subr.bf16.mxu0 0
      %2158 = vmatpush2.bf16.msra.mxu0 0
      %2159 = vmatprep.mubr.bf16.mxu0 0
      %2160 = vmatmul.mubr.bf16.gmra.mxu0 %v2116
      %v2161 = vpop.f32.mrf.mxu0
      %v2162 = vadd.f32 0.0, %v2161
      %v2163 = vpop.f32.mrf.mxu0
      %v2164 = vpop.f32.mrf.mxu0
      %v2165 = vadd.f32 0.0, %v2164
      %v2166 = vpop.f32.mrf.mxu0
      %2167 = vmatprep.mubr.bf16.mxu0 0
      %2168 = vmatmul.mubr.bf16.gmra.mxu0 %v2119
      %v2169 = vpop.f32.mrf.mxu0
      %v2170 = vadd.f32 0.0, %v2169
      %v2171 = vpop.f32.mrf.mxu0
      %v2172 = vpop.f32.mrf.mxu0
      %v2173 = vadd.f32 0.0, %v2172
      %v2174 = vpop.f32.mrf.mxu0
      %2175 = vmatprep.mubr.bf16.mxu0 0
      %2176 = vmatmul.mubr.bf16.gmra.mxu0 %v2122
      %v2177 = vpop.f32.mrf.mxu0
      %v2178 = vadd.f32 0.0, %v2177
      %v2179 = vpop.f32.mrf.mxu0
      %v2180 = vpop.f32.mrf.mxu0
      %v2181 = vadd.f32 0.0, %v2180
      %v2182 = vpop.f32.mrf.mxu0
      %2183 = vmatprep.mubr.bf16.mxu0 0
      %2184 = vmatmul.mubr.bf16.gmra.mxu0 %v2125
      %v2185 = vpop.f32.mrf.mxu0
      %v2186 = vadd.f32 0.0, %v2185
      %v2187 = vpop.f32.mrf.mxu0
      %v2188 = vpop.f32.mrf.mxu0
      %v2189 = vadd.f32 0.0, %v2188
      %v2190 = vpop.f32.mrf.mxu0
      %2191 = vdwg.mxu0
      %2196 = vrot.lane.b32.xlu0 %v1135, 64
      %v2197 = vpop.permute.xlu0 %2196
      %2198 = vrot.lane.b32.xlu0 %v1136, 64
      %v2199 = vpop.permute.xlu0 %2198
      %2200 = vrot.lane.b32.xlu0 %v1137, 64
      %v2201 = vpop.permute.xlu0 %2200
      %2202 = vrot.lane.b32.xlu0 %v1138, 64
      %v2203 = vpop.permute.xlu0 %2202
      %v2209 = vsel %vm1544, %v1909, 0
      %v2212 = vsel %vm1544, %v1910, 0
      %v2215 = vsel %vm1544, %v1911, 0
      %v2218 = vsel %vm1544, %v1912, 0
      %2220 = vmatprep.subr.bf16.mxu0 0
      %2221 = vmatpush1.bf16.msra.mxu0 0
      %2222 = vmatprep.subr.bf16.mxu0 0
      %2223 = vmatpush1.bf16.msra.mxu0 0
      %2224 = vmatprep.subr.bf16.mxu0 0
      %2225 = vmatpush1.bf16.msra.mxu0 0
      %2226 = vmatprep.subr.bf16.mxu0 0
      %2227 = vmatpush1.bf16.msra.mxu0 0
      %2228 = vmatprep.subr.bf16.mxu0 0
      %2229 = vmatpush1.bf16.msra.mxu0 %v2203
      %2230 = vmatprep.subr.bf16.mxu0 0
      %2231 = vmatpush1.bf16.msra.mxu0 %v2201
      %2232 = vmatprep.subr.bf16.mxu0 0
      %2233 = vmatpush1.bf16.msra.mxu0 %v2199
      %2234 = vmatprep.subr.bf16.mxu0 0
      %2235 = vmatpush1.bf16.msra.mxu0 %v2197
      %2236 = vmatprep.subr.bf16.mxu0 0
      %2237 = vmatpush2.bf16.msra.mxu0 0
      %2238 = vmatprep.subr.bf16.mxu0 0
      %2239 = vmatpush2.bf16.msra.mxu0 0
      %2240 = vmatprep.subr.bf16.mxu0 0
      %2241 = vmatpush2.bf16.msra.mxu0 0
      %2242 = vmatprep.subr.bf16.mxu0 0
      %2243 = vmatpush2.bf16.msra.mxu0 0
      %2244 = vmatprep.subr.bf16.mxu0 0
      %2245 = vmatpush2.bf16.msra.mxu0 0
      %2246 = vmatprep.subr.bf16.mxu0 0
      %2247 = vmatpush2.bf16.msra.mxu0 0
      %2248 = vmatprep.subr.bf16.mxu0 0
      %2249 = vmatpush2.bf16.msra.mxu0 0
      %2250 = vmatprep.subr.bf16.mxu0 0
      %2251 = vmatpush2.bf16.msra.mxu0 0
      %2252 = vmatprep.mubr.bf16.mxu0 0
      %2253 = vmatmul.mubr.bf16.gmra.mxu0 %v2209
      %v2254 = vpop.f32.mrf.mxu0
      %v2255 = vadd.f32 0.0, %v2254
      %v2256 = vpop.f32.mrf.mxu0
      %v2257 = vpop.f32.mrf.mxu0
      %v2258 = vadd.f32 0.0, %v2257
      %v2259 = vpop.f32.mrf.mxu0
      %2260 = vmatprep.mubr.bf16.mxu0 0
      %2261 = vmatmul.mubr.bf16.gmra.mxu0 %v2212
      %v2262 = vpop.f32.mrf.mxu0
      %v2263 = vadd.f32 0.0, %v2262
      %v2264 = vpop.f32.mrf.mxu0
      %v2265 = vpop.f32.mrf.mxu0
      %v2266 = vadd.f32 0.0, %v2265
      %v2267 = vpop.f32.mrf.mxu0
      %2268 = vmatprep.mubr.bf16.mxu0 0
      %2269 = vmatmul.mubr.bf16.gmra.mxu0 %v2215
      %v2270 = vpop.f32.mrf.mxu0
      %v2271 = vadd.f32 0.0, %v2270
      %v2272 = vpop.f32.mrf.mxu0
      %v2273 = vpop.f32.mrf.mxu0
      %v2274 = vadd.f32 0.0, %v2273
      %v2275 = vpop.f32.mrf.mxu0
      %2276 = vmatprep.mubr.bf16.mxu0 0
      %2277 = vmatmul.mubr.bf16.gmra.mxu0 %v2218
      %v2278 = vpop.f32.mrf.mxu0
      %v2279 = vadd.f32 0.0, %v2278
      %v2280 = vpop.f32.mrf.mxu0
      %v2281 = vpop.f32.mrf.mxu0
      %v2282 = vadd.f32 0.0, %v2281
      %v2283 = vpop.f32.mrf.mxu0
      %2284 = vdwg.mxu0
      %2289 = vrot.lane.b32.xlu0 %v1009, 120
      %v2290 = vpop.permute.xlu0 %2289
      %2291 = vrot.lane.b32.xlu0 %v1010, 120
      %v2292 = vpop.permute.xlu0 %2291
      %2293 = vrot.lane.b32.xlu0 %v1011, 120
      %v2294 = vpop.permute.xlu0 %2293
      %2295 = vrot.lane.b32.xlu0 %v1012, 120
      %v2296 = vpop.permute.xlu0 %2295
      %2297 = vrot.lane.b32.xlu0 %v1066, 88
      %v2298 = vpop.permute.xlu0 %2297
      %2299 = vrot.lane.b32.xlu0 %v1067, 88
      %v2300 = vpop.permute.xlu0 %2299
      %2301 = vrot.lane.b32.xlu0 %v1068, 88
      %v2302 = vpop.permute.xlu0 %2301
      %2303 = vrot.lane.b32.xlu0 %v1069, 88
      %v2304 = vpop.permute.xlu0 %2303
      %v2306 = vsel %vm1151, %v2290, 0
      %v2309 = vsel %vm1151, %v2292, 0
      %v2312 = vsel %vm1151, %v2294, 0
      %v2315 = vsel %vm1151, %v2296, 0
      %v2318 = vsel %vm1151, %v2298, 0
      %v2321 = vsel %vm1151, %v2300, 0
      %v2324 = vsel %vm1151, %v2302, 0
      %v2327 = vsel %vm1151, %v2304, 0
      %2329 = vmatprep.subr.bf16.mxu0 0
      %2330 = vmatpush1.bf16.xpose.msra.mxu0 0
      %2331 = vmatprep.subr.bf16.mxu0 0
      %2332 = vmatpush1.bf16.xpose.msra.mxu0 0
      %2333 = vmatprep.subr.bf16.mxu0 0
      %2334 = vmatpush1.bf16.xpose.msra.mxu0 0
      %2335 = vmatprep.subr.bf16.mxu0 0
      %2336 = vmatpush1.bf16.xpose.msra.mxu0 0
      %2337 = vmatprep.subr.bf16.mxu0 0
      %2338 = vmatpush1.bf16.xpose.msra.mxu0 %v2327
      %2339 = vmatprep.subr.bf16.mxu0 0
      %2340 = vmatpush1.bf16.xpose.msra.mxu0 %v2324
      %2341 = vmatprep.subr.bf16.mxu0 0
      %2342 = vmatpush1.bf16.xpose.msra.mxu0 %v2321
      %2343 = vmatprep.subr.bf16.mxu0 0
      %2344 = vmatpush1.bf16.xpose.msra.mxu0 %v2318
      %2345 = vmatprep.subr.bf16.mxu0 0
      %2346 = vmatpush2.bf16.xpose.msra.mxu0 0
      %2347 = vmatprep.subr.bf16.mxu0 0
      %2348 = vmatpush2.bf16.xpose.msra.mxu0 0
      %2349 = vmatprep.subr.bf16.mxu0 0
      %2350 = vmatpush2.bf16.xpose.msra.mxu0 0
      %2351 = vmatprep.subr.bf16.mxu0 0
      %2352 = vmatpush2.bf16.xpose.msra.mxu0 0
      %2353 = vmatprep.subr.bf16.mxu0 0
      %2354 = vmatpush2.bf16.xpose.msra.mxu0 0
      %2355 = vmatprep.subr.bf16.mxu0 0
      %2356 = vmatpush2.bf16.xpose.msra.mxu0 0
      %2357 = vmatprep.subr.bf16.mxu0 0
      %2358 = vmatpush2.bf16.xpose.msra.mxu0 0
      %2359 = vmatprep.subr.bf16.mxu0 0
      %2360 = vmatpush2.bf16.xpose.msra.mxu0 0
      %2361 = vmatprep.mubr.bf16.mxu0 0
      %2362 = vmatmul.mubr.bf16.gmra.mxu0 %v2306
      %v2363 = vpop.f32.mrf.mxu0
      %v2364 = vadd.f32 0.0, %v2363
      %v2365 = vpop.f32.mrf.mxu0
      %v2366 = vpop.f32.mrf.mxu0
      %v2367 = vadd.f32 0.0, %v2366
      %v2368 = vpop.f32.mrf.mxu0
      %2369 = vmatprep.mubr.bf16.mxu0 0
      %2370 = vmatmul.mubr.bf16.gmra.mxu0 %v2309
      %v2371 = vpop.f32.mrf.mxu0
      %v2372 = vadd.f32 0.0, %v2371
      %v2373 = vpop.f32.mrf.mxu0
      %v2374 = vpop.f32.mrf.mxu0
      %v2375 = vadd.f32 0.0, %v2374
      %v2376 = vpop.f32.mrf.mxu0
      %2377 = vmatprep.mubr.bf16.mxu0 0
      %2378 = vmatmul.mubr.bf16.gmra.mxu0 %v2312
      %v2379 = vpop.f32.mrf.mxu0
      %v2380 = vadd.f32 0.0, %v2379
      %v2381 = vpop.f32.mrf.mxu0
      %v2382 = vpop.f32.mrf.mxu0
      %v2383 = vadd.f32 0.0, %v2382
      %v2384 = vpop.f32.mrf.mxu0
      %2385 = vmatprep.mubr.bf16.mxu0 0
      %2386 = vmatmul.mubr.bf16.gmra.mxu0 %v2315
      %v2387 = vpop.f32.mrf.mxu0
      %v2388 = vadd.f32 0.0, %v2387
      %v2389 = vpop.f32.mrf.mxu0
      %v2390 = vpop.f32.mrf.mxu0
      %v2391 = vadd.f32 0.0, %v2390
      %v2392 = vpop.f32.mrf.mxu0
      %2393 = vdwg.mxu0
      %2398 = vrot.lane.b32.xlu0 %v1013, 120
      %v2399 = vpop.permute.xlu0 %2398
      %2400 = vrot.lane.b32.xlu0 %v1014, 120
      %v2401 = vpop.permute.xlu0 %2400
      %2402 = vrot.lane.b32.xlu0 %v1015, 120
      %v2403 = vpop.permute.xlu0 %2402
      %2404 = vrot.lane.b32.xlu0 %v1016, 120
      %v2405 = vpop.permute.xlu0 %2404
      %2406 = vrot.lane.b32.xlu0 %v1070, 88
      %v2407 = vpop.permute.xlu0 %2406
      %2408 = vrot.lane.b32.xlu0 %v1071, 88
      %v2409 = vpop.permute.xlu0 %2408
      %2410 = vrot.lane.b32.xlu0 %v1072, 88
      %v2411 = vpop.permute.xlu0 %2410
      %2412 = vrot.lane.b32.xlu0 %v1073, 88
      %v2413 = vpop.permute.xlu0 %2412
      %v2415 = vsel %vm1151, %v2399, 0
      %v2418 = vsel %vm1151, %v2401, 0
      %v2421 = vsel %vm1151, %v2403, 0
      %v2424 = vsel %vm1151, %v2405, 0
      %v2427 = vsel %vm1151, %v2407, 0
      %v2430 = vsel %vm1151, %v2409, 0
      %v2433 = vsel %vm1151, %v2411, 0
      %v2436 = vsel %vm1151, %v2413, 0
      %2438 = vmatprep.subr.bf16.mxu0 0
      %2439 = vmatpush1.bf16.xpose.msra.mxu0 0
      %2440 = vmatprep.subr.bf16.mxu0 0
      %2441 = vmatpush1.bf16.xpose.msra.mxu0 0
      %2442 = vmatprep.subr.bf16.mxu0 0
      %2443 = vmatpush1.bf16.xpose.msra.mxu0 0
      %2444 = vmatprep.subr.bf16.mxu0 0
      %2445 = vmatpush1.bf16.xpose.msra.mxu0 0
      %2446 = vmatprep.subr.bf16.mxu0 0
      %2447 = vmatpush1.bf16.xpose.msra.mxu0 %v2436
      %2448 = vmatprep.subr.bf16.mxu0 0
      %2449 = vmatpush1.bf16.xpose.msra.mxu0 %v2433
      %2450 = vmatprep.subr.bf16.mxu0 0
      %2451 = vmatpush1.bf16.xpose.msra.mxu0 %v2430
      %2452 = vmatprep.subr.bf16.mxu0 0
      %2453 = vmatpush1.bf16.xpose.msra.mxu0 %v2427
      %2454 = vmatprep.subr.bf16.mxu0 0
      %2455 = vmatpush2.bf16.xpose.msra.mxu0 0
      %2456 = vmatprep.subr.bf16.mxu0 0
      %2457 = vmatpush2.bf16.xpose.msra.mxu0 0
      %2458 = vmatprep.subr.bf16.mxu0 0
      %2459 = vmatpush2.bf16.xpose.msra.mxu0 0
      %2460 = vmatprep.subr.bf16.mxu0 0
      %2461 = vmatpush2.bf16.xpose.msra.mxu0 0
      %2462 = vmatprep.subr.bf16.mxu0 0
      %2463 = vmatpush2.bf16.xpose.msra.mxu0 0
      %2464 = vmatprep.subr.bf16.mxu0 0
      %2465 = vmatpush2.bf16.xpose.msra.mxu0 0
      %2466 = vmatprep.subr.bf16.mxu0 0
      %2467 = vmatpush2.bf16.xpose.msra.mxu0 0
      %2468 = vmatprep.subr.bf16.mxu0 0
      %2469 = vmatpush2.bf16.xpose.msra.mxu0 0
      %2470 = vmatprep.mubr.bf16.mxu0 0
      %2471 = vmatmul.mubr.bf16.gmra.mxu0 %v2415
      %v2472 = vpop.f32.mrf.mxu0
      %v2473 = vadd.f32 0.0, %v2472
      %v2474 = vpop.f32.mrf.mxu0
      %v2475 = vpop.f32.mrf.mxu0
      %v2476 = vadd.f32 0.0, %v2475
      %v2477 = vpop.f32.mrf.mxu0
      %2478 = vmatprep.mubr.bf16.mxu0 0
      %2479 = vmatmul.mubr.bf16.gmra.mxu0 %v2418
      %v2480 = vpop.f32.mrf.mxu0
      %v2481 = vadd.f32 0.0, %v2480
      %v2482 = vpop.f32.mrf.mxu0
      %v2483 = vpop.f32.mrf.mxu0
      %v2484 = vadd.f32 0.0, %v2483
      %v2485 = vpop.f32.mrf.mxu0
      %2486 = vmatprep.mubr.bf16.mxu0 0
      %2487 = vmatmul.mubr.bf16.gmra.mxu0 %v2421
      %v2488 = vpop.f32.mrf.mxu0
      %v2489 = vadd.f32 0.0, %v2488
      %v2490 = vpop.f32.mrf.mxu0
      %v2491 = vpop.f32.mrf.mxu0
      %v2492 = vadd.f32 0.0, %v2491
      %v2493 = vpop.f32.mrf.mxu0
      %2494 = vmatprep.mubr.bf16.mxu0 0
      %2495 = vmatmul.mubr.bf16.gmra.mxu0 %v2424
      %v2496 = vpop.f32.mrf.mxu0
      %v2497 = vadd.f32 0.0, %v2496
      %v2498 = vpop.f32.mrf.mxu0
      %v2499 = vpop.f32.mrf.mxu0
      %v2500 = vadd.f32 0.0, %v2499
      %v2501 = vpop.f32.mrf.mxu0
      %2502 = vdwg.mxu0
      %2507 = vrot.lane.b32.xlu0 %v1017, 120
      %v2508 = vpop.permute.xlu0 %2507
      %2509 = vrot.lane.b32.xlu0 %v1018, 120
      %v2510 = vpop.permute.xlu0 %2509
      %2511 = vrot.lane.b32.xlu0 %v1019, 120
      %v2512 = vpop.permute.xlu0 %2511
      %2513 = vrot.lane.b32.xlu0 %v1020, 120
      %v2514 = vpop.permute.xlu0 %2513
      %2515 = vrot.lane.b32.xlu0 %v1074, 88
      %v2516 = vpop.permute.xlu0 %2515
      %2517 = vrot.lane.b32.xlu0 %v1075, 88
      %v2518 = vpop.permute.xlu0 %2517
      %2519 = vrot.lane.b32.xlu0 %v1076, 88
      %v2520 = vpop.permute.xlu0 %2519
      %2521 = vrot.lane.b32.xlu0 %v1077, 88
      %v2522 = vpop.permute.xlu0 %2521
      %v2524 = vsel %vm1151, %v2508, 0
      %v2527 = vsel %vm1151, %v2510, 0
      %v2530 = vsel %vm1151, %v2512, 0
      %v2533 = vsel %vm1151, %v2514, 0
      %v2536 = vsel %vm1151, %v2516, 0
      %v2539 = vsel %vm1151, %v2518, 0
      %v2542 = vsel %vm1151, %v2520, 0
      %v2545 = vsel %vm1151, %v2522, 0
      %2547 = vmatprep.subr.bf16.mxu0 0
      %2548 = vmatpush1.bf16.xpose.msra.mxu0 0
      %2549 = vmatprep.subr.bf16.mxu0 0
      %2550 = vmatpush1.bf16.xpose.msra.mxu0 0
      %2551 = vmatprep.subr.bf16.mxu0 0
      %2552 = vmatpush1.bf16.xpose.msra.mxu0 0
      %2553 = vmatprep.subr.bf16.mxu0 0
      %2554 = vmatpush1.bf16.xpose.msra.mxu0 0
      %2555 = vmatprep.subr.bf16.mxu0 0
      %2556 = vmatpush1.bf16.xpose.msra.mxu0 %v2545
      %2557 = vmatprep.subr.bf16.mxu0 0
      %2558 = vmatpush1.bf16.xpose.msra.mxu0 %v2542
      %2559 = vmatprep.subr.bf16.mxu0 0
      %2560 = vmatpush1.bf16.xpose.msra.mxu0 %v2539
      %2561 = vmatprep.subr.bf16.mxu0 0
      %2562 = vmatpush1.bf16.xpose.msra.mxu0 %v2536
      %2563 = vmatprep.subr.bf16.mxu0 0
      %2564 = vmatpush2.bf16.xpose.msra.mxu0 0
      %2565 = vmatprep.subr.bf16.mxu0 0
      %2566 = vmatpush2.bf16.xpose.msra.mxu0 0
      %2567 = vmatprep.subr.bf16.mxu0 0
      %2568 = vmatpush2.bf16.xpose.msra.mxu0 0
      %2569 = vmatprep.subr.bf16.mxu0 0
      %2570 = vmatpush2.bf16.xpose.msra.mxu0 0
      %2571 = vmatprep.subr.bf16.mxu0 0
      %2572 = vmatpush2.bf16.xpose.msra.mxu0 0
      %2573 = vmatprep.subr.bf16.mxu0 0
      %2574 = vmatpush2.bf16.xpose.msra.mxu0 0
      %2575 = vmatprep.subr.bf16.mxu0 0
      %2576 = vmatpush2.bf16.xpose.msra.mxu0 0
      %2577 = vmatprep.subr.bf16.mxu0 0
      %2578 = vmatpush2.bf16.xpose.msra.mxu0 0
      %2579 = vmatprep.mubr.bf16.mxu0 0
      %2580 = vmatmul.mubr.bf16.gmra.mxu0 %v2524
      %v2581 = vpop.f32.mrf.mxu0
      %v2582 = vadd.f32 0.0, %v2581
      %v2583 = vpop.f32.mrf.mxu0
      %v2584 = vpop.f32.mrf.mxu0
      %v2585 = vadd.f32 0.0, %v2584
      %v2586 = vpop.f32.mrf.mxu0
      %2587 = vmatprep.mubr.bf16.mxu0 0
      %2588 = vmatmul.mubr.bf16.gmra.mxu0 %v2527
      %v2589 = vpop.f32.mrf.mxu0
      %v2590 = vadd.f32 0.0, %v2589
      %v2591 = vpop.f32.mrf.mxu0
      %v2592 = vpop.f32.mrf.mxu0
      %v2593 = vadd.f32 0.0, %v2592
      %v2594 = vpop.f32.mrf.mxu0
      %2595 = vmatprep.mubr.bf16.mxu0 0
      %2596 = vmatmul.mubr.bf16.gmra.mxu0 %v2530
      %v2597 = vpop.f32.mrf.mxu0
      %v2598 = vadd.f32 0.0, %v2597
      %v2599 = vpop.f32.mrf.mxu0
      %v2600 = vpop.f32.mrf.mxu0
      %v2601 = vadd.f32 0.0, %v2600
      %v2602 = vpop.f32.mrf.mxu0
      %2603 = vmatprep.mubr.bf16.mxu0 0
      %2604 = vmatmul.mubr.bf16.gmra.mxu0 %v2533
      %v2605 = vpop.f32.mrf.mxu0
      %v2606 = vadd.f32 0.0, %v2605
      %v2607 = vpop.f32.mrf.mxu0
      %v2608 = vpop.f32.mrf.mxu0
      %v2609 = vadd.f32 0.0, %v2608
      %v2610 = vpop.f32.mrf.mxu0
      %2611 = vdwg.mxu0
      %2616 = vrot.lane.b32.xlu0 %v1021, 120
      %v2617 = vpop.permute.xlu0 %2616
      %2618 = vrot.lane.b32.xlu0 %v1022, 120
      %v2619 = vpop.permute.xlu0 %2618
      %2620 = vrot.lane.b32.xlu0 %v1023, 120
      %v2621 = vpop.permute.xlu0 %2620
      %2622 = vrot.lane.b32.xlu0 %v1024, 120
      %v2623 = vpop.permute.xlu0 %2622
      %2624 = vrot.lane.b32.xlu0 %v1078, 88
      %v2625 = vpop.permute.xlu0 %2624
      %2626 = vrot.lane.b32.xlu0 %v1079, 88
      %v2627 = vpop.permute.xlu0 %2626
      %2628 = vrot.lane.b32.xlu0 %v1080, 88
      %v2629 = vpop.permute.xlu0 %2628
      %2630 = vrot.lane.b32.xlu0 %v1081, 88
      %v2631 = vpop.permute.xlu0 %2630
      %v2633 = vsel %vm1151, %v2617, 0
      %v2636 = vsel %vm1151, %v2619, 0
      %v2639 = vsel %vm1151, %v2621, 0
      %v2642 = vsel %vm1151, %v2623, 0
      %v2645 = vsel %vm1151, %v2625, 0
      %v2648 = vsel %vm1151, %v2627, 0
      %v2651 = vsel %vm1151, %v2629, 0
      %v2654 = vsel %vm1151, %v2631, 0
      %2656 = vmatprep.subr.bf16.mxu0 0
      %2657 = vmatpush1.bf16.xpose.msra.mxu0 0
      %2658 = vmatprep.subr.bf16.mxu0 0
      %2659 = vmatpush1.bf16.xpose.msra.mxu0 0
      %2660 = vmatprep.subr.bf16.mxu0 0
      %2661 = vmatpush1.bf16.xpose.msra.mxu0 0
      %2662 = vmatprep.subr.bf16.mxu0 0
      %2663 = vmatpush1.bf16.xpose.msra.mxu0 0
      %2664 = vmatprep.subr.bf16.mxu0 0
      %2665 = vmatpush1.bf16.xpose.msra.mxu0 %v2654
      %2666 = vmatprep.subr.bf16.mxu0 0
      %2667 = vmatpush1.bf16.xpose.msra.mxu0 %v2651
      %2668 = vmatprep.subr.bf16.mxu0 0
      %2669 = vmatpush1.bf16.xpose.msra.mxu0 %v2648
      %2670 = vmatprep.subr.bf16.mxu0 0
      %2671 = vmatpush1.bf16.xpose.msra.mxu0 %v2645
      %2672 = vmatprep.subr.bf16.mxu0 0
      %2673 = vmatpush2.bf16.xpose.msra.mxu0 0
      %2674 = vmatprep.subr.bf16.mxu0 0
      %2675 = vmatpush2.bf16.xpose.msra.mxu0 0
      %2676 = vmatprep.subr.bf16.mxu0 0
      %2677 = vmatpush2.bf16.xpose.msra.mxu0 0
      %2678 = vmatprep.subr.bf16.mxu0 0
      %2679 = vmatpush2.bf16.xpose.msra.mxu0 0
      %2680 = vmatprep.subr.bf16.mxu0 0
      %2681 = vmatpush2.bf16.xpose.msra.mxu0 0
      %2682 = vmatprep.subr.bf16.mxu0 0
      %2683 = vmatpush2.bf16.xpose.msra.mxu0 0
      %2684 = vmatprep.subr.bf16.mxu0 0
      %2685 = vmatpush2.bf16.xpose.msra.mxu0 0
      %2686 = vmatprep.subr.bf16.mxu0 0
      %2687 = vmatpush2.bf16.xpose.msra.mxu0 0
      %2688 = vmatprep.mubr.bf16.mxu0 0
      %2689 = vmatmul.mubr.bf16.gmra.mxu0 %v2633
      %v2690 = vpop.f32.mrf.mxu0
      %v2691 = vadd.f32 0.0, %v2690
      %v2692 = vpop.f32.mrf.mxu0
      %v2693 = vpop.f32.mrf.mxu0
      %v2694 = vadd.f32 0.0, %v2693
      %v2695 = vpop.f32.mrf.mxu0
      %2696 = vmatprep.mubr.bf16.mxu0 0
      %2697 = vmatmul.mubr.bf16.gmra.mxu0 %v2636
      %v2698 = vpop.f32.mrf.mxu0
      %v2699 = vadd.f32 0.0, %v2698
      %v2700 = vpop.f32.mrf.mxu0
      %v2701 = vpop.f32.mrf.mxu0
      %v2702 = vadd.f32 0.0, %v2701
      %v2703 = vpop.f32.mrf.mxu0
      %2704 = vmatprep.mubr.bf16.mxu0 0
      %2705 = vmatmul.mubr.bf16.gmra.mxu0 %v2639
      %v2706 = vpop.f32.mrf.mxu0
      %v2707 = vadd.f32 0.0, %v2706
      %v2708 = vpop.f32.mrf.mxu0
      %v2709 = vpop.f32.mrf.mxu0
      %v2710 = vadd.f32 0.0, %v2709
      %v2711 = vpop.f32.mrf.mxu0
      %2712 = vmatprep.mubr.bf16.mxu0 0
      %2713 = vmatmul.mubr.bf16.gmra.mxu0 %v2642
      %v2714 = vpop.f32.mrf.mxu0
      %v2715 = vadd.f32 0.0, %v2714
      %v2716 = vpop.f32.mrf.mxu0
      %v2717 = vpop.f32.mrf.mxu0
      %v2718 = vadd.f32 0.0, %v2717
      %v2719 = vpop.f32.mrf.mxu0
      %2720 = vdwg.mxu0
      %v2721 = vsel %vm1544, %v2364, -inf
      %2722 = vmax.xlane.f32.xlu0 %v2721
      %v2723 = vpop.xlane.xlu0 %2722
      %v2724 = vsel %vm1544, %v2367, -inf
      %2725 = vmax.xlane.f32.xlu0 %v2724
      %v2726 = vpop.xlane.xlu0 %2725
      %v2727 = vsel %vm1544, %v2372, -inf
      %2728 = vmax.xlane.f32.xlu0 %v2727
      %v2729 = vpop.xlane.xlu0 %2728
      %v2730 = vsel %vm1544, %v2375, -inf
      %2731 = vmax.xlane.f32.xlu0 %v2730
      %v2732 = vpop.xlane.xlu0 %2731
      %v2733 = vsel %vm1544, %v2380, -inf
      %2734 = vmax.xlane.f32.xlu0 %v2733
      %v2735 = vpop.xlane.xlu0 %2734
      %v2736 = vsel %vm1544, %v2383, -inf
      %2737 = vmax.xlane.f32.xlu0 %v2736
      %v2738 = vpop.xlane.xlu0 %2737
      %v2739 = vsel %vm1544, %v2388, -inf
      %2740 = vmax.xlane.f32.xlu0 %v2739
      %v2741 = vpop.xlane.xlu0 %2740
      %v2742 = vsel %vm1544, %v2391, -inf
      %2743 = vmax.xlane.f32.xlu0 %v2742
      %v2744 = vpop.xlane.xlu0 %2743
      %v2745 = vsel %vm1544, %v2473, -inf
      %2746 = vmax.xlane.f32.xlu0 %v2745
      %v2747 = vpop.xlane.xlu0 %2746
      %v2748 = vsel %vm1544, %v2476, -inf
      %2749 = vmax.xlane.f32.xlu0 %v2748
      %v2750 = vpop.xlane.xlu0 %2749
      %v2751 = vsel %vm1544, %v2481, -inf
      %2752 = vmax.xlane.f32.xlu0 %v2751
      %v2753 = vpop.xlane.xlu0 %2752
      %v2754 = vsel %vm1544, %v2484, -inf
      %2755 = vmax.xlane.f32.xlu0 %v2754
      %v2756 = vpop.xlane.xlu0 %2755
      %v2757 = vsel %vm1544, %v2489, -inf
      %2758 = vmax.xlane.f32.xlu0 %v2757
      %v2759 = vpop.xlane.xlu0 %2758
      %v2760 = vsel %vm1544, %v2492, -inf
      %2761 = vmax.xlane.f32.xlu0 %v2760
      %v2762 = vpop.xlane.xlu0 %2761
      %v2763 = vsel %vm1544, %v2497, -inf
      %2764 = vmax.xlane.f32.xlu0 %v2763
      %v2765 = vpop.xlane.xlu0 %2764
      %v2766 = vsel %vm1544, %v2500, -inf
      %2767 = vmax.xlane.f32.xlu0 %v2766
      %v2768 = vpop.xlane.xlu0 %2767
      %v2769 = vsel %vm1544, %v2582, -inf
      %2770 = vmax.xlane.f32.xlu0 %v2769
      %v2771 = vpop.xlane.xlu0 %2770
      %v2772 = vsel %vm1544, %v2585, -inf
      %2773 = vmax.xlane.f32.xlu0 %v2772
      %v2774 = vpop.xlane.xlu0 %2773
      %v2775 = vsel %vm1544, %v2590, -inf
      %2776 = vmax.xlane.f32.xlu0 %v2775
      %v2777 = vpop.xlane.xlu0 %2776
      %v2778 = vsel %vm1544, %v2593, -inf
      %2779 = vmax.xlane.f32.xlu0 %v2778
      %v2780 = vpop.xlane.xlu0 %2779
      %v2781 = vsel %vm1544, %v2598, -inf
      %2782 = vmax.xlane.f32.xlu0 %v2781
      %v2783 = vpop.xlane.xlu0 %2782
      %v2784 = vsel %vm1544, %v2601, -inf
      %2785 = vmax.xlane.f32.xlu0 %v2784
      %v2786 = vpop.xlane.xlu0 %2785
      %v2787 = vsel %vm1544, %v2606, -inf
      %2788 = vmax.xlane.f32.xlu0 %v2787
      %v2789 = vpop.xlane.xlu0 %2788
      %v2790 = vsel %vm1544, %v2609, -inf
      %2791 = vmax.xlane.f32.xlu0 %v2790
      %v2792 = vpop.xlane.xlu0 %2791
      %v2793 = vsel %vm1544, %v2691, -inf
      %2794 = vmax.xlane.f32.xlu0 %v2793
      %v2795 = vpop.xlane.xlu0 %2794
      %v2796 = vsel %vm1544, %v2694, -inf
      %2797 = vmax.xlane.f32.xlu0 %v2796
      %v2798 = vpop.xlane.xlu0 %2797
      %v2799 = vsel %vm1544, %v2699, -inf
      %2800 = vmax.xlane.f32.xlu0 %v2799
      %v2801 = vpop.xlane.xlu0 %2800
      %v2802 = vsel %vm1544, %v2702, -inf
      %2803 = vmax.xlane.f32.xlu0 %v2802
      %v2804 = vpop.xlane.xlu0 %2803
      %v2805 = vsel %vm1544, %v2707, -inf
      %2806 = vmax.xlane.f32.xlu0 %v2805
      %v2807 = vpop.xlane.xlu0 %2806
      %v2808 = vsel %vm1544, %v2710, -inf
      %2809 = vmax.xlane.f32.xlu0 %v2808
      %v2810 = vpop.xlane.xlu0 %2809
      %v2811 = vsel %vm1544, %v2715, -inf
      %2812 = vmax.xlane.f32.xlu0 %v2811
      %v2813 = vpop.xlane.xlu0 %2812
      %v2814 = vsel %vm1544, %v2718, -inf
      %2815 = vmax.xlane.f32.xlu0 %v2814
      %v2816 = vpop.xlane.xlu0 %2815
      %v2817 = vsub.f32 %v2364, %v2723
      %v2818 = vsub.f32 %v2367, %v2726
      %v2819 = vsub.f32 %v2372, %v2729
      %v2820 = vsub.f32 %v2375, %v2732
      %v2821 = vsub.f32 %v2380, %v2735
      %v2822 = vsub.f32 %v2383, %v2738
      %v2823 = vsub.f32 %v2388, %v2741
      %v2824 = vsub.f32 %v2391, %v2744
      %v2825 = vsub.f32 %v2473, %v2747
      %v2826 = vsub.f32 %v2476, %v2750
      %v2827 = vsub.f32 %v2481, %v2753
      %v2828 = vsub.f32 %v2484, %v2756
      %v2829 = vsub.f32 %v2489, %v2759
      %v2830 = vsub.f32 %v2492, %v2762
      %v2831 = vsub.f32 %v2497, %v2765
      %v2832 = vsub.f32 %v2500, %v2768
      %v2833 = vsub.f32 %v2582, %v2771
      %v2834 = vsub.f32 %v2585, %v2774
      %v2835 = vsub.f32 %v2590, %v2777
      %v2836 = vsub.f32 %v2593, %v2780
      %v2837 = vsub.f32 %v2598, %v2783
      %v2838 = vsub.f32 %v2601, %v2786
      %v2839 = vsub.f32 %v2606, %v2789
      %v2840 = vsub.f32 %v2609, %v2792
      %v2841 = vsub.f32 %v2691, %v2795
      %v2842 = vsub.f32 %v2694, %v2798
      %v2843 = vsub.f32 %v2699, %v2801
      %v2844 = vsub.f32 %v2702, %v2804
      %v2845 = vsub.f32 %v2707, %v2807
      %v2846 = vsub.f32 %v2710, %v2810
      %v2847 = vsub.f32 %v2715, %v2813
      %v2848 = vsub.f32 %v2718, %v2816
      %v2849 = vmul.f32 %v2817, 1.442695
      %v2850 = vpow.pop %v2849
      %v2851 = vmul.f32 %v2818, 1.442695
      %v2852 = vpow.pop %v2851
      %v2853 = vmul.f32 %v2819, 1.442695
      %v2854 = vpow.pop %v2853
      %v2855 = vmul.f32 %v2820, 1.442695
      %v2856 = vpow.pop %v2855
      %v2857 = vmul.f32 %v2821, 1.442695
      %v2858 = vpow.pop %v2857
      %v2859 = vmul.f32 %v2822, 1.442695
      %v2860 = vpow.pop %v2859
      %v2861 = vmul.f32 %v2823, 1.442695
      %v2862 = vpow.pop %v2861
      %v2863 = vmul.f32 %v2824, 1.442695
      %v2864 = vpow.pop %v2863
      %v2865 = vmul.f32 %v2825, 1.442695
      %v2866 = vpow.pop %v2865
      %v2867 = vmul.f32 %v2826, 1.442695
      %v2868 = vpow.pop %v2867
      %v2869 = vmul.f32 %v2827, 1.442695
      %v2870 = vpow.pop %v2869
      %v2871 = vmul.f32 %v2828, 1.442695
      %v2872 = vpow.pop %v2871
      %v2873 = vmul.f32 %v2829, 1.442695
      %v2874 = vpow.pop %v2873
      %v2875 = vmul.f32 %v2830, 1.442695
      %v2876 = vpow.pop %v2875
      %v2877 = vmul.f32 %v2831, 1.442695
      %v2878 = vpow.pop %v2877
      %v2879 = vmul.f32 %v2832, 1.442695
      %v2880 = vpow.pop %v2879
      %v2881 = vmul.f32 %v2833, 1.442695
      %v2882 = vpow.pop %v2881
      %v2883 = vmul.f32 %v2834, 1.442695
      %v2884 = vpow.pop %v2883
      %v2885 = vmul.f32 %v2835, 1.442695
      %v2886 = vpow.pop %v2885
      %v2887 = vmul.f32 %v2836, 1.442695
      %v2888 = vpow.pop %v2887
      %v2889 = vmul.f32 %v2837, 1.442695
      %v2890 = vpow.pop %v2889
      %v2891 = vmul.f32 %v2838, 1.442695
      %v2892 = vpow.pop %v2891
      %v2893 = vmul.f32 %v2839, 1.442695
      %v2894 = vpow.pop %v2893
      %v2895 = vmul.f32 %v2840, 1.442695
      %v2896 = vpow.pop %v2895
      %v2897 = vmul.f32 %v2841, 1.442695
      %v2898 = vpow.pop %v2897
      %v2899 = vmul.f32 %v2842, 1.442695
      %v2900 = vpow.pop %v2899
      %v2901 = vmul.f32 %v2843, 1.442695
      %v2902 = vpow.pop %v2901
      %v2903 = vmul.f32 %v2844, 1.442695
      %v2904 = vpow.pop %v2903
      %v2905 = vmul.f32 %v2845, 1.442695
      %v2906 = vpow.pop %v2905
      %v2907 = vmul.f32 %v2846, 1.442695
      %v2908 = vpow.pop %v2907
      %v2909 = vmul.f32 %v2847, 1.442695
      %v2910 = vpow.pop %v2909
      %v2911 = vmul.f32 %v2848, 1.442695
      %v2912 = vpow.pop %v2911
      %v2913 = vsel %vm1544, %v2850, 0.0
      %2914 = vadd.xlane.f32.xlu0 %v2913
      %v2915 = vpop.xlane.xlu0 %2914
      %v2916 = vsel %vm1544, %v2852, 0.0
      %2917 = vadd.xlane.f32.xlu0 %v2916
      %v2918 = vpop.xlane.xlu0 %2917
      %v2919 = vsel %vm1544, %v2854, 0.0
      %2920 = vadd.xlane.f32.xlu0 %v2919
      %v2921 = vpop.xlane.xlu0 %2920
      %v2922 = vsel %vm1544, %v2856, 0.0
      %2923 = vadd.xlane.f32.xlu0 %v2922
      %v2924 = vpop.xlane.xlu0 %2923
      %v2925 = vsel %vm1544, %v2858, 0.0
      %2926 = vadd.xlane.f32.xlu0 %v2925
      %v2927 = vpop.xlane.xlu0 %2926
      %v2928 = vsel %vm1544, %v2860, 0.0
      %2929 = vadd.xlane.f32.xlu0 %v2928
      %v2930 = vpop.xlane.xlu0 %2929
      %v2931 = vsel %vm1544, %v2862, 0.0
      %2932 = vadd.xlane.f32.xlu0 %v2931
      %v2933 = vpop.xlane.xlu0 %2932
      %v2934 = vsel %vm1544, %v2864, 0.0
      %2935 = vadd.xlane.f32.xlu0 %v2934
      %v2936 = vpop.xlane.xlu0 %2935
      %v2937 = vsel %vm1544, %v2866, 0.0
      %2938 = vadd.xlane.f32.xlu0 %v2937
      %v2939 = vpop.xlane.xlu0 %2938
      %v2940 = vsel %vm1544, %v2868, 0.0
      %2941 = vadd.xlane.f32.xlu0 %v2940
      %v2942 = vpop.xlane.xlu0 %2941
      %v2943 = vsel %vm1544, %v2870, 0.0
      %2944 = vadd.xlane.f32.xlu0 %v2943
      %v2945 = vpop.xlane.xlu0 %2944
      %v2946 = vsel %vm1544, %v2872, 0.0
      %2947 = vadd.xlane.f32.xlu0 %v2946
      %v2948 = vpop.xlane.xlu0 %2947
      %v2949 = vsel %vm1544, %v2874, 0.0
      %2950 = vadd.xlane.f32.xlu0 %v2949
      %v2951 = vpop.xlane.xlu0 %2950
      %v2952 = vsel %vm1544, %v2876, 0.0
      %2953 = vadd.xlane.f32.xlu0 %v2952
      %v2954 = vpop.xlane.xlu0 %2953
      %v2955 = vsel %vm1544, %v2878, 0.0
      %2956 = vadd.xlane.f32.xlu0 %v2955
      %v2957 = vpop.xlane.xlu0 %2956
      %v2958 = vsel %vm1544, %v2880, 0.0
      %2959 = vadd.xlane.f32.xlu0 %v2958
      %v2960 = vpop.xlane.xlu0 %2959
      %v2961 = vsel %vm1544, %v2882, 0.0
      %2962 = vadd.xlane.f32.xlu0 %v2961
      %v2963 = vpop.xlane.xlu0 %2962
      %v2964 = vsel %vm1544, %v2884, 0.0
      %2965 = vadd.xlane.f32.xlu0 %v2964
      %v2966 = vpop.xlane.xlu0 %2965
      %v2967 = vsel %vm1544, %v2886, 0.0
      %2968 = vadd.xlane.f32.xlu0 %v2967
      %v2969 = vpop.xlane.xlu0 %2968
      %v2970 = vsel %vm1544, %v2888, 0.0
      %2971 = vadd.xlane.f32.xlu0 %v2970
      %v2972 = vpop.xlane.xlu0 %2971
      %v2973 = vsel %vm1544, %v2890, 0.0
      %2974 = vadd.xlane.f32.xlu0 %v2973
      %v2975 = vpop.xlane.xlu0 %2974
      %v2976 = vsel %vm1544, %v2892, 0.0
      %2977 = vadd.xlane.f32.xlu0 %v2976
      %v2978 = vpop.xlane.xlu0 %2977
      %v2979 = vsel %vm1544, %v2894, 0.0
      %2980 = vadd.xlane.f32.xlu0 %v2979
      %v2981 = vpop.xlane.xlu0 %2980
      %v2982 = vsel %vm1544, %v2896, 0.0
      %2983 = vadd.xlane.f32.xlu0 %v2982
      %v2984 = vpop.xlane.xlu0 %2983
      %v2985 = vsel %vm1544, %v2898, 0.0
      %2986 = vadd.xlane.f32.xlu0 %v2985
      %v2987 = vpop.xlane.xlu0 %2986
      %v2988 = vsel %vm1544, %v2900, 0.0
      %2989 = vadd.xlane.f32.xlu0 %v2988
      %v2990 = vpop.xlane.xlu0 %2989
      %v2991 = vsel %vm1544, %v2902, 0.0
      %2992 = vadd.xlane.f32.xlu0 %v2991
      %v2993 = vpop.xlane.xlu0 %2992
      %v2994 = vsel %vm1544, %v2904, 0.0
      %2995 = vadd.xlane.f32.xlu0 %v2994
      %v2996 = vpop.xlane.xlu0 %2995
      %v2997 = vsel %vm1544, %v2906, 0.0
      %2998 = vadd.xlane.f32.xlu0 %v2997
      %v2999 = vpop.xlane.xlu0 %2998
      %v3000 = vsel %vm1544, %v2908, 0.0
      %3001 = vadd.xlane.f32.xlu0 %v3000
      %v3002 = vpop.xlane.xlu0 %3001
      %v3003 = vsel %vm1544, %v2910, 0.0
      %3004 = vadd.xlane.f32.xlu0 %v3003
      %v3005 = vpop.xlane.xlu0 %3004
      %v3006 = vsel %vm1544, %v2912, 0.0
      %3007 = vadd.xlane.f32.xlu0 %v3006
      %v3008 = vpop.xlane.xlu0 %3007
      %v3009 = vrcp.pop %v2915
      %v3010 = vrcp.pop %v2918
      %v3011 = vrcp.pop %v2921
      %v3012 = vrcp.pop %v2924
      %v3013 = vrcp.pop %v2927
      %v3014 = vrcp.pop %v2930
      %v3015 = vrcp.pop %v2933
      %v3016 = vrcp.pop %v2936
      %v3017 = vrcp.pop %v2939
      %v3018 = vrcp.pop %v2942
      %v3019 = vrcp.pop %v2945
      %v3020 = vrcp.pop %v2948
      %v3021 = vrcp.pop %v2951
      %v3022 = vrcp.pop %v2954
      %v3023 = vrcp.pop %v2957
      %v3024 = vrcp.pop %v2960
      %v3025 = vrcp.pop %v2963
      %v3026 = vrcp.pop %v2966
      %v3027 = vrcp.pop %v2969
      %v3028 = vrcp.pop %v2972
      %v3029 = vrcp.pop %v2975
      %v3030 = vrcp.pop %v2978
      %v3031 = vrcp.pop %v2981
      %v3032 = vrcp.pop %v2984
      %v3033 = vrcp.pop %v2987
      %v3034 = vrcp.pop %v2990
      %v3035 = vrcp.pop %v2993
      %v3036 = vrcp.pop %v2996
      %v3037 = vrcp.pop %v2999
      %v3038 = vrcp.pop %v3002
      %v3039 = vrcp.pop %v3005
      %v3040 = vrcp.pop %v3008
      %v3041 = vmul.f32 %v2850, %v3009
      %v3042 = vmul.f32 %v2852, %v3010
      %v3043 = vmul.f32 %v2854, %v3011
      %v3044 = vmul.f32 %v2856, %v3012
      %v3045 = vmul.f32 %v2858, %v3013
      %v3046 = vmul.f32 %v2860, %v3014
      %v3047 = vmul.f32 %v2862, %v3015
      %v3048 = vmul.f32 %v2864, %v3016
      %v3049 = vmul.f32 %v2866, %v3017
      %v3050 = vmul.f32 %v2868, %v3018
      %v3051 = vmul.f32 %v2870, %v3019
      %v3052 = vmul.f32 %v2872, %v3020
      %v3053 = vmul.f32 %v2874, %v3021
      %v3054 = vmul.f32 %v2876, %v3022
      %v3055 = vmul.f32 %v2878, %v3023
      %v3056 = vmul.f32 %v2880, %v3024
      %v3057 = vmul.f32 %v2882, %v3025
      %v3058 = vmul.f32 %v2884, %v3026
      %v3059 = vmul.f32 %v2886, %v3027
      %v3060 = vmul.f32 %v2888, %v3028
      %v3061 = vmul.f32 %v2890, %v3029
      %v3062 = vmul.f32 %v2892, %v3030
      %v3063 = vmul.f32 %v2894, %v3031
      %v3064 = vmul.f32 %v2896, %v3032
      %v3065 = vmul.f32 %v2898, %v3033
      %v3066 = vmul.f32 %v2900, %v3034
      %v3067 = vmul.f32 %v2902, %v3035
      %v3068 = vmul.f32 %v2904, %v3036
      %v3069 = vmul.f32 %v2906, %v3037
      %v3070 = vmul.f32 %v2908, %v3038
      %v3071 = vmul.f32 %v2910, %v3039
      %v3072 = vmul.f32 %v2912, %v3040
      %v3073 = vpack.c.bf16 %v3042, %v3041
      %v3074 = vpack.c.bf16 %v3044, %v3043
      %v3075 = vpack.c.bf16 %v3046, %v3045
      %v3076 = vpack.c.bf16 %v3048, %v3047
      %v3077 = vpack.c.bf16 %v3050, %v3049
      %v3078 = vpack.c.bf16 %v3052, %v3051
      %v3079 = vpack.c.bf16 %v3054, %v3053
      %v3080 = vpack.c.bf16 %v3056, %v3055
      %v3081 = vpack.c.bf16 %v3058, %v3057
      %v3082 = vpack.c.bf16 %v3060, %v3059
      %v3083 = vpack.c.bf16 %v3062, %v3061
      %v3084 = vpack.c.bf16 %v3064, %v3063
      %v3085 = vpack.c.bf16 %v3066, %v3065
      %v3086 = vpack.c.bf16 %v3068, %v3067
      %v3087 = vpack.c.bf16 %v3070, %v3069
      %v3088 = vpack.c.bf16 %v3072, %v3071
      %3089 = vrot.lane.b32.xlu0 %v1123, 56
      %v3090 = vpop.permute.xlu0 %3089
      %3091 = vrot.lane.b32.xlu0 %v1124, 56
      %v3092 = vpop.permute.xlu0 %3091
      %3093 = vrot.lane.b32.xlu0 %v1125, 56
      %v3094 = vpop.permute.xlu0 %3093
      %3095 = vrot.lane.b32.xlu0 %v1126, 56
      %v3096 = vpop.permute.xlu0 %3095
      %v3102 = vsel %vm1544, %v3073, 0
      %v3105 = vsel %vm1544, %v3074, 0
      %v3108 = vsel %vm1544, %v3075, 0
      %v3111 = vsel %vm1544, %v3076, 0
      %3113 = vmatprep.subr.bf16.mxu0 0
      %3114 = vmatpush1.bf16.msra.mxu0 0
      %3115 = vmatprep.subr.bf16.mxu0 0
      %3116 = vmatpush1.bf16.msra.mxu0 0
      %3117 = vmatprep.subr.bf16.mxu0 0
      %3118 = vmatpush1.bf16.msra.mxu0 0
      %3119 = vmatprep.subr.bf16.mxu0 0
      %3120 = vmatpush1.bf16.msra.mxu0 0
      %3121 = vmatprep.subr.bf16.mxu0 0
      %3122 = vmatpush1.bf16.msra.mxu0 %v3096
      %3123 = vmatprep.subr.bf16.mxu0 0
      %3124 = vmatpush1.bf16.msra.mxu0 %v3094
      %3125 = vmatprep.subr.bf16.mxu0 0
      %3126 = vmatpush1.bf16.msra.mxu0 %v3092
      %3127 = vmatprep.subr.bf16.mxu0 0
      %3128 = vmatpush1.bf16.msra.mxu0 %v3090
      %3129 = vmatprep.subr.bf16.mxu0 0
      %3130 = vmatpush2.bf16.msra.mxu0 0
      %3131 = vmatprep.subr.bf16.mxu0 0
      %3132 = vmatpush2.bf16.msra.mxu0 0
      %3133 = vmatprep.subr.bf16.mxu0 0
      %3134 = vmatpush2.bf16.msra.mxu0 0
      %3135 = vmatprep.subr.bf16.mxu0 0
      %3136 = vmatpush2.bf16.msra.mxu0 0
      %3137 = vmatprep.subr.bf16.mxu0 0
      %3138 = vmatpush2.bf16.msra.mxu0 0
      %3139 = vmatprep.subr.bf16.mxu0 0
      %3140 = vmatpush2.bf16.msra.mxu0 0
      %3141 = vmatprep.subr.bf16.mxu0 0
      %3142 = vmatpush2.bf16.msra.mxu0 0
      %3143 = vmatprep.subr.bf16.mxu0 0
      %3144 = vmatpush2.bf16.msra.mxu0 0
      %3145 = vmatprep.mubr.bf16.mxu0 0
      %3146 = vmatmul.mubr.bf16.gmra.mxu0 %v3102
      %v3147 = vpop.f32.mrf.mxu0
      %v3148 = vadd.f32 0.0, %v3147
      %v3149 = vpop.f32.mrf.mxu0
      %v3150 = vpop.f32.mrf.mxu0
      %v3151 = vadd.f32 0.0, %v3150
      %v3152 = vpop.f32.mrf.mxu0
      %3153 = vmatprep.mubr.bf16.mxu0 0
      %3154 = vmatmul.mubr.bf16.gmra.mxu0 %v3105
      %v3155 = vpop.f32.mrf.mxu0
      %v3156 = vadd.f32 0.0, %v3155
      %v3157 = vpop.f32.mrf.mxu0
      %v3158 = vpop.f32.mrf.mxu0
      %v3159 = vadd.f32 0.0, %v3158
      %v3160 = vpop.f32.mrf.mxu0
      %3161 = vmatprep.mubr.bf16.mxu0 0
      %3162 = vmatmul.mubr.bf16.gmra.mxu0 %v3108
      %v3163 = vpop.f32.mrf.mxu0
      %v3164 = vadd.f32 0.0, %v3163
      %v3165 = vpop.f32.mrf.mxu0
      %v3166 = vpop.f32.mrf.mxu0
      %v3167 = vadd.f32 0.0, %v3166
      %v3168 = vpop.f32.mrf.mxu0
      %3169 = vmatprep.mubr.bf16.mxu0 0
      %3170 = vmatmul.mubr.bf16.gmra.mxu0 %v3111
      %v3171 = vpop.f32.mrf.mxu0
      %v3172 = vadd.f32 0.0, %v3171
      %v3173 = vpop.f32.mrf.mxu0
      %v3174 = vpop.f32.mrf.mxu0
      %v3175 = vadd.f32 0.0, %v3174
      %v3176 = vpop.f32.mrf.mxu0
      %3177 = vdwg.mxu0
      %3178 = vrot.lane.b32.xlu0 %v1127, 56
      %v3179 = vpop.permute.xlu0 %3178
      %3180 = vrot.lane.b32.xlu0 %v1128, 56
      %v3181 = vpop.permute.xlu0 %3180
      %3182 = vrot.lane.b32.xlu0 %v1129, 56
      %v3183 = vpop.permute.xlu0 %3182
      %3184 = vrot.lane.b32.xlu0 %v1130, 56
      %v3185 = vpop.permute.xlu0 %3184
      %v3191 = vsel %vm1544, %v3077, 0
      %v3194 = vsel %vm1544, %v3078, 0
      %v3197 = vsel %vm1544, %v3079, 0
      %v3200 = vsel %vm1544, %v3080, 0
      %3202 = vmatprep.subr.bf16.mxu0 0
      %3203 = vmatpush1.bf16.msra.mxu0 0
      %3204 = vmatprep.subr.bf16.mxu0 0
      %3205 = vmatpush1.bf16.msra.mxu0 0
      %3206 = vmatprep.subr.bf16.mxu0 0
      %3207 = vmatpush1.bf16.msra.mxu0 0
      %3208 = vmatprep.subr.bf16.mxu0 0
      %3209 = vmatpush1.bf16.msra.mxu0 0
      %3210 = vmatprep.subr.bf16.mxu0 0
      %3211 = vmatpush1.bf16.msra.mxu0 %v3185
      %3212 = vmatprep.subr.bf16.mxu0 0
      %3213 = vmatpush1.bf16.msra.mxu0 %v3183
      %3214 = vmatprep.subr.bf16.mxu0 0
      %3215 = vmatpush1.bf16.msra.mxu0 %v3181
      %3216 = vmatprep.subr.bf16.mxu0 0
      %3217 = vmatpush1.bf16.msra.mxu0 %v3179
      %3218 = vmatprep.subr.bf16.mxu0 0
      %3219 = vmatpush2.bf16.msra.mxu0 0
      %3220 = vmatprep.subr.bf16.mxu0 0
      %3221 = vmatpush2.bf16.msra.mxu0 0
      %3222 = vmatprep.subr.bf16.mxu0 0
      %3223 = vmatpush2.bf16.msra.mxu0 0
      %3224 = vmatprep.subr.bf16.mxu0 0
      %3225 = vmatpush2.bf16.msra.mxu0 0
      %3226 = vmatprep.subr.bf16.mxu0 0
      %3227 = vmatpush2.bf16.msra.mxu0 0
      %3228 = vmatprep.subr.bf16.mxu0 0
      %3229 = vmatpush2.bf16.msra.mxu0 0
      %3230 = vmatprep.subr.bf16.mxu0 0
      %3231 = vmatpush2.bf16.msra.mxu0 0
      %3232 = vmatprep.subr.bf16.mxu0 0
      %3233 = vmatpush2.bf16.msra.mxu0 0
      %3234 = vmatprep.mubr.bf16.mxu0 0
      %3235 = vmatmul.mubr.bf16.gmra.mxu0 %v3191
      %v3236 = vpop.f32.mrf.mxu0
      %v3237 = vadd.f32 0.0, %v3236
      %v3238 = vpop.f32.mrf.mxu0
      %v3239 = vpop.f32.mrf.mxu0
      %v3240 = vadd.f32 0.0, %v3239
      %v3241 = vpop.f32.mrf.mxu0
      %3242 = vmatprep.mubr.bf16.mxu0 0
      %3243 = vmatmul.mubr.bf16.gmra.mxu0 %v3194
      %v3244 = vpop.f32.mrf.mxu0
      %v3245 = vadd.f32 0.0, %v3244
      %v3246 = vpop.f32.mrf.mxu0
      %v3247 = vpop.f32.mrf.mxu0
      %v3248 = vadd.f32 0.0, %v3247
      %v3249 = vpop.f32.mrf.mxu0
      %3250 = vmatprep.mubr.bf16.mxu0 0
      %3251 = vmatmul.mubr.bf16.gmra.mxu0 %v3197
      %v3252 = vpop.f32.mrf.mxu0
      %v3253 = vadd.f32 0.0, %v3252
      %v3254 = vpop.f32.mrf.mxu0
      %v3255 = vpop.f32.mrf.mxu0
      %v3256 = vadd.f32 0.0, %v3255
      %v3257 = vpop.f32.mrf.mxu0
      %3258 = vmatprep.mubr.bf16.mxu0 0
      %3259 = vmatmul.mubr.bf16.gmra.mxu0 %v3200
      %v3260 = vpop.f32.mrf.mxu0
      %v3261 = vadd.f32 0.0, %v3260
      %v3262 = vpop.f32.mrf.mxu0
      %v3263 = vpop.f32.mrf.mxu0
      %v3264 = vadd.f32 0.0, %v3263
      %v3265 = vpop.f32.mrf.mxu0
      %3266 = vdwg.mxu0
      %3267 = vrot.lane.b32.xlu0 %v1131, 56
      %v3268 = vpop.permute.xlu0 %3267
      %3269 = vrot.lane.b32.xlu0 %v1132, 56
      %v3270 = vpop.permute.xlu0 %3269
      %3271 = vrot.lane.b32.xlu0 %v1133, 56
      %v3272 = vpop.permute.xlu0 %3271
      %3273 = vrot.lane.b32.xlu0 %v1134, 56
      %v3274 = vpop.permute.xlu0 %3273
      %v3280 = vsel %vm1544, %v3081, 0
      %v3283 = vsel %vm1544, %v3082, 0
      %v3286 = vsel %vm1544, %v3083, 0
      %v3289 = vsel %vm1544, %v3084, 0
      %3291 = vmatprep.subr.bf16.mxu0 0
      %3292 = vmatpush1.bf16.msra.mxu0 0
      %3293 = vmatprep.subr.bf16.mxu0 0
      %3294 = vmatpush1.bf16.msra.mxu0 0
      %3295 = vmatprep.subr.bf16.mxu0 0
      %3296 = vmatpush1.bf16.msra.mxu0 0
      %3297 = vmatprep.subr.bf16.mxu0 0
      %3298 = vmatpush1.bf16.msra.mxu0 0
      %3299 = vmatprep.subr.bf16.mxu0 0
      %3300 = vmatpush1.bf16.msra.mxu0 %v3274
      %3301 = vmatprep.subr.bf16.mxu0 0
      %3302 = vmatpush1.bf16.msra.mxu0 %v3272
      %3303 = vmatprep.subr.bf16.mxu0 0
      %3304 = vmatpush1.bf16.msra.mxu0 %v3270
      %3305 = vmatprep.subr.bf16.mxu0 0
      %3306 = vmatpush1.bf16.msra.mxu0 %v3268
      %3307 = vmatprep.subr.bf16.mxu0 0
      %3308 = vmatpush2.bf16.msra.mxu0 0
      %3309 = vmatprep.subr.bf16.mxu0 0
      %3310 = vmatpush2.bf16.msra.mxu0 0
      %3311 = vmatprep.subr.bf16.mxu0 0
      %3312 = vmatpush2.bf16.msra.mxu0 0
      %3313 = vmatprep.subr.bf16.mxu0 0
      %3314 = vmatpush2.bf16.msra.mxu0 0
      %3315 = vmatprep.subr.bf16.mxu0 0
      %3316 = vmatpush2.bf16.msra.mxu0 0
      %3317 = vmatprep.subr.bf16.mxu0 0
      %3318 = vmatpush2.bf16.msra.mxu0 0
      %3319 = vmatprep.subr.bf16.mxu0 0
      %3320 = vmatpush2.bf16.msra.mxu0 0
      %3321 = vmatprep.subr.bf16.mxu0 0
      %3322 = vmatpush2.bf16.msra.mxu0 0
      %3323 = vmatprep.mubr.bf16.mxu0 0
      %3324 = vmatmul.mubr.bf16.gmra.mxu0 %v3280
      %v3325 = vpop.f32.mrf.mxu0
      %v3326 = vadd.f32 0.0, %v3325
      %v3327 = vpop.f32.mrf.mxu0
      %v3328 = vpop.f32.mrf.mxu0
      %v3329 = vadd.f32 0.0, %v3328
      %v3330 = vpop.f32.mrf.mxu0
      %3331 = vmatprep.mubr.bf16.mxu0 0
      %3332 = vmatmul.mubr.bf16.gmra.mxu0 %v3283
      %v3333 = vpop.f32.mrf.mxu0
      %v3334 = vadd.f32 0.0, %v3333
      %v3335 = vpop.f32.mrf.mxu0
      %v3336 = vpop.f32.mrf.mxu0
      %v3337 = vadd.f32 0.0, %v3336
      %v3338 = vpop.f32.mrf.mxu0
      %3339 = vmatprep.mubr.bf16.mxu0 0
      %3340 = vmatmul.mubr.bf16.gmra.mxu0 %v3286
      %v3341 = vpop.f32.mrf.mxu0
      %v3342 = vadd.f32 0.0, %v3341
      %v3343 = vpop.f32.mrf.mxu0
      %v3344 = vpop.f32.mrf.mxu0
      %v3345 = vadd.f32 0.0, %v3344
      %v3346 = vpop.f32.mrf.mxu0
      %3347 = vmatprep.mubr.bf16.mxu0 0
      %3348 = vmatmul.mubr.bf16.gmra.mxu0 %v3289
      %v3349 = vpop.f32.mrf.mxu0
      %v3350 = vadd.f32 0.0, %v3349
      %v3351 = vpop.f32.mrf.mxu0
      %v3352 = vpop.f32.mrf.mxu0
      %v3353 = vadd.f32 0.0, %v3352
      %v3354 = vpop.f32.mrf.mxu0
      %3355 = vdwg.mxu0
      %3356 = vrot.lane.b32.xlu0 %v1135, 56
      %v3357 = vpop.permute.xlu0 %3356
      %3358 = vrot.lane.b32.xlu0 %v1136, 56
      %v3359 = vpop.permute.xlu0 %3358
      %3360 = vrot.lane.b32.xlu0 %v1137, 56
      %v3361 = vpop.permute.xlu0 %3360
      %3362 = vrot.lane.b32.xlu0 %v1138, 56
      %v3363 = vpop.permute.xlu0 %3362
      %v3369 = vsel %vm1544, %v3085, 0
      %v3372 = vsel %vm1544, %v3086, 0
      %v3375 = vsel %vm1544, %v3087, 0
      %v3378 = vsel %vm1544, %v3088, 0
      %3380 = vmatprep.subr.bf16.mxu0 0
      %3381 = vmatpush1.bf16.msra.mxu0 0
      %3382 = vmatprep.subr.bf16.mxu0 0
      %3383 = vmatpush1.bf16.msra.mxu0 0
      %3384 = vmatprep.subr.bf16.mxu0 0
      %3385 = vmatpush1.bf16.msra.mxu0 0
      %3386 = vmatprep.subr.bf16.mxu0 0
      %3387 = vmatpush1.bf16.msra.mxu0 0
      %3388 = vmatprep.subr.bf16.mxu0 0
      %3389 = vmatpush1.bf16.msra.mxu0 %v3363
      %3390 = vmatprep.subr.bf16.mxu0 0
      %3391 = vmatpush1.bf16.msra.mxu0 %v3361
      %3392 = vmatprep.subr.bf16.mxu0 0
      %3393 = vmatpush1.bf16.msra.mxu0 %v3359
      %3394 = vmatprep.subr.bf16.mxu0 0
      %3395 = vmatpush1.bf16.msra.mxu0 %v3357
      %3396 = vmatprep.subr.bf16.mxu0 0
      %3397 = vmatpush2.bf16.msra.mxu0 0
      %3398 = vmatprep.subr.bf16.mxu0 0
      %3399 = vmatpush2.bf16.msra.mxu0 0
      %3400 = vmatprep.subr.bf16.mxu0 0
      %3401 = vmatpush2.bf16.msra.mxu0 0
      %3402 = vmatprep.subr.bf16.mxu0 0
      %3403 = vmatpush2.bf16.msra.mxu0 0
      %3404 = vmatprep.subr.bf16.mxu0 0
      %3405 = vmatpush2.bf16.msra.mxu0 0
      %3406 = vmatprep.subr.bf16.mxu0 0
      %3407 = vmatpush2.bf16.msra.mxu0 0
      %3408 = vmatprep.subr.bf16.mxu0 0
      %3409 = vmatpush2.bf16.msra.mxu0 0
      %3410 = vmatprep.subr.bf16.mxu0 0
      %3411 = vmatpush2.bf16.msra.mxu0 0
      %3412 = vmatprep.mubr.bf16.mxu0 0
      %3413 = vmatmul.mubr.bf16.gmra.mxu0 %v3369
      %v3414 = vpop.f32.mrf.mxu0
      %v3415 = vadd.f32 0.0, %v3414
      %v3416 = vpop.f32.mrf.mxu0
      %v3417 = vpop.f32.mrf.mxu0
      %v3418 = vadd.f32 0.0, %v3417
      %v3419 = vpop.f32.mrf.mxu0
      %3420 = vmatprep.mubr.bf16.mxu0 0
      %3421 = vmatmul.mubr.bf16.gmra.mxu0 %v3372
      %v3422 = vpop.f32.mrf.mxu0
      %v3423 = vadd.f32 0.0, %v3422
      %v3424 = vpop.f32.mrf.mxu0
      %v3425 = vpop.f32.mrf.mxu0
      %v3426 = vadd.f32 0.0, %v3425
      %v3427 = vpop.f32.mrf.mxu0
      %3428 = vmatprep.mubr.bf16.mxu0 0
      %3429 = vmatmul.mubr.bf16.gmra.mxu0 %v3375
      %v3430 = vpop.f32.mrf.mxu0
      %v3431 = vadd.f32 0.0, %v3430
      %v3432 = vpop.f32.mrf.mxu0
      %v3433 = vpop.f32.mrf.mxu0
      %v3434 = vadd.f32 0.0, %v3433
      %v3435 = vpop.f32.mrf.mxu0
      %3436 = vmatprep.mubr.bf16.mxu0 0
      %3437 = vmatmul.mubr.bf16.gmra.mxu0 %v3378
      %v3438 = vpop.f32.mrf.mxu0
      %v3439 = vadd.f32 0.0, %v3438
      %v3440 = vpop.f32.mrf.mxu0
      %v3441 = vpop.f32.mrf.mxu0
      %v3442 = vadd.f32 0.0, %v3441
      %v3443 = vpop.f32.mrf.mxu0
      %3444 = vdwg.mxu0
      %3445 = vrot.lane.b32.xlu0 %v1009, 112
      %v3446 = vpop.permute.xlu0 %3445
      %3447 = vrot.lane.b32.xlu0 %v1010, 112
      %v3448 = vpop.permute.xlu0 %3447
      %3449 = vrot.lane.b32.xlu0 %v1011, 112
      %v3450 = vpop.permute.xlu0 %3449
      %3451 = vrot.lane.b32.xlu0 %v1012, 112
      %v3452 = vpop.permute.xlu0 %3451
      %3453 = vrot.lane.b32.xlu0 %v1066, 80
      %v3454 = vpop.permute.xlu0 %3453
      %3455 = vrot.lane.b32.xlu0 %v1067, 80
      %v3456 = vpop.permute.xlu0 %3455
      %3457 = vrot.lane.b32.xlu0 %v1068, 80
      %v3458 = vpop.permute.xlu0 %3457
      %3459 = vrot.lane.b32.xlu0 %v1069, 80
      %v3460 = vpop.permute.xlu0 %3459
      %v3462 = vsel %vm1151, %v3446, 0
      %v3465 = vsel %vm1151, %v3448, 0
      %v3468 = vsel %vm1151, %v3450, 0
      %v3471 = vsel %vm1151, %v3452, 0
      %v3474 = vsel %vm1151, %v3454, 0
      %v3477 = vsel %vm1151, %v3456, 0
      %v3480 = vsel %vm1151, %v3458, 0
      %v3483 = vsel %vm1151, %v3460, 0
      %3485 = vmatprep.subr.bf16.mxu0 0
      %3486 = vmatpush1.bf16.xpose.msra.mxu0 0
      %3487 = vmatprep.subr.bf16.mxu0 0
      %3488 = vmatpush1.bf16.xpose.msra.mxu0 0
      %3489 = vmatprep.subr.bf16.mxu0 0
      %3490 = vmatpush1.bf16.xpose.msra.mxu0 0
      %3491 = vmatprep.subr.bf16.mxu0 0
      %3492 = vmatpush1.bf16.xpose.msra.mxu0 0
      %3493 = vmatprep.subr.bf16.mxu0 0
      %3494 = vmatpush1.bf16.xpose.msra.mxu0 %v3483
      %3495 = vmatprep.subr.bf16.mxu0 0
      %3496 = vmatpush1.bf16.xpose.msra.mxu0 %v3480
      %3497 = vmatprep.subr.bf16.mxu0 0
      %3498 = vmatpush1.bf16.xpose.msra.mxu0 %v3477
      %3499 = vmatprep.subr.bf16.mxu0 0
      %3500 = vmatpush1.bf16.xpose.msra.mxu0 %v3474
      %3501 = vmatprep.subr.bf16.mxu0 0
      %3502 = vmatpush2.bf16.xpose.msra.mxu0 0
      %3503 = vmatprep.subr.bf16.mxu0 0
      %3504 = vmatpush2.bf16.xpose.msra.mxu0 0
      %3505 = vmatprep.subr.bf16.mxu0 0
      %3506 = vmatpush2.bf16.xpose.msra.mxu0 0
      %3507 = vmatprep.subr.bf16.mxu0 0
      %3508 = vmatpush2.bf16.xpose.msra.mxu0 0
      %3509 = vmatprep.subr.bf16.mxu0 0
      %3510 = vmatpush2.bf16.xpose.msra.mxu0 0
      %3511 = vmatprep.subr.bf16.mxu0 0
      %3512 = vmatpush2.bf16.xpose.msra.mxu0 0
      %3513 = vmatprep.subr.bf16.mxu0 0
      %3514 = vmatpush2.bf16.xpose.msra.mxu0 0
      %3515 = vmatprep.subr.bf16.mxu0 0
      %3516 = vmatpush2.bf16.xpose.msra.mxu0 0
      %3517 = vmatprep.mubr.bf16.mxu0 0
      %3518 = vmatmul.mubr.bf16.gmra.mxu0 %v3462
      %v3519 = vpop.f32.mrf.mxu0
      %v3520 = vadd.f32 0.0, %v3519
      %v3521 = vpop.f32.mrf.mxu0
      %v3522 = vpop.f32.mrf.mxu0
      %v3523 = vadd.f32 0.0, %v3522
      %v3524 = vpop.f32.mrf.mxu0
      %3525 = vmatprep.mubr.bf16.mxu0 0
      %3526 = vmatmul.mubr.bf16.gmra.mxu0 %v3465
      %v3527 = vpop.f32.mrf.mxu0
      %v3528 = vadd.f32 0.0, %v3527
      %v3529 = vpop.f32.mrf.mxu0
      %v3530 = vpop.f32.mrf.mxu0
      %v3531 = vadd.f32 0.0, %v3530
      %v3532 = vpop.f32.mrf.mxu0
      %3533 = vmatprep.mubr.bf16.mxu0 0
      %3534 = vmatmul.mubr.bf16.gmra.mxu0 %v3468
      %v3535 = vpop.f32.mrf.mxu0
      %v3536 = vadd.f32 0.0, %v3535
      %v3537 = vpop.f32.mrf.mxu0
      %v3538 = vpop.f32.mrf.mxu0
      %v3539 = vadd.f32 0.0, %v3538
      %v3540 = vpop.f32.mrf.mxu0
      %3541 = vmatprep.mubr.bf16.mxu0 0
      %3542 = vmatmul.mubr.bf16.gmra.mxu0 %v3471
      %v3543 = vpop.f32.mrf.mxu0
      %v3544 = vadd.f32 0.0, %v3543
      %v3545 = vpop.f32.mrf.mxu0
      %v3546 = vpop.f32.mrf.mxu0
      %v3547 = vadd.f32 0.0, %v3546
      %v3548 = vpop.f32.mrf.mxu0
      %3549 = vdwg.mxu0
      %3550 = vrot.lane.b32.xlu0 %v1013, 112
      %v3551 = vpop.permute.xlu0 %3550
      %3552 = vrot.lane.b32.xlu0 %v1014, 112
      %v3553 = vpop.permute.xlu0 %3552
      %3554 = vrot.lane.b32.xlu0 %v1015, 112
      %v3555 = vpop.permute.xlu0 %3554
      %3556 = vrot.lane.b32.xlu0 %v1016, 112
      %v3557 = vpop.permute.xlu0 %3556
      %3558 = vrot.lane.b32.xlu0 %v1070, 80
      %v3559 = vpop.permute.xlu0 %3558
      %3560 = vrot.lane.b32.xlu0 %v1071, 80
      %v3561 = vpop.permute.xlu0 %3560
      %3562 = vrot.lane.b32.xlu0 %v1072, 80
      %v3563 = vpop.permute.xlu0 %3562
      %3564 = vrot.lane.b32.xlu0 %v1073, 80
      %v3565 = vpop.permute.xlu0 %3564
      %v3567 = vsel %vm1151, %v3551, 0
      %v3570 = vsel %vm1151, %v3553, 0
      %v3573 = vsel %vm1151, %v3555, 0
      %v3576 = vsel %vm1151, %v3557, 0
      %v3579 = vsel %vm1151, %v3559, 0
      %v3582 = vsel %vm1151, %v3561, 0
      %v3585 = vsel %vm1151, %v3563, 0
      %v3588 = vsel %vm1151, %v3565, 0
      %3590 = vmatprep.subr.bf16.mxu0 0
      %3591 = vmatpush1.bf16.xpose.msra.mxu0 0
      %3592 = vmatprep.subr.bf16.mxu0 0
      %3593 = vmatpush1.bf16.xpose.msra.mxu0 0
      %3594 = vmatprep.subr.bf16.mxu0 0
      %3595 = vmatpush1.bf16.xpose.msra.mxu0 0
      %3596 = vmatprep.subr.bf16.mxu0 0
      %3597 = vmatpush1.bf16.xpose.msra.mxu0 0
      %3598 = vmatprep.subr.bf16.mxu0 0
      %3599 = vmatpush1.bf16.xpose.msra.mxu0 %v3588
      %3600 = vmatprep.subr.bf16.mxu0 0
      %3601 = vmatpush1.bf16.xpose.msra.mxu0 %v3585
      %3602 = vmatprep.subr.bf16.mxu0 0
      %3603 = vmatpush1.bf16.xpose.msra.mxu0 %v3582
      %3604 = vmatprep.subr.bf16.mxu0 0
      %3605 = vmatpush1.bf16.xpose.msra.mxu0 %v3579
      %3606 = vmatprep.subr.bf16.mxu0 0
      %3607 = vmatpush2.bf16.xpose.msra.mxu0 0
      %3608 = vmatprep.subr.bf16.mxu0 0
      %3609 = vmatpush2.bf16.xpose.msra.mxu0 0
      %3610 = vmatprep.subr.bf16.mxu0 0
      %3611 = vmatpush2.bf16.xpose.msra.mxu0 0
      %3612 = vmatprep.subr.bf16.mxu0 0
      %3613 = vmatpush2.bf16.xpose.msra.mxu0 0
      %3614 = vmatprep.subr.bf16.mxu0 0
      %3615 = vmatpush2.bf16.xpose.msra.mxu0 0
      %3616 = vmatprep.subr.bf16.mxu0 0
      %3617 = vmatpush2.bf16.xpose.msra.mxu0 0
      %3618 = vmatprep.subr.bf16.mxu0 0
      %3619 = vmatpush2.bf16.xpose.msra.mxu0 0
      %3620 = vmatprep.subr.bf16.mxu0 0
      %3621 = vmatpush2.bf16.xpose.msra.mxu0 0
      %3622 = vmatprep.mubr.bf16.mxu0 0
      %3623 = vmatmul.mubr.bf16.gmra.mxu0 %v3567
      %v3624 = vpop.f32.mrf.mxu0
      %v3625 = vadd.f32 0.0, %v3624
      %v3626 = vpop.f32.mrf.mxu0
      %v3627 = vpop.f32.mrf.mxu0
      %v3628 = vadd.f32 0.0, %v3627
      %v3629 = vpop.f32.mrf.mxu0
      %3630 = vmatprep.mubr.bf16.mxu0 0
      %3631 = vmatmul.mubr.bf16.gmra.mxu0 %v3570
      %v3632 = vpop.f32.mrf.mxu0
      %v3633 = vadd.f32 0.0, %v3632
      %v3634 = vpop.f32.mrf.mxu0
      %v3635 = vpop.f32.mrf.mxu0
      %v3636 = vadd.f32 0.0, %v3635
      %v3637 = vpop.f32.mrf.mxu0
      %3638 = vmatprep.mubr.bf16.mxu0 0
      %3639 = vmatmul.mubr.bf16.gmra.mxu0 %v3573
      %v3640 = vpop.f32.mrf.mxu0
      %v3641 = vadd.f32 0.0, %v3640
      %v3642 = vpop.f32.mrf.mxu0
      %v3643 = vpop.f32.mrf.mxu0
      %v3644 = vadd.f32 0.0, %v3643
      %v3645 = vpop.f32.mrf.mxu0
      %3646 = vmatprep.mubr.bf16.mxu0 0
      %3647 = vmatmul.mubr.bf16.gmra.mxu0 %v3576
      %v3648 = vpop.f32.mrf.mxu0
      %v3649 = vadd.f32 0.0, %v3648
      %v3650 = vpop.f32.mrf.mxu0
      %v3651 = vpop.f32.mrf.mxu0
      %v3652 = vadd.f32 0.0, %v3651
      %v3653 = vpop.f32.mrf.mxu0
      %3654 = vdwg.mxu0
      %3655 = vrot.lane.b32.xlu0 %v1017, 112
      %v3656 = vpop.permute.xlu0 %3655
      %3657 = vrot.lane.b32.xlu0 %v1018, 112
      %v3658 = vpop.permute.xlu0 %3657
      %3659 = vrot.lane.b32.xlu0 %v1019, 112
      %v3660 = vpop.permute.xlu0 %3659
      %3661 = vrot.lane.b32.xlu0 %v1020, 112
      %v3662 = vpop.permute.xlu0 %3661
      %3663 = vrot.lane.b32.xlu0 %v1074, 80
      %v3664 = vpop.permute.xlu0 %3663
      %3665 = vrot.lane.b32.xlu0 %v1075, 80
      %v3666 = vpop.permute.xlu0 %3665
      %3667 = vrot.lane.b32.xlu0 %v1076, 80
      %v3668 = vpop.permute.xlu0 %3667
      %3669 = vrot.lane.b32.xlu0 %v1077, 80
      %v3670 = vpop.permute.xlu0 %3669
      %v3672 = vsel %vm1151, %v3656, 0
      %v3675 = vsel %vm1151, %v3658, 0
      %v3678 = vsel %vm1151, %v3660, 0
      %v3681 = vsel %vm1151, %v3662, 0
      %v3684 = vsel %vm1151, %v3664, 0
      %v3687 = vsel %vm1151, %v3666, 0
      %v3690 = vsel %vm1151, %v3668, 0
      %v3693 = vsel %vm1151, %v3670, 0
      %3695 = vmatprep.subr.bf16.mxu0 0
      %3696 = vmatpush1.bf16.xpose.msra.mxu0 0
      %3697 = vmatprep.subr.bf16.mxu0 0
      %3698 = vmatpush1.bf16.xpose.msra.mxu0 0
      %3699 = vmatprep.subr.bf16.mxu0 0
      %3700 = vmatpush1.bf16.xpose.msra.mxu0 0
      %3701 = vmatprep.subr.bf16.mxu0 0
      %3702 = vmatpush1.bf16.xpose.msra.mxu0 0
      %3703 = vmatprep.subr.bf16.mxu0 0
      %3704 = vmatpush1.bf16.xpose.msra.mxu0 %v3693
      %3705 = vmatprep.subr.bf16.mxu0 0
      %3706 = vmatpush1.bf16.xpose.msra.mxu0 %v3690
      %3707 = vmatprep.subr.bf16.mxu0 0
      %3708 = vmatpush1.bf16.xpose.msra.mxu0 %v3687
      %3709 = vmatprep.subr.bf16.mxu0 0
      %3710 = vmatpush1.bf16.xpose.msra.mxu0 %v3684
      %3711 = vmatprep.subr.bf16.mxu0 0
      %3712 = vmatpush2.bf16.xpose.msra.mxu0 0
      %3713 = vmatprep.subr.bf16.mxu0 0
      %3714 = vmatpush2.bf16.xpose.msra.mxu0 0
      %3715 = vmatprep.subr.bf16.mxu0 0
      %3716 = vmatpush2.bf16.xpose.msra.mxu0 0
      %3717 = vmatprep.subr.bf16.mxu0 0
      %3718 = vmatpush2.bf16.xpose.msra.mxu0 0
      %3719 = vmatprep.subr.bf16.mxu0 0
      %3720 = vmatpush2.bf16.xpose.msra.mxu0 0
      %3721 = vmatprep.subr.bf16.mxu0 0
      %3722 = vmatpush2.bf16.xpose.msra.mxu0 0
      %3723 = vmatprep.subr.bf16.mxu0 0
      %3724 = vmatpush2.bf16.xpose.msra.mxu0 0
      %3725 = vmatprep.subr.bf16.mxu0 0
      %3726 = vmatpush2.bf16.xpose.msra.mxu0 0
      %3727 = vmatprep.mubr.bf16.mxu0 0
      %3728 = vmatmul.mubr.bf16.gmra.mxu0 %v3672
      %v3729 = vpop.f32.mrf.mxu0
      %v3730 = vadd.f32 0.0, %v3729
      %v3731 = vpop.f32.mrf.mxu0
      %v3732 = vpop.f32.mrf.mxu0
      %v3733 = vadd.f32 0.0, %v3732
      %v3734 = vpop.f32.mrf.mxu0
      %3735 = vmatprep.mubr.bf16.mxu0 0
      %3736 = vmatmul.mubr.bf16.gmra.mxu0 %v3675
      %v3737 = vpop.f32.mrf.mxu0
      %v3738 = vadd.f32 0.0, %v3737
      %v3739 = vpop.f32.mrf.mxu0
      %v3740 = vpop.f32.mrf.mxu0
      %v3741 = vadd.f32 0.0, %v3740
      %v3742 = vpop.f32.mrf.mxu0
      %3743 = vmatprep.mubr.bf16.mxu0 0
      %3744 = vmatmul.mubr.bf16.gmra.mxu0 %v3678
      %v3745 = vpop.f32.mrf.mxu0
      %v3746 = vadd.f32 0.0, %v3745
      %v3747 = vpop.f32.mrf.mxu0
      %v3748 = vpop.f32.mrf.mxu0
      %v3749 = vadd.f32 0.0, %v3748
      %v3750 = vpop.f32.mrf.mxu0
      %3751 = vmatprep.mubr.bf16.mxu0 0
      %3752 = vmatmul.mubr.bf16.gmra.mxu0 %v3681
      %v3753 = vpop.f32.mrf.mxu0
      %v3754 = vadd.f32 0.0, %v3753
      %v3755 = vpop.f32.mrf.mxu0
      %v3756 = vpop.f32.mrf.mxu0
      %v3757 = vadd.f32 0.0, %v3756
      %v3758 = vpop.f32.mrf.mxu0
      %3759 = vdwg.mxu0
      %3760 = vrot.lane.b32.xlu0 %v1021, 112
      %v3761 = vpop.permute.xlu0 %3760
      %3762 = vrot.lane.b32.xlu0 %v1022, 112
      %v3763 = vpop.permute.xlu0 %3762
      %3764 = vrot.lane.b32.xlu0 %v1023, 112
      %v3765 = vpop.permute.xlu0 %3764
      %3766 = vrot.lane.b32.xlu0 %v1024, 112
      %v3767 = vpop.permute.xlu0 %3766
      %3768 = vrot.lane.b32.xlu0 %v1078, 80
      %v3769 = vpop.permute.xlu0 %3768
      %3770 = vrot.lane.b32.xlu0 %v1079, 80
      %v3771 = vpop.permute.xlu0 %3770
      %3772 = vrot.lane.b32.xlu0 %v1080, 80
      %v3773 = vpop.permute.xlu0 %3772
      %3774 = vrot.lane.b32.xlu0 %v1081, 80
      %v3775 = vpop.permute.xlu0 %3774
      %v3777 = vsel %vm1151, %v3761, 0
      %v3780 = vsel %vm1151, %v3763, 0
      %v3783 = vsel %vm1151, %v3765, 0
      %v3786 = vsel %vm1151, %v3767, 0
      %v3789 = vsel %vm1151, %v3769, 0
      %v3792 = vsel %vm1151, %v3771, 0
      %v3795 = vsel %vm1151, %v3773, 0
      %v3798 = vsel %vm1151, %v3775, 0
      %3800 = vmatprep.subr.bf16.mxu0 0
      %3801 = vmatpush1.bf16.xpose.msra.mxu0 0
      %3802 = vmatprep.subr.bf16.mxu0 0
      %3803 = vmatpush1.bf16.xpose.msra.mxu0 0
      %3804 = vmatprep.subr.bf16.mxu0 0
      %3805 = vmatpush1.bf16.xpose.msra.mxu0 0
      %3806 = vmatprep.subr.bf16.mxu0 0
      %3807 = vmatpush1.bf16.xpose.msra.mxu0 0
      %3808 = vmatprep.subr.bf16.mxu0 0
      %3809 = vmatpush1.bf16.xpose.msra.mxu0 %v3798
      %3810 = vmatprep.subr.bf16.mxu0 0
      %3811 = vmatpush1.bf16.xpose.msra.mxu0 %v3795
      %3812 = vmatprep.subr.bf16.mxu0 0
      %3813 = vmatpush1.bf16.xpose.msra.mxu0 %v3792
      %3814 = vmatprep.subr.bf16.mxu0 0
      %3815 = vmatpush1.bf16.xpose.msra.mxu0 %v3789
      %3816 = vmatprep.subr.bf16.mxu0 0
      %3817 = vmatpush2.bf16.xpose.msra.mxu0 0
      %3818 = vmatprep.subr.bf16.mxu0 0
      %3819 = vmatpush2.bf16.xpose.msra.mxu0 0
      %3820 = vmatprep.subr.bf16.mxu0 0
      %3821 = vmatpush2.bf16.xpose.msra.mxu0 0
      %3822 = vmatprep.subr.bf16.mxu0 0
      %3823 = vmatpush2.bf16.xpose.msra.mxu0 0
      %3824 = vmatprep.subr.bf16.mxu0 0
      %3825 = vmatpush2.bf16.xpose.msra.mxu0 0
      %3826 = vmatprep.subr.bf16.mxu0 0
      %3827 = vmatpush2.bf16.xpose.msra.mxu0 0
      %3828 = vmatprep.subr.bf16.mxu0 0
      %3829 = vmatpush2.bf16.xpose.msra.mxu0 0
      %3830 = vmatprep.subr.bf16.mxu0 0
      %3831 = vmatpush2.bf16.xpose.msra.mxu0 0
      %3832 = vmatprep.mubr.bf16.mxu0 0
      %3833 = vmatmul.mubr.bf16.gmra.mxu0 %v3777
      %v3834 = vpop.f32.mrf.mxu0
      %v3835 = vadd.f32 0.0, %v3834
      %v3836 = vpop.f32.mrf.mxu0
      %v3837 = vpop.f32.mrf.mxu0
      %v3838 = vadd.f32 0.0, %v3837
      %v3839 = vpop.f32.mrf.mxu0
      %3840 = vmatprep.mubr.bf16.mxu0 0
      %3841 = vmatmul.mubr.bf16.gmra.mxu0 %v3780
      %v3842 = vpop.f32.mrf.mxu0
      %v3843 = vadd.f32 0.0, %v3842
      %v3844 = vpop.f32.mrf.mxu0
      %v3845 = vpop.f32.mrf.mxu0
      %v3846 = vadd.f32 0.0, %v3845
      %v3847 = vpop.f32.mrf.mxu0
      %3848 = vmatprep.mubr.bf16.mxu0 0
      %3849 = vmatmul.mubr.bf16.gmra.mxu0 %v3783
      %v3850 = vpop.f32.mrf.mxu0
      %v3851 = vadd.f32 0.0, %v3850
      %v3852 = vpop.f32.mrf.mxu0
      %v3853 = vpop.f32.mrf.mxu0
      %v3854 = vadd.f32 0.0, %v3853
      %v3855 = vpop.f32.mrf.mxu0
      %3856 = vmatprep.mubr.bf16.mxu0 0
      %3857 = vmatmul.mubr.bf16.gmra.mxu0 %v3786
      %v3858 = vpop.f32.mrf.mxu0
      %v3859 = vadd.f32 0.0, %v3858
      %v3860 = vpop.f32.mrf.mxu0
      %v3861 = vpop.f32.mrf.mxu0
      %v3862 = vadd.f32 0.0, %v3861
      %v3863 = vpop.f32.mrf.mxu0
      %3864 = vdwg.mxu0
      %v3865 = vsel %vm1544, %v3520, -inf
      %3866 = vmax.xlane.f32.xlu0 %v3865
      %v3867 = vpop.xlane.xlu0 %3866
      %v3868 = vsel %vm1544, %v3523, -inf
      %3869 = vmax.xlane.f32.xlu0 %v3868
      %v3870 = vpop.xlane.xlu0 %3869
      %v3871 = vsel %vm1544, %v3528, -inf
      %3872 = vmax.xlane.f32.xlu0 %v3871
      %v3873 = vpop.xlane.xlu0 %3872
      %v3874 = vsel %vm1544, %v3531, -inf
      %3875 = vmax.xlane.f32.xlu0 %v3874
      %v3876 = vpop.xlane.xlu0 %3875
      %v3877 = vsel %vm1544, %v3536, -inf
      %3878 = vmax.xlane.f32.xlu0 %v3877
      %v3879 = vpop.xlane.xlu0 %3878
      %v3880 = vsel %vm1544, %v3539, -inf
      %3881 = vmax.xlane.f32.xlu0 %v3880
      %v3882 = vpop.xlane.xlu0 %3881
      %v3883 = vsel %vm1544, %v3544, -inf
      %3884 = vmax.xlane.f32.xlu0 %v3883
      %v3885 = vpop.xlane.xlu0 %3884
      %v3886 = vsel %vm1544, %v3547, -inf
      %3887 = vmax.xlane.f32.xlu0 %v3886
      %v3888 = vpop.xlane.xlu0 %3887
      %v3889 = vsel %vm1544, %v3625, -inf
      %3890 = vmax.xlane.f32.xlu0 %v3889
      %v3891 = vpop.xlane.xlu0 %3890
      %v3892 = vsel %vm1544, %v3628, -inf
      %3893 = vmax.xlane.f32.xlu0 %v3892
      %v3894 = vpop.xlane.xlu0 %3893
      %v3895 = vsel %vm1544, %v3633, -inf
      %3896 = vmax.xlane.f32.xlu0 %v3895
      %v3897 = vpop.xlane.xlu0 %3896
      %v3898 = vsel %vm1544, %v3636, -inf
      %3899 = vmax.xlane.f32.xlu0 %v3898
      %v3900 = vpop.xlane.xlu0 %3899
      %v3901 = vsel %vm1544, %v3641, -inf
      %3902 = vmax.xlane.f32.xlu0 %v3901
      %v3903 = vpop.xlane.xlu0 %3902
      %v3904 = vsel %vm1544, %v3644, -inf
      %3905 = vmax.xlane.f32.xlu0 %v3904
      %v3906 = vpop.xlane.xlu0 %3905
      %v3907 = vsel %vm1544, %v3649, -inf
      %3908 = vmax.xlane.f32.xlu0 %v3907
      %v3909 = vpop.xlane.xlu0 %3908
      %v3910 = vsel %vm1544, %v3652, -inf
      %3911 = vmax.xlane.f32.xlu0 %v3910
      %v3912 = vpop.xlane.xlu0 %3911
      %v3913 = vsel %vm1544, %v3730, -inf
      %3914 = vmax.xlane.f32.xlu0 %v3913
      %v3915 = vpop.xlane.xlu0 %3914
      %v3916 = vsel %vm1544, %v3733, -inf
      %3917 = vmax.xlane.f32.xlu0 %v3916
      %v3918 = vpop.xlane.xlu0 %3917
      %v3919 = vsel %vm1544, %v3738, -inf
      %3920 = vmax.xlane.f32.xlu0 %v3919
      %v3921 = vpop.xlane.xlu0 %3920
      %v3922 = vsel %vm1544, %v3741, -inf
      %3923 = vmax.xlane.f32.xlu0 %v3922
      %v3924 = vpop.xlane.xlu0 %3923
      %v3925 = vsel %vm1544, %v3746, -inf
      %3926 = vmax.xlane.f32.xlu0 %v3925
      %v3927 = vpop.xlane.xlu0 %3926
      %v3928 = vsel %vm1544, %v3749, -inf
      %3929 = vmax.xlane.f32.xlu0 %v3928
      %v3930 = vpop.xlane.xlu0 %3929
      %v3931 = vsel %vm1544, %v3754, -inf
      %3932 = vmax.xlane.f32.xlu0 %v3931
      %v3933 = vpop.xlane.xlu0 %3932
      %v3934 = vsel %vm1544, %v3757, -inf
      %3935 = vmax.xlane.f32.xlu0 %v3934
      %v3936 = vpop.xlane.xlu0 %3935
      %v3937 = vsel %vm1544, %v3835, -inf
      %3938 = vmax.xlane.f32.xlu0 %v3937
      %v3939 = vpop.xlane.xlu0 %3938
      %v3940 = vsel %vm1544, %v3838, -inf
      %3941 = vmax.xlane.f32.xlu0 %v3940
      %v3942 = vpop.xlane.xlu0 %3941
      %v3943 = vsel %vm1544, %v3843, -inf
      %3944 = vmax.xlane.f32.xlu0 %v3943
      %v3945 = vpop.xlane.xlu0 %3944
      %v3946 = vsel %vm1544, %v3846, -inf
      %3947 = vmax.xlane.f32.xlu0 %v3946
      %v3948 = vpop.xlane.xlu0 %3947
      %v3949 = vsel %vm1544, %v3851, -inf
      %3950 = vmax.xlane.f32.xlu0 %v3949
      %v3951 = vpop.xlane.xlu0 %3950
      %v3952 = vsel %vm1544, %v3854, -inf
      %3953 = vmax.xlane.f32.xlu0 %v3952
      %v3954 = vpop.xlane.xlu0 %3953
      %v3955 = vsel %vm1544, %v3859, -inf
      %3956 = vmax.xlane.f32.xlu0 %v3955
      %v3957 = vpop.xlane.xlu0 %3956
      %v3958 = vsel %vm1544, %v3862, -inf
      %3959 = vmax.xlane.f32.xlu0 %v3958
      %v3960 = vpop.xlane.xlu0 %3959
      %v3961 = vsub.f32 %v3520, %v3867
      %v3962 = vsub.f32 %v3523, %v3870
      %v3963 = vsub.f32 %v3528, %v3873
      %v3964 = vsub.f32 %v3531, %v3876
      %v3965 = vsub.f32 %v3536, %v3879
      %v3966 = vsub.f32 %v3539, %v3882
      %v3967 = vsub.f32 %v3544, %v3885
      %v3968 = vsub.f32 %v3547, %v3888
      %v3969 = vsub.f32 %v3625, %v3891
      %v3970 = vsub.f32 %v3628, %v3894
      %v3971 = vsub.f32 %v3633, %v3897
      %v3972 = vsub.f32 %v3636, %v3900
      %v3973 = vsub.f32 %v3641, %v3903
      %v3974 = vsub.f32 %v3644, %v3906
      %v3975 = vsub.f32 %v3649, %v3909
      %v3976 = vsub.f32 %v3652, %v3912
      %v3977 = vsub.f32 %v3730, %v3915
      %v3978 = vsub.f32 %v3733, %v3918
      %v3979 = vsub.f32 %v3738, %v3921
      %v3980 = vsub.f32 %v3741, %v3924
      %v3981 = vsub.f32 %v3746, %v3927
      %v3982 = vsub.f32 %v3749, %v3930
      %v3983 = vsub.f32 %v3754, %v3933
      %v3984 = vsub.f32 %v3757, %v3936
      %v3985 = vsub.f32 %v3835, %v3939
      %v3986 = vsub.f32 %v3838, %v3942
      %v3987 = vsub.f32 %v3843, %v3945
      %v3988 = vsub.f32 %v3846, %v3948
      %v3989 = vsub.f32 %v3851, %v3951
      %v3990 = vsub.f32 %v3854, %v3954
      %v3991 = vsub.f32 %v3859, %v3957
      %v3992 = vsub.f32 %v3862, %v3960
      %v3993 = vmul.f32 %v3961, 1.442695
      %v3994 = vpow.pop %v3993
      %v3995 = vmul.f32 %v3962, 1.442695
      %v3996 = vpow.pop %v3995
      %v3997 = vmul.f32 %v3963, 1.442695
      %v3998 = vpow.pop %v3997
      %v3999 = vmul.f32 %v3964, 1.442695
      %v4000 = vpow.pop %v3999
      %v4001 = vmul.f32 %v3965, 1.442695
      %v4002 = vpow.pop %v4001
      %v4003 = vmul.f32 %v3966, 1.442695
      %v4004 = vpow.pop %v4003
      %v4005 = vmul.f32 %v3967, 1.442695
      %v4006 = vpow.pop %v4005
      %v4007 = vmul.f32 %v3968, 1.442695
      %v4008 = vpow.pop %v4007
      %v4009 = vmul.f32 %v3969, 1.442695
      %v4010 = vpow.pop %v4009
      %v4011 = vmul.f32 %v3970, 1.442695
      %v4012 = vpow.pop %v4011
      %v4013 = vmul.f32 %v3971, 1.442695
      %v4014 = vpow.pop %v4013
      %v4015 = vmul.f32 %v3972, 1.442695
      %v4016 = vpow.pop %v4015
      %v4017 = vmul.f32 %v3973, 1.442695
      %v4018 = vpow.pop %v4017
      %v4019 = vmul.f32 %v3974, 1.442695
      %v4020 = vpow.pop %v4019
      %v4021 = vmul.f32 %v3975, 1.442695
      %v4022 = vpow.pop %v4021
      %v4023 = vmul.f32 %v3976, 1.442695
      %v4024 = vpow.pop %v4023
      %v4025 = vmul.f32 %v3977, 1.442695
      %v4026 = vpow.pop %v4025
      %v4027 = vmul.f32 %v3978, 1.442695
      %v4028 = vpow.pop %v4027
      %v4029 = vmul.f32 %v3979, 1.442695
      %v4030 = vpow.pop %v4029
      %v4031 = vmul.f32 %v3980, 1.442695
      %v4032 = vpow.pop %v4031
      %v4033 = vmul.f32 %v3981, 1.442695
      %v4034 = vpow.pop %v4033
      %v4035 = vmul.f32 %v3982, 1.442695
      %v4036 = vpow.pop %v4035
      %v4037 = vmul.f32 %v3983, 1.442695
      %v4038 = vpow.pop %v4037
      %v4039 = vmul.f32 %v3984, 1.442695
      %v4040 = vpow.pop %v4039
      %v4041 = vmul.f32 %v3985, 1.442695
      %v4042 = vpow.pop %v4041
      %v4043 = vmul.f32 %v3986, 1.442695
      %v4044 = vpow.pop %v4043
      %v4045 = vmul.f32 %v3987, 1.442695
      %v4046 = vpow.pop %v4045
      %v4047 = vmul.f32 %v3988, 1.442695
      %v4048 = vpow.pop %v4047
      %v4049 = vmul.f32 %v3989, 1.442695
      %v4050 = vpow.pop %v4049
      %v4051 = vmul.f32 %v3990, 1.442695
      %v4052 = vpow.pop %v4051
      %v4053 = vmul.f32 %v3991, 1.442695
      %v4054 = vpow.pop %v4053
      %v4055 = vmul.f32 %v3992, 1.442695
      %v4056 = vpow.pop %v4055
      %v4057 = vsel %vm1544, %v3994, 0.0
      %4058 = vadd.xlane.f32.xlu0 %v4057
      %v4059 = vpop.xlane.xlu0 %4058
      %v4060 = vsel %vm1544, %v3996, 0.0
      %4061 = vadd.xlane.f32.xlu0 %v4060
      %v4062 = vpop.xlane.xlu0 %4061
      %v4063 = vsel %vm1544, %v3998, 0.0
      %4064 = vadd.xlane.f32.xlu0 %v4063
      %v4065 = vpop.xlane.xlu0 %4064
      %v4066 = vsel %vm1544, %v4000, 0.0
      %4067 = vadd.xlane.f32.xlu0 %v4066
      %v4068 = vpop.xlane.xlu0 %4067
      %v4069 = vsel %vm1544, %v4002, 0.0
      %4070 = vadd.xlane.f32.xlu0 %v4069
      %v4071 = vpop.xlane.xlu0 %4070
      %v4072 = vsel %vm1544, %v4004, 0.0
      %4073 = vadd.xlane.f32.xlu0 %v4072
      %v4074 = vpop.xlane.xlu0 %4073
      %v4075 = vsel %vm1544, %v4006, 0.0
      %4076 = vadd.xlane.f32.xlu0 %v4075
      %v4077 = vpop.xlane.xlu0 %4076
      %v4078 = vsel %vm1544, %v4008, 0.0
      %4079 = vadd.xlane.f32.xlu0 %v4078
      %v4080 = vpop.xlane.xlu0 %4079
      %v4081 = vsel %vm1544, %v4010, 0.0
      %4082 = vadd.xlane.f32.xlu0 %v4081
      %v4083 = vpop.xlane.xlu0 %4082
      %v4084 = vsel %vm1544, %v4012, 0.0
      %4085 = vadd.xlane.f32.xlu0 %v4084
      %v4086 = vpop.xlane.xlu0 %4085
      %v4087 = vsel %vm1544, %v4014, 0.0
      %4088 = vadd.xlane.f32.xlu0 %v4087
      %v4089 = vpop.xlane.xlu0 %4088
      %v4090 = vsel %vm1544, %v4016, 0.0
      %4091 = vadd.xlane.f32.xlu0 %v4090
      %v4092 = vpop.xlane.xlu0 %4091
      %v4093 = vsel %vm1544, %v4018, 0.0
      %4094 = vadd.xlane.f32.xlu0 %v4093
      %v4095 = vpop.xlane.xlu0 %4094
      %v4096 = vsel %vm1544, %v4020, 0.0
      %4097 = vadd.xlane.f32.xlu0 %v4096
      %v4098 = vpop.xlane.xlu0 %4097
      %v4099 = vsel %vm1544, %v4022, 0.0
      %4100 = vadd.xlane.f32.xlu0 %v4099
      %v4101 = vpop.xlane.xlu0 %4100
      %v4102 = vsel %vm1544, %v4024, 0.0
      %4103 = vadd.xlane.f32.xlu0 %v4102
      %v4104 = vpop.xlane.xlu0 %4103
      %v4105 = vsel %vm1544, %v4026, 0.0
      %4106 = vadd.xlane.f32.xlu0 %v4105
      %v4107 = vpop.xlane.xlu0 %4106
      %v4108 = vsel %vm1544, %v4028, 0.0
      %4109 = vadd.xlane.f32.xlu0 %v4108
      %v4110 = vpop.xlane.xlu0 %4109
      %v4111 = vsel %vm1544, %v4030, 0.0
      %4112 = vadd.xlane.f32.xlu0 %v4111
      %v4113 = vpop.xlane.xlu0 %4112
      %v4114 = vsel %vm1544, %v4032, 0.0
      %4115 = vadd.xlane.f32.xlu0 %v4114
      %v4116 = vpop.xlane.xlu0 %4115
      %v4117 = vsel %vm1544, %v4034, 0.0
      %4118 = vadd.xlane.f32.xlu0 %v4117
      %v4119 = vpop.xlane.xlu0 %4118
      %v4120 = vsel %vm1544, %v4036, 0.0
      %4121 = vadd.xlane.f32.xlu0 %v4120
      %v4122 = vpop.xlane.xlu0 %4121
      %v4123 = vsel %vm1544, %v4038, 0.0
      %4124 = vadd.xlane.f32.xlu0 %v4123
      %v4125 = vpop.xlane.xlu0 %4124
      %v4126 = vsel %vm1544, %v4040, 0.0
      %4127 = vadd.xlane.f32.xlu0 %v4126
      %v4128 = vpop.xlane.xlu0 %4127
      %v4129 = vsel %vm1544, %v4042, 0.0
      %4130 = vadd.xlane.f32.xlu0 %v4129
      %v4131 = vpop.xlane.xlu0 %4130
      %v4132 = vsel %vm1544, %v4044, 0.0
      %4133 = vadd.xlane.f32.xlu0 %v4132
      %v4134 = vpop.xlane.xlu0 %4133
      %v4135 = vsel %vm1544, %v4046, 0.0
      %4136 = vadd.xlane.f32.xlu0 %v4135
      %v4137 = vpop.xlane.xlu0 %4136
      %v4138 = vsel %vm1544, %v4048, 0.0
      %4139 = vadd.xlane.f32.xlu0 %v4138
      %v4140 = vpop.xlane.xlu0 %4139
      %v4141 = vsel %vm1544, %v4050, 0.0
      %4142 = vadd.xlane.f32.xlu0 %v4141
      %v4143 = vpop.xlane.xlu0 %4142
      %v4144 = vsel %vm1544, %v4052, 0.0
      %4145 = vadd.xlane.f32.xlu0 %v4144
      %v4146 = vpop.xlane.xlu0 %4145
      %v4147 = vsel %vm1544, %v4054, 0.0
      %4148 = vadd.xlane.f32.xlu0 %v4147
      %v4149 = vpop.xlane.xlu0 %4148
      %v4150 = vsel %vm1544, %v4056, 0.0
      %4151 = vadd.xlane.f32.xlu0 %v4150
      %v4152 = vpop.xlane.xlu0 %4151
      %v4153 = vrcp.pop %v4059
      %v4154 = vrcp.pop %v4062
      %v4155 = vrcp.pop %v4065
      %v4156 = vrcp.pop %v4068
      %v4157 = vrcp.pop %v4071
      %v4158 = vrcp.pop %v4074
      %v4159 = vrcp.pop %v4077
      %v4160 = vrcp.pop %v4080
      %v4161 = vrcp.pop %v4083
      %v4162 = vrcp.pop %v4086
      %v4163 = vrcp.pop %v4089
      %v4164 = vrcp.pop %v4092
      %v4165 = vrcp.pop %v4095
      %v4166 = vrcp.pop %v4098
      %v4167 = vrcp.pop %v4101
      %v4168 = vrcp.pop %v4104
      %v4169 = vrcp.pop %v4107
      %v4170 = vrcp.pop %v4110
      %v4171 = vrcp.pop %v4113
      %v4172 = vrcp.pop %v4116
      %v4173 = vrcp.pop %v4119
      %v4174 = vrcp.pop %v4122
      %v4175 = vrcp.pop %v4125
      %v4176 = vrcp.pop %v4128
      %v4177 = vrcp.pop %v4131
      %v4178 = vrcp.pop %v4134
      %v4179 = vrcp.pop %v4137
      %v4180 = vrcp.pop %v4140
      %v4181 = vrcp.pop %v4143
      %v4182 = vrcp.pop %v4146
      %v4183 = vrcp.pop %v4149
      %v4184 = vrcp.pop %v4152
      %v4185 = vmul.f32 %v3994, %v4153
      %v4186 = vmul.f32 %v3996, %v4154
      %v4187 = vmul.f32 %v3998, %v4155
      %v4188 = vmul.f32 %v4000, %v4156
      %v4189 = vmul.f32 %v4002, %v4157
      %v4190 = vmul.f32 %v4004, %v4158
      %v4191 = vmul.f32 %v4006, %v4159
      %v4192 = vmul.f32 %v4008, %v4160
      %v4193 = vmul.f32 %v4010, %v4161
      %v4194 = vmul.f32 %v4012, %v4162
      %v4195 = vmul.f32 %v4014, %v4163
      %v4196 = vmul.f32 %v4016, %v4164
      %v4197 = vmul.f32 %v4018, %v4165
      %v4198 = vmul.f32 %v4020, %v4166
      %v4199 = vmul.f32 %v4022, %v4167
      %v4200 = vmul.f32 %v4024, %v4168
      %v4201 = vmul.f32 %v4026, %v4169
      %v4202 = vmul.f32 %v4028, %v4170
      %v4203 = vmul.f32 %v4030, %v4171
      %v4204 = vmul.f32 %v4032, %v4172
      %v4205 = vmul.f32 %v4034, %v4173
      %v4206 = vmul.f32 %v4036, %v4174
      %v4207 = vmul.f32 %v4038, %v4175
      %v4208 = vmul.f32 %v4040, %v4176
      %v4209 = vmul.f32 %v4042, %v4177
      %v4210 = vmul.f32 %v4044, %v4178
      %v4211 = vmul.f32 %v4046, %v4179
      %v4212 = vmul.f32 %v4048, %v4180
      %v4213 = vmul.f32 %v4050, %v4181
      %v4214 = vmul.f32 %v4052, %v4182
      %v4215 = vmul.f32 %v4054, %v4183
      %v4216 = vmul.f32 %v4056, %v4184
      %v4217 = vpack.c.bf16 %v4186, %v4185
      %v4218 = vpack.c.bf16 %v4188, %v4187
      %v4219 = vpack.c.bf16 %v4190, %v4189
      %v4220 = vpack.c.bf16 %v4192, %v4191
      %v4221 = vpack.c.bf16 %v4194, %v4193
      %v4222 = vpack.c.bf16 %v4196, %v4195
      %v4223 = vpack.c.bf16 %v4198, %v4197
      %v4224 = vpack.c.bf16 %v4200, %v4199
      %v4225 = vpack.c.bf16 %v4202, %v4201
      %v4226 = vpack.c.bf16 %v4204, %v4203
      %v4227 = vpack.c.bf16 %v4206, %v4205
      %v4228 = vpack.c.bf16 %v4208, %v4207
      %v4229 = vpack.c.bf16 %v4210, %v4209
      %v4230 = vpack.c.bf16 %v4212, %v4211
      %v4231 = vpack.c.bf16 %v4214, %v4213
      %v4232 = vpack.c.bf16 %v4216, %v4215
      %4233 = vrot.lane.b32.xlu0 %v1123, 48
      %v4234 = vpop.permute.xlu0 %4233
      %4235 = vrot.lane.b32.xlu0 %v1124, 48
      %v4236 = vpop.permute.xlu0 %4235
      %4237 = vrot.lane.b32.xlu0 %v1125, 48
      %v4238 = vpop.permute.xlu0 %4237
      %4239 = vrot.lane.b32.xlu0 %v1126, 48
      %v4240 = vpop.permute.xlu0 %4239
      %v4246 = vsel %vm1544, %v4217, 0
      %v4249 = vsel %vm1544, %v4218, 0
      %v4252 = vsel %vm1544, %v4219, 0
      %v4255 = vsel %vm1544, %v4220, 0
      %4257 = vmatprep.subr.bf16.mxu0 0
      %4258 = vmatpush1.bf16.msra.mxu0 0
      %4259 = vmatprep.subr.bf16.mxu0 0
      %4260 = vmatpush1.bf16.msra.mxu0 0
      %4261 = vmatprep.subr.bf16.mxu0 0
      %4262 = vmatpush1.bf16.msra.mxu0 0
      %4263 = vmatprep.subr.bf16.mxu0 0
      %4264 = vmatpush1.bf16.msra.mxu0 0
      %4265 = vmatprep.subr.bf16.mxu0 0
      %4266 = vmatpush1.bf16.msra.mxu0 %v4240
      %4267 = vmatprep.subr.bf16.mxu0 0
      %4268 = vmatpush1.bf16.msra.mxu0 %v4238
      %4269 = vmatprep.subr.bf16.mxu0 0
      %4270 = vmatpush1.bf16.msra.mxu0 %v4236
      %4271 = vmatprep.subr.bf16.mxu0 0
      %4272 = vmatpush1.bf16.msra.mxu0 %v4234
      %4273 = vmatprep.subr.bf16.mxu0 0
      %4274 = vmatpush2.bf16.msra.mxu0 0
      %4275 = vmatprep.subr.bf16.mxu0 0
      %4276 = vmatpush2.bf16.msra.mxu0 0
      %4277 = vmatprep.subr.bf16.mxu0 0
      %4278 = vmatpush2.bf16.msra.mxu0 0
      %4279 = vmatprep.subr.bf16.mxu0 0
      %4280 = vmatpush2.bf16.msra.mxu0 0
      %4281 = vmatprep.subr.bf16.mxu0 0
      %4282 = vmatpush2.bf16.msra.mxu0 0
      %4283 = vmatprep.subr.bf16.mxu0 0
      %4284 = vmatpush2.bf16.msra.mxu0 0
      %4285 = vmatprep.subr.bf16.mxu0 0
      %4286 = vmatpush2.bf16.msra.mxu0 0
      %4287 = vmatprep.subr.bf16.mxu0 0
      %4288 = vmatpush2.bf16.msra.mxu0 0
      %4289 = vmatprep.mubr.bf16.mxu0 0
      %4290 = vmatmul.mubr.bf16.gmra.mxu0 %v4246
      %v4291 = vpop.f32.mrf.mxu0
      %v4292 = vadd.f32 0.0, %v4291
      %v4293 = vpop.f32.mrf.mxu0
      %v4294 = vpop.f32.mrf.mxu0
      %v4295 = vadd.f32 0.0, %v4294
      %v4296 = vpop.f32.mrf.mxu0
      %4297 = vmatprep.mubr.bf16.mxu0 0
      %4298 = vmatmul.mubr.bf16.gmra.mxu0 %v4249
      %v4299 = vpop.f32.mrf.mxu0
      %v4300 = vadd.f32 0.0, %v4299
      %v4301 = vpop.f32.mrf.mxu0
      %v4302 = vpop.f32.mrf.mxu0
      %v4303 = vadd.f32 0.0, %v4302
      %v4304 = vpop.f32.mrf.mxu0
      %4305 = vmatprep.mubr.bf16.mxu0 0
      %4306 = vmatmul.mubr.bf16.gmra.mxu0 %v4252
      %v4307 = vpop.f32.mrf.mxu0
      %v4308 = vadd.f32 0.0, %v4307
      %v4309 = vpop.f32.mrf.mxu0
      %v4310 = vpop.f32.mrf.mxu0
      %v4311 = vadd.f32 0.0, %v4310
      %v4312 = vpop.f32.mrf.mxu0
      %4313 = vmatprep.mubr.bf16.mxu0 0
      %4314 = vmatmul.mubr.bf16.gmra.mxu0 %v4255
      %v4315 = vpop.f32.mrf.mxu0
      %v4316 = vadd.f32 0.0, %v4315
      %v4317 = vpop.f32.mrf.mxu0
      %v4318 = vpop.f32.mrf.mxu0
      %v4319 = vadd.f32 0.0, %v4318
      %v4320 = vpop.f32.mrf.mxu0
      %4321 = vdwg.mxu0
      %4322 = vrot.lane.b32.xlu0 %v1127, 48
      %v4323 = vpop.permute.xlu0 %4322
      %4324 = vrot.lane.b32.xlu0 %v1128, 48
      %v4325 = vpop.permute.xlu0 %4324
      %4326 = vrot.lane.b32.xlu0 %v1129, 48
      %v4327 = vpop.permute.xlu0 %4326
      %4328 = vrot.lane.b32.xlu0 %v1130, 48
      %v4329 = vpop.permute.xlu0 %4328
      %v4335 = vsel %vm1544, %v4221, 0
      %v4338 = vsel %vm1544, %v4222, 0
      %v4341 = vsel %vm1544, %v4223, 0
      %v4344 = vsel %vm1544, %v4224, 0
      %4346 = vmatprep.subr.bf16.mxu0 0
      %4347 = vmatpush1.bf16.msra.mxu0 0
      %4348 = vmatprep.subr.bf16.mxu0 0
      %4349 = vmatpush1.bf16.msra.mxu0 0
      %4350 = vmatprep.subr.bf16.mxu0 0
      %4351 = vmatpush1.bf16.msra.mxu0 0
      %4352 = vmatprep.subr.bf16.mxu0 0
      %4353 = vmatpush1.bf16.msra.mxu0 0
      %4354 = vmatprep.subr.bf16.mxu0 0
      %4355 = vmatpush1.bf16.msra.mxu0 %v4329
      %4356 = vmatprep.subr.bf16.mxu0 0
      %4357 = vmatpush1.bf16.msra.mxu0 %v4327
      %4358 = vmatprep.subr.bf16.mxu0 0
      %4359 = vmatpush1.bf16.msra.mxu0 %v4325
      %4360 = vmatprep.subr.bf16.mxu0 0
      %4361 = vmatpush1.bf16.msra.mxu0 %v4323
      %4362 = vmatprep.subr.bf16.mxu0 0
      %4363 = vmatpush2.bf16.msra.mxu0 0
      %4364 = vmatprep.subr.bf16.mxu0 0
      %4365 = vmatpush2.bf16.msra.mxu0 0
      %4366 = vmatprep.subr.bf16.mxu0 0
      %4367 = vmatpush2.bf16.msra.mxu0 0
      %4368 = vmatprep.subr.bf16.mxu0 0
      %4369 = vmatpush2.bf16.msra.mxu0 0
      %4370 = vmatprep.subr.bf16.mxu0 0
      %4371 = vmatpush2.bf16.msra.mxu0 0
      %4372 = vmatprep.subr.bf16.mxu0 0
      %4373 = vmatpush2.bf16.msra.mxu0 0
      %4374 = vmatprep.subr.bf16.mxu0 0
      %4375 = vmatpush2.bf16.msra.mxu0 0
      %4376 = vmatprep.subr.bf16.mxu0 0
      %4377 = vmatpush2.bf16.msra.mxu0 0
      %4378 = vmatprep.mubr.bf16.mxu0 0
      %4379 = vmatmul.mubr.bf16.gmra.mxu0 %v4335
      %v4380 = vpop.f32.mrf.mxu0
      %v4381 = vadd.f32 0.0, %v4380
      %v4382 = vpop.f32.mrf.mxu0
      %v4383 = vpop.f32.mrf.mxu0
      %v4384 = vadd.f32 0.0, %v4383
      %v4385 = vpop.f32.mrf.mxu0
      %4386 = vmatprep.mubr.bf16.mxu0 0
      %4387 = vmatmul.mubr.bf16.gmra.mxu0 %v4338
      %v4388 = vpop.f32.mrf.mxu0
      %v4389 = vadd.f32 0.0, %v4388
      %v4390 = vpop.f32.mrf.mxu0
      %v4391 = vpop.f32.mrf.mxu0
      %v4392 = vadd.f32 0.0, %v4391
      %v4393 = vpop.f32.mrf.mxu0
      %4394 = vmatprep.mubr.bf16.mxu0 0
      %4395 = vmatmul.mubr.bf16.gmra.mxu0 %v4341
      %v4396 = vpop.f32.mrf.mxu0
      %v4397 = vadd.f32 0.0, %v4396
      %v4398 = vpop.f32.mrf.mxu0
      %v4399 = vpop.f32.mrf.mxu0
      %v4400 = vadd.f32 0.0, %v4399
      %v4401 = vpop.f32.mrf.mxu0
      %4402 = vmatprep.mubr.bf16.mxu0 0
      %4403 = vmatmul.mubr.bf16.gmra.mxu0 %v4344
      %v4404 = vpop.f32.mrf.mxu0
      %v4405 = vadd.f32 0.0, %v4404
      %v4406 = vpop.f32.mrf.mxu0
      %v4407 = vpop.f32.mrf.mxu0
      %v4408 = vadd.f32 0.0, %v4407
      %v4409 = vpop.f32.mrf.mxu0
      %4410 = vdwg.mxu0
      %4411 = vrot.lane.b32.xlu0 %v1131, 48
      %v4412 = vpop.permute.xlu0 %4411
      %4413 = vrot.lane.b32.xlu0 %v1132, 48
      %v4414 = vpop.permute.xlu0 %4413
      %4415 = vrot.lane.b32.xlu0 %v1133, 48
      %v4416 = vpop.permute.xlu0 %4415
      %4417 = vrot.lane.b32.xlu0 %v1134, 48
      %v4418 = vpop.permute.xlu0 %4417
      %v4424 = vsel %vm1544, %v4225, 0
      %v4427 = vsel %vm1544, %v4226, 0
      %v4430 = vsel %vm1544, %v4227, 0
      %v4433 = vsel %vm1544, %v4228, 0
      %4435 = vmatprep.subr.bf16.mxu0 0
      %4436 = vmatpush1.bf16.msra.mxu0 0
      %4437 = vmatprep.subr.bf16.mxu0 0
      %4438 = vmatpush1.bf16.msra.mxu0 0
      %4439 = vmatprep.subr.bf16.mxu0 0
      %4440 = vmatpush1.bf16.msra.mxu0 0
      %4441 = vmatprep.subr.bf16.mxu0 0
      %4442 = vmatpush1.bf16.msra.mxu0 0
      %4443 = vmatprep.subr.bf16.mxu0 0
      %4444 = vmatpush1.bf16.msra.mxu0 %v4418
      %4445 = vmatprep.subr.bf16.mxu0 0
      %4446 = vmatpush1.bf16.msra.mxu0 %v4416
      %4447 = vmatprep.subr.bf16.mxu0 0
      %4448 = vmatpush1.bf16.msra.mxu0 %v4414
      %4449 = vmatprep.subr.bf16.mxu0 0
      %4450 = vmatpush1.bf16.msra.mxu0 %v4412
      %4451 = vmatprep.subr.bf16.mxu0 0
      %4452 = vmatpush2.bf16.msra.mxu0 0
      %4453 = vmatprep.subr.bf16.mxu0 0
      %4454 = vmatpush2.bf16.msra.mxu0 0
      %4455 = vmatprep.subr.bf16.mxu0 0
      %4456 = vmatpush2.bf16.msra.mxu0 0
      %4457 = vmatprep.subr.bf16.mxu0 0
      %4458 = vmatpush2.bf16.msra.mxu0 0
      %4459 = vmatprep.subr.bf16.mxu0 0
      %4460 = vmatpush2.bf16.msra.mxu0 0
      %4461 = vmatprep.subr.bf16.mxu0 0
      %4462 = vmatpush2.bf16.msra.mxu0 0
      %4463 = vmatprep.subr.bf16.mxu0 0
      %4464 = vmatpush2.bf16.msra.mxu0 0
      %4465 = vmatprep.subr.bf16.mxu0 0
      %4466 = vmatpush2.bf16.msra.mxu0 0
      %4467 = vmatprep.mubr.bf16.mxu0 0
      %4468 = vmatmul.mubr.bf16.gmra.mxu0 %v4424
      %v4469 = vpop.f32.mrf.mxu0
      %v4470 = vadd.f32 0.0, %v4469
      %v4471 = vpop.f32.mrf.mxu0
      %v4472 = vpop.f32.mrf.mxu0
      %v4473 = vadd.f32 0.0, %v4472
      %v4474 = vpop.f32.mrf.mxu0
      %4475 = vmatprep.mubr.bf16.mxu0 0
      %4476 = vmatmul.mubr.bf16.gmra.mxu0 %v4427
      %v4477 = vpop.f32.mrf.mxu0
      %v4478 = vadd.f32 0.0, %v4477
      %v4479 = vpop.f32.mrf.mxu0
      %v4480 = vpop.f32.mrf.mxu0
      %v4481 = vadd.f32 0.0, %v4480
      %v4482 = vpop.f32.mrf.mxu0
      %4483 = vmatprep.mubr.bf16.mxu0 0
      %4484 = vmatmul.mubr.bf16.gmra.mxu0 %v4430
      %v4485 = vpop.f32.mrf.mxu0
      %v4486 = vadd.f32 0.0, %v4485
      %v4487 = vpop.f32.mrf.mxu0
      %v4488 = vpop.f32.mrf.mxu0
      %v4489 = vadd.f32 0.0, %v4488
      %v4490 = vpop.f32.mrf.mxu0
      %4491 = vmatprep.mubr.bf16.mxu0 0
      %4492 = vmatmul.mubr.bf16.gmra.mxu0 %v4433
      %v4493 = vpop.f32.mrf.mxu0
      %v4494 = vadd.f32 0.0, %v4493
      %v4495 = vpop.f32.mrf.mxu0
      %v4496 = vpop.f32.mrf.mxu0
      %v4497 = vadd.f32 0.0, %v4496
      %v4498 = vpop.f32.mrf.mxu0
      %4499 = vdwg.mxu0
      %4500 = vrot.lane.b32.xlu0 %v1135, 48
      %v4501 = vpop.permute.xlu0 %4500
      %4502 = vrot.lane.b32.xlu0 %v1136, 48
      %v4503 = vpop.permute.xlu0 %4502
      %4504 = vrot.lane.b32.xlu0 %v1137, 48
      %v4505 = vpop.permute.xlu0 %4504
      %4506 = vrot.lane.b32.xlu0 %v1138, 48
      %v4507 = vpop.permute.xlu0 %4506
      %v4513 = vsel %vm1544, %v4229, 0
      %v4516 = vsel %vm1544, %v4230, 0
      %v4519 = vsel %vm1544, %v4231, 0
      %v4522 = vsel %vm1544, %v4232, 0
      %4524 = vmatprep.subr.bf16.mxu0 0
      %4525 = vmatpush1.bf16.msra.mxu0 0
      %4526 = vmatprep.subr.bf16.mxu0 0
      %4527 = vmatpush1.bf16.msra.mxu0 0
      %4528 = vmatprep.subr.bf16.mxu0 0
      %4529 = vmatpush1.bf16.msra.mxu0 0
      %4530 = vmatprep.subr.bf16.mxu0 0
      %4531 = vmatpush1.bf16.msra.mxu0 0
      %4532 = vmatprep.subr.bf16.mxu0 0
      %4533 = vmatpush1.bf16.msra.mxu0 %v4507
      %4534 = vmatprep.subr.bf16.mxu0 0
      %4535 = vmatpush1.bf16.msra.mxu0 %v4505
      %4536 = vmatprep.subr.bf16.mxu0 0
      %4537 = vmatpush1.bf16.msra.mxu0 %v4503
      %4538 = vmatprep.subr.bf16.mxu0 0
      %4539 = vmatpush1.bf16.msra.mxu0 %v4501
      %4540 = vmatprep.subr.bf16.mxu0 0
      %4541 = vmatpush2.bf16.msra.mxu0 0
      %4542 = vmatprep.subr.bf16.mxu0 0
      %4543 = vmatpush2.bf16.msra.mxu0 0
      %4544 = vmatprep.subr.bf16.mxu0 0
      %4545 = vmatpush2.bf16.msra.mxu0 0
      %4546 = vmatprep.subr.bf16.mxu0 0
      %4547 = vmatpush2.bf16.msra.mxu0 0
      %4548 = vmatprep.subr.bf16.mxu0 0
      %4549 = vmatpush2.bf16.msra.mxu0 0
      %4550 = vmatprep.subr.bf16.mxu0 0
      %4551 = vmatpush2.bf16.msra.mxu0 0
      %4552 = vmatprep.subr.bf16.mxu0 0
      %4553 = vmatpush2.bf16.msra.mxu0 0
      %4554 = vmatprep.subr.bf16.mxu0 0
      %4555 = vmatpush2.bf16.msra.mxu0 0
      %4556 = vmatprep.mubr.bf16.mxu0 0
      %4557 = vmatmul.mubr.bf16.gmra.mxu0 %v4513
      %v4558 = vpop.f32.mrf.mxu0
      %v4559 = vadd.f32 0.0, %v4558
      %v4560 = vpop.f32.mrf.mxu0
      %v4561 = vpop.f32.mrf.mxu0
      %v4562 = vadd.f32 0.0, %v4561
      %v4563 = vpop.f32.mrf.mxu0
      %4564 = vmatprep.mubr.bf16.mxu0 0
      %4565 = vmatmul.mubr.bf16.gmra.mxu0 %v4516
      %v4566 = vpop.f32.mrf.mxu0
      %v4567 = vadd.f32 0.0, %v4566
      %v4568 = vpop.f32.mrf.mxu0
      %v4569 = vpop.f32.mrf.mxu0
      %v4570 = vadd.f32 0.0, %v4569
      %v4571 = vpop.f32.mrf.mxu0
      %4572 = vmatprep.mubr.bf16.mxu0 0
      %4573 = vmatmul.mubr.bf16.gmra.mxu0 %v4519
      %v4574 = vpop.f32.mrf.mxu0
      %v4575 = vadd.f32 0.0, %v4574
      %v4576 = vpop.f32.mrf.mxu0
      %v4577 = vpop.f32.mrf.mxu0
      %v4578 = vadd.f32 0.0, %v4577
      %v4579 = vpop.f32.mrf.mxu0
      %4580 = vmatprep.mubr.bf16.mxu0 0
      %4581 = vmatmul.mubr.bf16.gmra.mxu0 %v4522
      %v4582 = vpop.f32.mrf.mxu0
      %v4583 = vadd.f32 0.0, %v4582
      %v4584 = vpop.f32.mrf.mxu0
      %v4585 = vpop.f32.mrf.mxu0
      %v4586 = vadd.f32 0.0, %v4585
      %v4587 = vpop.f32.mrf.mxu0
      %4588 = vdwg.mxu0
      %4589 = vrot.lane.b32.xlu0 %v1009, 104
      %v4590 = vpop.permute.xlu0 %4589
      %4591 = vrot.lane.b32.xlu0 %v1010, 104
      %v4592 = vpop.permute.xlu0 %4591
      %4593 = vrot.lane.b32.xlu0 %v1011, 104
      %v4594 = vpop.permute.xlu0 %4593
      %4595 = vrot.lane.b32.xlu0 %v1012, 104
      %v4596 = vpop.permute.xlu0 %4595
      %4597 = vrot.lane.b32.xlu0 %v1066, 72
      %v4598 = vpop.permute.xlu0 %4597
      %4599 = vrot.lane.b32.xlu0 %v1067, 72
      %v4600 = vpop.permute.xlu0 %4599
      %4601 = vrot.lane.b32.xlu0 %v1068, 72
      %v4602 = vpop.permute.xlu0 %4601
      %4603 = vrot.lane.b32.xlu0 %v1069, 72
      %v4604 = vpop.permute.xlu0 %4603
      %v4606 = vsel %vm1151, %v4590, 0
      %v4609 = vsel %vm1151, %v4592, 0
      %v4612 = vsel %vm1151, %v4594, 0
      %v4615 = vsel %vm1151, %v4596, 0
      %v4618 = vsel %vm1151, %v4598, 0
      %v4621 = vsel %vm1151, %v4600, 0
      %v4624 = vsel %vm1151, %v4602, 0
      %v4627 = vsel %vm1151, %v4604, 0
      %4629 = vmatprep.subr.bf16.mxu0 0
      %4630 = vmatpush1.bf16.xpose.msra.mxu0 0
      %4631 = vmatprep.subr.bf16.mxu0 0
      %4632 = vmatpush1.bf16.xpose.msra.mxu0 0
      %4633 = vmatprep.subr.bf16.mxu0 0
      %4634 = vmatpush1.bf16.xpose.msra.mxu0 0
      %4635 = vmatprep.subr.bf16.mxu0 0
      %4636 = vmatpush1.bf16.xpose.msra.mxu0 0
      %4637 = vmatprep.subr.bf16.mxu0 0
      %4638 = vmatpush1.bf16.xpose.msra.mxu0 %v4627
      %4639 = vmatprep.subr.bf16.mxu0 0
      %4640 = vmatpush1.bf16.xpose.msra.mxu0 %v4624
      %4641 = vmatprep.subr.bf16.mxu0 0
      %4642 = vmatpush1.bf16.xpose.msra.mxu0 %v4621
      %4643 = vmatprep.subr.bf16.mxu0 0
      %4644 = vmatpush1.bf16.xpose.msra.mxu0 %v4618
      %4645 = vmatprep.subr.bf16.mxu0 0
      %4646 = vmatpush2.bf16.xpose.msra.mxu0 0
      %4647 = vmatprep.subr.bf16.mxu0 0
      %4648 = vmatpush2.bf16.xpose.msra.mxu0 0
      %4649 = vmatprep.subr.bf16.mxu0 0
      %4650 = vmatpush2.bf16.xpose.msra.mxu0 0
      %4651 = vmatprep.subr.bf16.mxu0 0
      %4652 = vmatpush2.bf16.xpose.msra.mxu0 0
      %4653 = vmatprep.subr.bf16.mxu0 0
      %4654 = vmatpush2.bf16.xpose.msra.mxu0 0
      %4655 = vmatprep.subr.bf16.mxu0 0
      %4656 = vmatpush2.bf16.xpose.msra.mxu0 0
      %4657 = vmatprep.subr.bf16.mxu0 0
      %4658 = vmatpush2.bf16.xpose.msra.mxu0 0
      %4659 = vmatprep.subr.bf16.mxu0 0
      %4660 = vmatpush2.bf16.xpose.msra.mxu0 0
      %4661 = vmatprep.mubr.bf16.mxu0 0
      %4662 = vmatmul.mubr.bf16.gmra.mxu0 %v4606
      %v4663 = vpop.f32.mrf.mxu0
      %v4664 = vadd.f32 0.0, %v4663
      %v4665 = vpop.f32.mrf.mxu0
      %v4666 = vpop.f32.mrf.mxu0
      %v4667 = vadd.f32 0.0, %v4666
      %v4668 = vpop.f32.mrf.mxu0
      %4669 = vmatprep.mubr.bf16.mxu0 0
      %4670 = vmatmul.mubr.bf16.gmra.mxu0 %v4609
      %v4671 = vpop.f32.mrf.mxu0
      %v4672 = vadd.f32 0.0, %v4671
      %v4673 = vpop.f32.mrf.mxu0
      %v4674 = vpop.f32.mrf.mxu0
      %v4675 = vadd.f32 0.0, %v4674
      %v4676 = vpop.f32.mrf.mxu0
      %4677 = vmatprep.mubr.bf16.mxu0 0
      %4678 = vmatmul.mubr.bf16.gmra.mxu0 %v4612
      %v4679 = vpop.f32.mrf.mxu0
      %v4680 = vadd.f32 0.0, %v4679
      %v4681 = vpop.f32.mrf.mxu0
      %v4682 = vpop.f32.mrf.mxu0
      %v4683 = vadd.f32 0.0, %v4682
      %v4684 = vpop.f32.mrf.mxu0
      %4685 = vmatprep.mubr.bf16.mxu0 0
      %4686 = vmatmul.mubr.bf16.gmra.mxu0 %v4615
      %v4687 = vpop.f32.mrf.mxu0
      %v4688 = vadd.f32 0.0, %v4687
      %v4689 = vpop.f32.mrf.mxu0
      %v4690 = vpop.f32.mrf.mxu0
      %v4691 = vadd.f32 0.0, %v4690
      %v4692 = vpop.f32.mrf.mxu0
      %4693 = vdwg.mxu0
      %4694 = vrot.lane.b32.xlu0 %v1013, 104
      %v4695 = vpop.permute.xlu0 %4694
      %4696 = vrot.lane.b32.xlu0 %v1014, 104
      %v4697 = vpop.permute.xlu0 %4696
      %4698 = vrot.lane.b32.xlu0 %v1015, 104
      %v4699 = vpop.permute.xlu0 %4698
      %4700 = vrot.lane.b32.xlu0 %v1016, 104
      %v4701 = vpop.permute.xlu0 %4700
      %4702 = vrot.lane.b32.xlu0 %v1070, 72
      %v4703 = vpop.permute.xlu0 %4702
      %4704 = vrot.lane.b32.xlu0 %v1071, 72
      %v4705 = vpop.permute.xlu0 %4704
      %4706 = vrot.lane.b32.xlu0 %v1072, 72
      %v4707 = vpop.permute.xlu0 %4706
      %4708 = vrot.lane.b32.xlu0 %v1073, 72
      %v4709 = vpop.permute.xlu0 %4708
      %v4711 = vsel %vm1151, %v4695, 0
      %v4714 = vsel %vm1151, %v4697, 0
      %v4717 = vsel %vm1151, %v4699, 0
      %v4720 = vsel %vm1151, %v4701, 0
      %v4723 = vsel %vm1151, %v4703, 0
      %v4726 = vsel %vm1151, %v4705, 0
      %v4729 = vsel %vm1151, %v4707, 0
      %v4732 = vsel %vm1151, %v4709, 0
      %4734 = vmatprep.subr.bf16.mxu0 0
      %4735 = vmatpush1.bf16.xpose.msra.mxu0 0
      %4736 = vmatprep.subr.bf16.mxu0 0
      %4737 = vmatpush1.bf16.xpose.msra.mxu0 0
      %4738 = vmatprep.subr.bf16.mxu0 0
      %4739 = vmatpush1.bf16.xpose.msra.mxu0 0
      %4740 = vmatprep.subr.bf16.mxu0 0
      %4741 = vmatpush1.bf16.xpose.msra.mxu0 0
      %4742 = vmatprep.subr.bf16.mxu0 0
      %4743 = vmatpush1.bf16.xpose.msra.mxu0 %v4732
      %4744 = vmatprep.subr.bf16.mxu0 0
      %4745 = vmatpush1.bf16.xpose.msra.mxu0 %v4729
      %4746 = vmatprep.subr.bf16.mxu0 0
      %4747 = vmatpush1.bf16.xpose.msra.mxu0 %v4726
      %4748 = vmatprep.subr.bf16.mxu0 0
      %4749 = vmatpush1.bf16.xpose.msra.mxu0 %v4723
      %4750 = vmatprep.subr.bf16.mxu0 0
      %4751 = vmatpush2.bf16.xpose.msra.mxu0 0
      %4752 = vmatprep.subr.bf16.mxu0 0
      %4753 = vmatpush2.bf16.xpose.msra.mxu0 0
      %4754 = vmatprep.subr.bf16.mxu0 0
      %4755 = vmatpush2.bf16.xpose.msra.mxu0 0
      %4756 = vmatprep.subr.bf16.mxu0 0
      %4757 = vmatpush2.bf16.xpose.msra.mxu0 0
      %4758 = vmatprep.subr.bf16.mxu0 0
      %4759 = vmatpush2.bf16.xpose.msra.mxu0 0
      %4760 = vmatprep.subr.bf16.mxu0 0
      %4761 = vmatpush2.bf16.xpose.msra.mxu0 0
      %4762 = vmatprep.subr.bf16.mxu0 0
      %4763 = vmatpush2.bf16.xpose.msra.mxu0 0
      %4764 = vmatprep.subr.bf16.mxu0 0
      %4765 = vmatpush2.bf16.xpose.msra.mxu0 0
      %4766 = vmatprep.mubr.bf16.mxu0 0
      %4767 = vmatmul.mubr.bf16.gmra.mxu0 %v4711
      %v4768 = vpop.f32.mrf.mxu0
      %v4769 = vadd.f32 0.0, %v4768
      %v4770 = vpop.f32.mrf.mxu0
      %v4771 = vpop.f32.mrf.mxu0
      %v4772 = vadd.f32 0.0, %v4771
      %v4773 = vpop.f32.mrf.mxu0
      %4774 = vmatprep.mubr.bf16.mxu0 0
      %4775 = vmatmul.mubr.bf16.gmra.mxu0 %v4714
      %v4776 = vpop.f32.mrf.mxu0
      %v4777 = vadd.f32 0.0, %v4776
      %v4778 = vpop.f32.mrf.mxu0
      %v4779 = vpop.f32.mrf.mxu0
      %v4780 = vadd.f32 0.0, %v4779
      %v4781 = vpop.f32.mrf.mxu0
      %4782 = vmatprep.mubr.bf16.mxu0 0
      %4783 = vmatmul.mubr.bf16.gmra.mxu0 %v4717
      %v4784 = vpop.f32.mrf.mxu0
      %v4785 = vadd.f32 0.0, %v4784
      %v4786 = vpop.f32.mrf.mxu0
      %v4787 = vpop.f32.mrf.mxu0
      %v4788 = vadd.f32 0.0, %v4787
      %v4789 = vpop.f32.mrf.mxu0
      %4790 = vmatprep.mubr.bf16.mxu0 0
      %4791 = vmatmul.mubr.bf16.gmra.mxu0 %v4720
      %v4792 = vpop.f32.mrf.mxu0
      %v4793 = vadd.f32 0.0, %v4792
      %v4794 = vpop.f32.mrf.mxu0
      %v4795 = vpop.f32.mrf.mxu0
      %v4796 = vadd.f32 0.0, %v4795
      %v4797 = vpop.f32.mrf.mxu0
      %4798 = vdwg.mxu0
      %4799 = vrot.lane.b32.xlu0 %v1017, 104
      %v4800 = vpop.permute.xlu0 %4799
      %4801 = vrot.lane.b32.xlu0 %v1018, 104
      %v4802 = vpop.permute.xlu0 %4801
      %4803 = vrot.lane.b32.xlu0 %v1019, 104
      %v4804 = vpop.permute.xlu0 %4803
      %4805 = vrot.lane.b32.xlu0 %v1020, 104
      %v4806 = vpop.permute.xlu0 %4805
      %4807 = vrot.lane.b32.xlu0 %v1074, 72
      %v4808 = vpop.permute.xlu0 %4807
      %4809 = vrot.lane.b32.xlu0 %v1075, 72
      %v4810 = vpop.permute.xlu0 %4809
      %4811 = vrot.lane.b32.xlu0 %v1076, 72
      %v4812 = vpop.permute.xlu0 %4811
      %4813 = vrot.lane.b32.xlu0 %v1077, 72
      %v4814 = vpop.permute.xlu0 %4813
      %v4816 = vsel %vm1151, %v4800, 0
      %v4819 = vsel %vm1151, %v4802, 0
      %v4822 = vsel %vm1151, %v4804, 0
      %v4825 = vsel %vm1151, %v4806, 0
      %v4828 = vsel %vm1151, %v4808, 0
      %v4831 = vsel %vm1151, %v4810, 0
      %v4834 = vsel %vm1151, %v4812, 0
      %v4837 = vsel %vm1151, %v4814, 0
      %4839 = vmatprep.subr.bf16.mxu0 0
      %4840 = vmatpush1.bf16.xpose.msra.mxu0 0
      %4841 = vmatprep.subr.bf16.mxu0 0
      %4842 = vmatpush1.bf16.xpose.msra.mxu0 0
      %4843 = vmatprep.subr.bf16.mxu0 0
      %4844 = vmatpush1.bf16.xpose.msra.mxu0 0
      %4845 = vmatprep.subr.bf16.mxu0 0
      %4846 = vmatpush1.bf16.xpose.msra.mxu0 0
      %4847 = vmatprep.subr.bf16.mxu0 0
      %4848 = vmatpush1.bf16.xpose.msra.mxu0 %v4837
      %4849 = vmatprep.subr.bf16.mxu0 0
      %4850 = vmatpush1.bf16.xpose.msra.mxu0 %v4834
      %4851 = vmatprep.subr.bf16.mxu0 0
      %4852 = vmatpush1.bf16.xpose.msra.mxu0 %v4831
      %4853 = vmatprep.subr.bf16.mxu0 0
      %4854 = vmatpush1.bf16.xpose.msra.mxu0 %v4828
      %4855 = vmatprep.subr.bf16.mxu0 0
      %4856 = vmatpush2.bf16.xpose.msra.mxu0 0
      %4857 = vmatprep.subr.bf16.mxu0 0
      %4858 = vmatpush2.bf16.xpose.msra.mxu0 0
      %4859 = vmatprep.subr.bf16.mxu0 0
      %4860 = vmatpush2.bf16.xpose.msra.mxu0 0
      %4861 = vmatprep.subr.bf16.mxu0 0
      %4862 = vmatpush2.bf16.xpose.msra.mxu0 0
      %4863 = vmatprep.subr.bf16.mxu0 0
      %4864 = vmatpush2.bf16.xpose.msra.mxu0 0
      %4865 = vmatprep.subr.bf16.mxu0 0
      %4866 = vmatpush2.bf16.xpose.msra.mxu0 0
      %4867 = vmatprep.subr.bf16.mxu0 0
      %4868 = vmatpush2.bf16.xpose.msra.mxu0 0
      %4869 = vmatprep.subr.bf16.mxu0 0
      %4870 = vmatpush2.bf16.xpose.msra.mxu0 0
      %4871 = vmatprep.mubr.bf16.mxu0 0
      %4872 = vmatmul.mubr.bf16.gmra.mxu0 %v4816
      %v4873 = vpop.f32.mrf.mxu0
      %v4874 = vadd.f32 0.0, %v4873
      %v4875 = vpop.f32.mrf.mxu0
      %v4876 = vpop.f32.mrf.mxu0
      %v4877 = vadd.f32 0.0, %v4876
      %v4878 = vpop.f32.mrf.mxu0
      %4879 = vmatprep.mubr.bf16.mxu0 0
      %4880 = vmatmul.mubr.bf16.gmra.mxu0 %v4819
      %v4881 = vpop.f32.mrf.mxu0
      %v4882 = vadd.f32 0.0, %v4881
      %v4883 = vpop.f32.mrf.mxu0
      %v4884 = vpop.f32.mrf.mxu0
      %v4885 = vadd.f32 0.0, %v4884
      %v4886 = vpop.f32.mrf.mxu0
      %4887 = vmatprep.mubr.bf16.mxu0 0
      %4888 = vmatmul.mubr.bf16.gmra.mxu0 %v4822
      %v4889 = vpop.f32.mrf.mxu0
      %v4890 = vadd.f32 0.0, %v4889
      %v4891 = vpop.f32.mrf.mxu0
      %v4892 = vpop.f32.mrf.mxu0
      %v4893 = vadd.f32 0.0, %v4892
      %v4894 = vpop.f32.mrf.mxu0
      %4895 = vmatprep.mubr.bf16.mxu0 0
      %4896 = vmatmul.mubr.bf16.gmra.mxu0 %v4825
      %v4897 = vpop.f32.mrf.mxu0
      %v4898 = vadd.f32 0.0, %v4897
      %v4899 = vpop.f32.mrf.mxu0
      %v4900 = vpop.f32.mrf.mxu0
      %v4901 = vadd.f32 0.0, %v4900
      %v4902 = vpop.f32.mrf.mxu0
      %4903 = vdwg.mxu0
      %4904 = vrot.lane.b32.xlu0 %v1021, 104
      %v4905 = vpop.permute.xlu0 %4904
      %4906 = vrot.lane.b32.xlu0 %v1022, 104
      %v4907 = vpop.permute.xlu0 %4906
      %4908 = vrot.lane.b32.xlu0 %v1023, 104
      %v4909 = vpop.permute.xlu0 %4908
      %4910 = vrot.lane.b32.xlu0 %v1024, 104
      %v4911 = vpop.permute.xlu0 %4910
      %4912 = vrot.lane.b32.xlu0 %v1078, 72
      %v4913 = vpop.permute.xlu0 %4912
      %4914 = vrot.lane.b32.xlu0 %v1079, 72
      %v4915 = vpop.permute.xlu0 %4914
      %4916 = vrot.lane.b32.xlu0 %v1080, 72
      %v4917 = vpop.permute.xlu0 %4916
      %4918 = vrot.lane.b32.xlu0 %v1081, 72
      %v4919 = vpop.permute.xlu0 %4918
      %v4921 = vsel %vm1151, %v4905, 0
      %v4924 = vsel %vm1151, %v4907, 0
      %v4927 = vsel %vm1151, %v4909, 0
      %v4930 = vsel %vm1151, %v4911, 0
      %v4933 = vsel %vm1151, %v4913, 0
      %v4936 = vsel %vm1151, %v4915, 0
      %v4939 = vsel %vm1151, %v4917, 0
      %v4942 = vsel %vm1151, %v4919, 0
      %4944 = vmatprep.subr.bf16.mxu0 0
      %4945 = vmatpush1.bf16.xpose.msra.mxu0 0
      %4946 = vmatprep.subr.bf16.mxu0 0
      %4947 = vmatpush1.bf16.xpose.msra.mxu0 0
      %4948 = vmatprep.subr.bf16.mxu0 0
      %4949 = vmatpush1.bf16.xpose.msra.mxu0 0
      %4950 = vmatprep.subr.bf16.mxu0 0
      %4951 = vmatpush1.bf16.xpose.msra.mxu0 0
      %4952 = vmatprep.subr.bf16.mxu0 0
      %4953 = vmatpush1.bf16.xpose.msra.mxu0 %v4942
      %4954 = vmatprep.subr.bf16.mxu0 0
      %4955 = vmatpush1.bf16.xpose.msra.mxu0 %v4939
      %4956 = vmatprep.subr.bf16.mxu0 0
      %4957 = vmatpush1.bf16.xpose.msra.mxu0 %v4936
      %4958 = vmatprep.subr.bf16.mxu0 0
      %4959 = vmatpush1.bf16.xpose.msra.mxu0 %v4933
      %4960 = vmatprep.subr.bf16.mxu0 0
      %4961 = vmatpush2.bf16.xpose.msra.mxu0 0
      %4962 = vmatprep.subr.bf16.mxu0 0
      %4963 = vmatpush2.bf16.xpose.msra.mxu0 0
      %4964 = vmatprep.subr.bf16.mxu0 0
      %4965 = vmatpush2.bf16.xpose.msra.mxu0 0
      %4966 = vmatprep.subr.bf16.mxu0 0
      %4967 = vmatpush2.bf16.xpose.msra.mxu0 0
      %4968 = vmatprep.subr.bf16.mxu0 0
      %4969 = vmatpush2.bf16.xpose.msra.mxu0 0
      %4970 = vmatprep.subr.bf16.mxu0 0
      %4971 = vmatpush2.bf16.xpose.msra.mxu0 0
      %4972 = vmatprep.subr.bf16.mxu0 0
      %4973 = vmatpush2.bf16.xpose.msra.mxu0 0
      %4974 = vmatprep.subr.bf16.mxu0 0
      %4975 = vmatpush2.bf16.xpose.msra.mxu0 0
      %4976 = vmatprep.mubr.bf16.mxu0 0
      %4977 = vmatmul.mubr.bf16.gmra.mxu0 %v4921
      %v4978 = vpop.f32.mrf.mxu0
      %v4979 = vadd.f32 0.0, %v4978
      %v4980 = vpop.f32.mrf.mxu0
      %v4981 = vpop.f32.mrf.mxu0
      %v4982 = vadd.f32 0.0, %v4981
      %v4983 = vpop.f32.mrf.mxu0
      %4984 = vmatprep.mubr.bf16.mxu0 0
      %4985 = vmatmul.mubr.bf16.gmra.mxu0 %v4924
      %v4986 = vpop.f32.mrf.mxu0
      %v4987 = vadd.f32 0.0, %v4986
      %v4988 = vpop.f32.mrf.mxu0
      %v4989 = vpop.f32.mrf.mxu0
      %v4990 = vadd.f32 0.0, %v4989
      %v4991 = vpop.f32.mrf.mxu0
      %4992 = vmatprep.mubr.bf16.mxu0 0
      %4993 = vmatmul.mubr.bf16.gmra.mxu0 %v4927
      %v4994 = vpop.f32.mrf.mxu0
      %v4995 = vadd.f32 0.0, %v4994
      %v4996 = vpop.f32.mrf.mxu0
      %v4997 = vpop.f32.mrf.mxu0
      %v4998 = vadd.f32 0.0, %v4997
      %v4999 = vpop.f32.mrf.mxu0
      %5000 = vmatprep.mubr.bf16.mxu0 0
      %5001 = vmatmul.mubr.bf16.gmra.mxu0 %v4930
      %v5002 = vpop.f32.mrf.mxu0
      %v5003 = vadd.f32 0.0, %v5002
      %v5004 = vpop.f32.mrf.mxu0
      %v5005 = vpop.f32.mrf.mxu0
      %v5006 = vadd.f32 0.0, %v5005
      %v5007 = vpop.f32.mrf.mxu0
      %5008 = vdwg.mxu0
      %v5009 = vsel %vm1544, %v4664, -inf
      %5010 = vmax.xlane.f32.xlu0 %v5009
      %v5011 = vpop.xlane.xlu0 %5010
      %v5012 = vsel %vm1544, %v4667, -inf
      %5013 = vmax.xlane.f32.xlu0 %v5012
      %v5014 = vpop.xlane.xlu0 %5013
      %v5015 = vsel %vm1544, %v4672, -inf
      %5016 = vmax.xlane.f32.xlu0 %v5015
      %v5017 = vpop.xlane.xlu0 %5016
      %v5018 = vsel %vm1544, %v4675, -inf
      %5019 = vmax.xlane.f32.xlu0 %v5018
      %v5020 = vpop.xlane.xlu0 %5019
      %v5021 = vsel %vm1544, %v4680, -inf
      %5022 = vmax.xlane.f32.xlu0 %v5021
      %v5023 = vpop.xlane.xlu0 %5022
      %v5024 = vsel %vm1544, %v4683, -inf
      %5025 = vmax.xlane.f32.xlu0 %v5024
      %v5026 = vpop.xlane.xlu0 %5025
      %v5027 = vsel %vm1544, %v4688, -inf
      %5028 = vmax.xlane.f32.xlu0 %v5027
      %v5029 = vpop.xlane.xlu0 %5028
      %v5030 = vsel %vm1544, %v4691, -inf
      %5031 = vmax.xlane.f32.xlu0 %v5030
      %v5032 = vpop.xlane.xlu0 %5031
      %v5033 = vsel %vm1544, %v4769, -inf
      %5034 = vmax.xlane.f32.xlu0 %v5033
      %v5035 = vpop.xlane.xlu0 %5034
      %v5036 = vsel %vm1544, %v4772, -inf
      %5037 = vmax.xlane.f32.xlu0 %v5036
      %v5038 = vpop.xlane.xlu0 %5037
      %v5039 = vsel %vm1544, %v4777, -inf
      %5040 = vmax.xlane.f32.xlu0 %v5039
      %v5041 = vpop.xlane.xlu0 %5040
      %v5042 = vsel %vm1544, %v4780, -inf
      %5043 = vmax.xlane.f32.xlu0 %v5042
      %v5044 = vpop.xlane.xlu0 %5043
      %v5045 = vsel %vm1544, %v4785, -inf
      %5046 = vmax.xlane.f32.xlu0 %v5045
      %v5047 = vpop.xlane.xlu0 %5046
      %v5048 = vsel %vm1544, %v4788, -inf
      %5049 = vmax.xlane.f32.xlu0 %v5048
      %v5050 = vpop.xlane.xlu0 %5049
      %v5051 = vsel %vm1544, %v4793, -inf
      %5052 = vmax.xlane.f32.xlu0 %v5051
      %v5053 = vpop.xlane.xlu0 %5052
      %v5054 = vsel %vm1544, %v4796, -inf
      %5055 = vmax.xlane.f32.xlu0 %v5054
      %v5056 = vpop.xlane.xlu0 %5055
      %v5057 = vsel %vm1544, %v4874, -inf
      %5058 = vmax.xlane.f32.xlu0 %v5057
      %v5059 = vpop.xlane.xlu0 %5058
      %v5060 = vsel %vm1544, %v4877, -inf
      %5061 = vmax.xlane.f32.xlu0 %v5060
      %v5062 = vpop.xlane.xlu0 %5061
      %v5063 = vsel %vm1544, %v4882, -inf
      %5064 = vmax.xlane.f32.xlu0 %v5063
      %v5065 = vpop.xlane.xlu0 %5064
      %v5066 = vsel %vm1544, %v4885, -inf
      %5067 = vmax.xlane.f32.xlu0 %v5066
      %v5068 = vpop.xlane.xlu0 %5067
      %v5069 = vsel %vm1544, %v4890, -inf
      %5070 = vmax.xlane.f32.xlu0 %v5069
      %v5071 = vpop.xlane.xlu0 %5070
      %v5072 = vsel %vm1544, %v4893, -inf
      %5073 = vmax.xlane.f32.xlu0 %v5072
      %v5074 = vpop.xlane.xlu0 %5073
      %v5075 = vsel %vm1544, %v4898, -inf
      %5076 = vmax.xlane.f32.xlu0 %v5075
      %v5077 = vpop.xlane.xlu0 %5076
      %v5078 = vsel %vm1544, %v4901, -inf
      %5079 = vmax.xlane.f32.xlu0 %v5078
      %v5080 = vpop.xlane.xlu0 %5079
      %v5081 = vsel %vm1544, %v4979, -inf
      %5082 = vmax.xlane.f32.xlu0 %v5081
      %v5083 = vpop.xlane.xlu0 %5082
      %v5084 = vsel %vm1544, %v4982, -inf
      %5085 = vmax.xlane.f32.xlu0 %v5084
      %v5086 = vpop.xlane.xlu0 %5085
      %v5087 = vsel %vm1544, %v4987, -inf
      %5088 = vmax.xlane.f32.xlu0 %v5087
      %v5089 = vpop.xlane.xlu0 %5088
      %v5090 = vsel %vm1544, %v4990, -inf
      %5091 = vmax.xlane.f32.xlu0 %v5090
      %v5092 = vpop.xlane.xlu0 %5091
      %v5093 = vsel %vm1544, %v4995, -inf
      %5094 = vmax.xlane.f32.xlu0 %v5093
      %v5095 = vpop.xlane.xlu0 %5094
      %v5096 = vsel %vm1544, %v4998, -inf
      %5097 = vmax.xlane.f32.xlu0 %v5096
      %v5098 = vpop.xlane.xlu0 %5097
      %v5099 = vsel %vm1544, %v5003, -inf
      %5100 = vmax.xlane.f32.xlu0 %v5099
      %v5101 = vpop.xlane.xlu0 %5100
      %v5102 = vsel %vm1544, %v5006, -inf
      %5103 = vmax.xlane.f32.xlu0 %v5102
      %v5104 = vpop.xlane.xlu0 %5103
      %v5105 = vsub.f32 %v4664, %v5011
      %v5106 = vsub.f32 %v4667, %v5014
      %v5107 = vsub.f32 %v4672, %v5017
      %v5108 = vsub.f32 %v4675, %v5020
      %v5109 = vsub.f32 %v4680, %v5023
      %v5110 = vsub.f32 %v4683, %v5026
      %v5111 = vsub.f32 %v4688, %v5029
      %v5112 = vsub.f32 %v4691, %v5032
      %v5113 = vsub.f32 %v4769, %v5035
      %v5114 = vsub.f32 %v4772, %v5038
      %v5115 = vsub.f32 %v4777, %v5041
      %v5116 = vsub.f32 %v4780, %v5044
      %v5117 = vsub.f32 %v4785, %v5047
      %v5118 = vsub.f32 %v4788, %v5050
      %v5119 = vsub.f32 %v4793, %v5053
      %v5120 = vsub.f32 %v4796, %v5056
      %v5121 = vsub.f32 %v4874, %v5059
      %v5122 = vsub.f32 %v4877, %v5062
      %v5123 = vsub.f32 %v4882, %v5065
      %v5124 = vsub.f32 %v4885, %v5068
      %v5125 = vsub.f32 %v4890, %v5071
      %v5126 = vsub.f32 %v4893, %v5074
      %v5127 = vsub.f32 %v4898, %v5077
      %v5128 = vsub.f32 %v4901, %v5080
      %v5129 = vsub.f32 %v4979, %v5083
      %v5130 = vsub.f32 %v4982, %v5086
      %v5131 = vsub.f32 %v4987, %v5089
      %v5132 = vsub.f32 %v4990, %v5092
      %v5133 = vsub.f32 %v4995, %v5095
      %v5134 = vsub.f32 %v4998, %v5098
      %v5135 = vsub.f32 %v5003, %v5101
      %v5136 = vsub.f32 %v5006, %v5104
      %v5137 = vmul.f32 %v5105, 1.442695
      %v5138 = vpow.pop %v5137
      %v5139 = vmul.f32 %v5106, 1.442695
      %v5140 = vpow.pop %v5139
      %v5141 = vmul.f32 %v5107, 1.442695
      %v5142 = vpow.pop %v5141
      %v5143 = vmul.f32 %v5108, 1.442695
      %v5144 = vpow.pop %v5143
      %v5145 = vmul.f32 %v5109, 1.442695
      %v5146 = vpow.pop %v5145
      %v5147 = vmul.f32 %v5110, 1.442695
      %v5148 = vpow.pop %v5147
      %v5149 = vmul.f32 %v5111, 1.442695
      %v5150 = vpow.pop %v5149
      %v5151 = vmul.f32 %v5112, 1.442695
      %v5152 = vpow.pop %v5151
      %v5153 = vmul.f32 %v5113, 1.442695
      %v5154 = vpow.pop %v5153
      %v5155 = vmul.f32 %v5114, 1.442695
      %v5156 = vpow.pop %v5155
      %v5157 = vmul.f32 %v5115, 1.442695
      %v5158 = vpow.pop %v5157
      %v5159 = vmul.f32 %v5116, 1.442695
      %v5160 = vpow.pop %v5159
      %v5161 = vmul.f32 %v5117, 1.442695
      %v5162 = vpow.pop %v5161
      %v5163 = vmul.f32 %v5118, 1.442695
      %v5164 = vpow.pop %v5163
      %v5165 = vmul.f32 %v5119, 1.442695
      %v5166 = vpow.pop %v5165
      %v5167 = vmul.f32 %v5120, 1.442695
      %v5168 = vpow.pop %v5167
      %v5169 = vmul.f32 %v5121, 1.442695
      %v5170 = vpow.pop %v5169
      %v5171 = vmul.f32 %v5122, 1.442695
      %v5172 = vpow.pop %v5171
      %v5173 = vmul.f32 %v5123, 1.442695
      %v5174 = vpow.pop %v5173
      %v5175 = vmul.f32 %v5124, 1.442695
      %v5176 = vpow.pop %v5175
      %v5177 = vmul.f32 %v5125, 1.442695
      %v5178 = vpow.pop %v5177
      %v5179 = vmul.f32 %v5126, 1.442695
      %v5180 = vpow.pop %v5179
      %v5181 = vmul.f32 %v5127, 1.442695
      %v5182 = vpow.pop %v5181
      %v5183 = vmul.f32 %v5128, 1.442695
      %v5184 = vpow.pop %v5183
      %v5185 = vmul.f32 %v5129, 1.442695
      %v5186 = vpow.pop %v5185
      %v5187 = vmul.f32 %v5130, 1.442695
      %v5188 = vpow.pop %v5187
      %v5189 = vmul.f32 %v5131, 1.442695
      %v5190 = vpow.pop %v5189
      %v5191 = vmul.f32 %v5132, 1.442695
      %v5192 = vpow.pop %v5191
      %v5193 = vmul.f32 %v5133, 1.442695
      %v5194 = vpow.pop %v5193
      %v5195 = vmul.f32 %v5134, 1.442695
      %v5196 = vpow.pop %v5195
      %v5197 = vmul.f32 %v5135, 1.442695
      %v5198 = vpow.pop %v5197
      %v5199 = vmul.f32 %v5136, 1.442695
      %v5200 = vpow.pop %v5199
      %v5201 = vsel %vm1544, %v5138, 0.0
      %5202 = vadd.xlane.f32.xlu0 %v5201
      %v5203 = vpop.xlane.xlu0 %5202
      %v5204 = vsel %vm1544, %v5140, 0.0
      %5205 = vadd.xlane.f32.xlu0 %v5204
      %v5206 = vpop.xlane.xlu0 %5205
      %v5207 = vsel %vm1544, %v5142, 0.0
      %5208 = vadd.xlane.f32.xlu0 %v5207
      %v5209 = vpop.xlane.xlu0 %5208
      %v5210 = vsel %vm1544, %v5144, 0.0
      %5211 = vadd.xlane.f32.xlu0 %v5210
      %v5212 = vpop.xlane.xlu0 %5211
      %v5213 = vsel %vm1544, %v5146, 0.0
      %5214 = vadd.xlane.f32.xlu0 %v5213
      %v5215 = vpop.xlane.xlu0 %5214
      %v5216 = vsel %vm1544, %v5148, 0.0
      %5217 = vadd.xlane.f32.xlu0 %v5216
      %v5218 = vpop.xlane.xlu0 %5217
      %v5219 = vsel %vm1544, %v5150, 0.0
      %5220 = vadd.xlane.f32.xlu0 %v5219
      %v5221 = vpop.xlane.xlu0 %5220
      %v5222 = vsel %vm1544, %v5152, 0.0
      %5223 = vadd.xlane.f32.xlu0 %v5222
      %v5224 = vpop.xlane.xlu0 %5223
      %v5225 = vsel %vm1544, %v5154, 0.0
      %5226 = vadd.xlane.f32.xlu0 %v5225
      %v5227 = vpop.xlane.xlu0 %5226
      %v5228 = vsel %vm1544, %v5156, 0.0
      %5229 = vadd.xlane.f32.xlu0 %v5228
      %v5230 = vpop.xlane.xlu0 %5229
      %v5231 = vsel %vm1544, %v5158, 0.0
      %5232 = vadd.xlane.f32.xlu0 %v5231
      %v5233 = vpop.xlane.xlu0 %5232
      %v5234 = vsel %vm1544, %v5160, 0.0
      %5235 = vadd.xlane.f32.xlu0 %v5234
      %v5236 = vpop.xlane.xlu0 %5235
      %v5237 = vsel %vm1544, %v5162, 0.0
      %5238 = vadd.xlane.f32.xlu0 %v5237
      %v5239 = vpop.xlane.xlu0 %5238
      %v5240 = vsel %vm1544, %v5164, 0.0
      %5241 = vadd.xlane.f32.xlu0 %v5240
      %v5242 = vpop.xlane.xlu0 %5241
      %v5243 = vsel %vm1544, %v5166, 0.0
      %5244 = vadd.xlane.f32.xlu0 %v5243
      %v5245 = vpop.xlane.xlu0 %5244
      %v5246 = vsel %vm1544, %v5168, 0.0
      %5247 = vadd.xlane.f32.xlu0 %v5246
      %v5248 = vpop.xlane.xlu0 %5247
      %v5249 = vsel %vm1544, %v5170, 0.0
      %5250 = vadd.xlane.f32.xlu0 %v5249
      %v5251 = vpop.xlane.xlu0 %5250
      %v5252 = vsel %vm1544, %v5172, 0.0
      %5253 = vadd.xlane.f32.xlu0 %v5252
      %v5254 = vpop.xlane.xlu0 %5253
      %v5255 = vsel %vm1544, %v5174, 0.0
      %5256 = vadd.xlane.f32.xlu0 %v5255
      %v5257 = vpop.xlane.xlu0 %5256
      %v5258 = vsel %vm1544, %v5176, 0.0
      %5259 = vadd.xlane.f32.xlu0 %v5258
      %v5260 = vpop.xlane.xlu0 %5259
      %v5261 = vsel %vm1544, %v5178, 0.0
      %5262 = vadd.xlane.f32.xlu0 %v5261
      %v5263 = vpop.xlane.xlu0 %5262
      %v5264 = vsel %vm1544, %v5180, 0.0
      %5265 = vadd.xlane.f32.xlu0 %v5264
      %v5266 = vpop.xlane.xlu0 %5265
      %v5267 = vsel %vm1544, %v5182, 0.0
      %5268 = vadd.xlane.f32.xlu0 %v5267
      %v5269 = vpop.xlane.xlu0 %5268
      %v5270 = vsel %vm1544, %v5184, 0.0
      %5271 = vadd.xlane.f32.xlu0 %v5270
      %v5272 = vpop.xlane.xlu0 %5271
      %v5273 = vsel %vm1544, %v5186, 0.0
      %5274 = vadd.xlane.f32.xlu0 %v5273
      %v5275 = vpop.xlane.xlu0 %5274
      %v5276 = vsel %vm1544, %v5188, 0.0
      %5277 = vadd.xlane.f32.xlu0 %v5276
      %v5278 = vpop.xlane.xlu0 %5277
      %v5279 = vsel %vm1544, %v5190, 0.0
      %5280 = vadd.xlane.f32.xlu0 %v5279
      %v5281 = vpop.xlane.xlu0 %5280
      %v5282 = vsel %vm1544, %v5192, 0.0
      %5283 = vadd.xlane.f32.xlu0 %v5282
      %v5284 = vpop.xlane.xlu0 %5283
      %v5285 = vsel %vm1544, %v5194, 0.0
      %5286 = vadd.xlane.f32.xlu0 %v5285
      %v5287 = vpop.xlane.xlu0 %5286
      %v5288 = vsel %vm1544, %v5196, 0.0
      %5289 = vadd.xlane.f32.xlu0 %v5288
      %v5290 = vpop.xlane.xlu0 %5289
      %v5291 = vsel %vm1544, %v5198, 0.0
      %5292 = vadd.xlane.f32.xlu0 %v5291
      %v5293 = vpop.xlane.xlu0 %5292
      %v5294 = vsel %vm1544, %v5200, 0.0
      %5295 = vadd.xlane.f32.xlu0 %v5294
      %v5296 = vpop.xlane.xlu0 %5295
      %v5297 = vrcp.pop %v5203
      %v5298 = vrcp.pop %v5206
      %v5299 = vrcp.pop %v5209
      %v5300 = vrcp.pop %v5212
      %v5301 = vrcp.pop %v5215
      %v5302 = vrcp.pop %v5218
      %v5303 = vrcp.pop %v5221
      %v5304 = vrcp.pop %v5224
      %v5305 = vrcp.pop %v5227
      %v5306 = vrcp.pop %v5230
      %v5307 = vrcp.pop %v5233
      %v5308 = vrcp.pop %v5236
      %v5309 = vrcp.pop %v5239
      %v5310 = vrcp.pop %v5242
      %v5311 = vrcp.pop %v5245
      %v5312 = vrcp.pop %v5248
      %v5313 = vrcp.pop %v5251
      %v5314 = vrcp.pop %v5254
      %v5315 = vrcp.pop %v5257
      %v5316 = vrcp.pop %v5260
      %v5317 = vrcp.pop %v5263
      %v5318 = vrcp.pop %v5266
      %v5319 = vrcp.pop %v5269
      %v5320 = vrcp.pop %v5272
      %v5321 = vrcp.pop %v5275
      %v5322 = vrcp.pop %v5278
      %v5323 = vrcp.pop %v5281
      %v5324 = vrcp.pop %v5284
      %v5325 = vrcp.pop %v5287
      %v5326 = vrcp.pop %v5290
      %v5327 = vrcp.pop %v5293
      %v5328 = vrcp.pop %v5296
      %v5329 = vmul.f32 %v5138, %v5297
      %v5330 = vmul.f32 %v5140, %v5298
      %v5331 = vmul.f32 %v5142, %v5299
      %v5332 = vmul.f32 %v5144, %v5300
      %v5333 = vmul.f32 %v5146, %v5301
      %v5334 = vmul.f32 %v5148, %v5302
      %v5335 = vmul.f32 %v5150, %v5303
      %v5336 = vmul.f32 %v5152, %v5304
      %v5337 = vmul.f32 %v5154, %v5305
      %v5338 = vmul.f32 %v5156, %v5306
      %v5339 = vmul.f32 %v5158, %v5307
      %v5340 = vmul.f32 %v5160, %v5308
      %v5341 = vmul.f32 %v5162, %v5309
      %v5342 = vmul.f32 %v5164, %v5310
      %v5343 = vmul.f32 %v5166, %v5311
      %v5344 = vmul.f32 %v5168, %v5312
      %v5345 = vmul.f32 %v5170, %v5313
      %v5346 = vmul.f32 %v5172, %v5314
      %v5347 = vmul.f32 %v5174, %v5315
      %v5348 = vmul.f32 %v5176, %v5316
      %v5349 = vmul.f32 %v5178, %v5317
      %v5350 = vmul.f32 %v5180, %v5318
      %v5351 = vmul.f32 %v5182, %v5319
      %v5352 = vmul.f32 %v5184, %v5320
      %v5353 = vmul.f32 %v5186, %v5321
      %v5354 = vmul.f32 %v5188, %v5322
      %v5355 = vmul.f32 %v5190, %v5323
      %v5356 = vmul.f32 %v5192, %v5324
      %v5357 = vmul.f32 %v5194, %v5325
      %v5358 = vmul.f32 %v5196, %v5326
      %v5359 = vmul.f32 %v5198, %v5327
      %v5360 = vmul.f32 %v5200, %v5328
      %v5361 = vpack.c.bf16 %v5330, %v5329
      %v5362 = vpack.c.bf16 %v5332, %v5331
      %v5363 = vpack.c.bf16 %v5334, %v5333
      %v5364 = vpack.c.bf16 %v5336, %v5335
      %v5365 = vpack.c.bf16 %v5338, %v5337
      %v5366 = vpack.c.bf16 %v5340, %v5339
      %v5367 = vpack.c.bf16 %v5342, %v5341
      %v5368 = vpack.c.bf16 %v5344, %v5343
      %v5369 = vpack.c.bf16 %v5346, %v5345
      %v5370 = vpack.c.bf16 %v5348, %v5347
      %v5371 = vpack.c.bf16 %v5350, %v5349
      %v5372 = vpack.c.bf16 %v5352, %v5351
      %v5373 = vpack.c.bf16 %v5354, %v5353
      %v5374 = vpack.c.bf16 %v5356, %v5355
      %v5375 = vpack.c.bf16 %v5358, %v5357
      %v5376 = vpack.c.bf16 %v5360, %v5359
      %5377 = vrot.lane.b32.xlu0 %v1123, 40
      %v5378 = vpop.permute.xlu0 %5377
      %5379 = vrot.lane.b32.xlu0 %v1124, 40
      %v5380 = vpop.permute.xlu0 %5379
      %5381 = vrot.lane.b32.xlu0 %v1125, 40
      %v5382 = vpop.permute.xlu0 %5381
      %5383 = vrot.lane.b32.xlu0 %v1126, 40
      %v5384 = vpop.permute.xlu0 %5383
      %v5390 = vsel %vm1544, %v5361, 0
      %v5393 = vsel %vm1544, %v5362, 0
      %v5396 = vsel %vm1544, %v5363, 0
      %v5399 = vsel %vm1544, %v5364, 0
      %5401 = vmatprep.subr.bf16.mxu0 0
      %5402 = vmatpush1.bf16.msra.mxu0 0
      %5403 = vmatprep.subr.bf16.mxu0 0
      %5404 = vmatpush1.bf16.msra.mxu0 0
      %5405 = vmatprep.subr.bf16.mxu0 0
      %5406 = vmatpush1.bf16.msra.mxu0 0
      %5407 = vmatprep.subr.bf16.mxu0 0
      %5408 = vmatpush1.bf16.msra.mxu0 0
      %5409 = vmatprep.subr.bf16.mxu0 0
      %5410 = vmatpush1.bf16.msra.mxu0 %v5384
      %5411 = vmatprep.subr.bf16.mxu0 0
      %5412 = vmatpush1.bf16.msra.mxu0 %v5382
      %5413 = vmatprep.subr.bf16.mxu0 0
      %5414 = vmatpush1.bf16.msra.mxu0 %v5380
      %5415 = vmatprep.subr.bf16.mxu0 0
      %5416 = vmatpush1.bf16.msra.mxu0 %v5378
      %5417 = vmatprep.subr.bf16.mxu0 0
      %5418 = vmatpush2.bf16.msra.mxu0 0
      %5419 = vmatprep.subr.bf16.mxu0 0
      %5420 = vmatpush2.bf16.msra.mxu0 0
      %5421 = vmatprep.subr.bf16.mxu0 0
      %5422 = vmatpush2.bf16.msra.mxu0 0
      %5423 = vmatprep.subr.bf16.mxu0 0
      %5424 = vmatpush2.bf16.msra.mxu0 0
      %5425 = vmatprep.subr.bf16.mxu0 0
      %5426 = vmatpush2.bf16.msra.mxu0 0
      %5427 = vmatprep.subr.bf16.mxu0 0
      %5428 = vmatpush2.bf16.msra.mxu0 0
      %5429 = vmatprep.subr.bf16.mxu0 0
      %5430 = vmatpush2.bf16.msra.mxu0 0
      %5431 = vmatprep.subr.bf16.mxu0 0
      %5432 = vmatpush2.bf16.msra.mxu0 0
      %5433 = vmatprep.mubr.bf16.mxu0 0
      %5434 = vmatmul.mubr.bf16.gmra.mxu0 %v5390
      %v5435 = vpop.f32.mrf.mxu0
      %v5436 = vadd.f32 0.0, %v5435
      %v5437 = vpop.f32.mrf.mxu0
      %v5438 = vpop.f32.mrf.mxu0
      %v5439 = vadd.f32 0.0, %v5438
      %v5440 = vpop.f32.mrf.mxu0
      %5441 = vmatprep.mubr.bf16.mxu0 0
      %5442 = vmatmul.mubr.bf16.gmra.mxu0 %v5393
      %v5443 = vpop.f32.mrf.mxu0
      %v5444 = vadd.f32 0.0, %v5443
      %v5445 = vpop.f32.mrf.mxu0
      %v5446 = vpop.f32.mrf.mxu0
      %v5447 = vadd.f32 0.0, %v5446
      %v5448 = vpop.f32.mrf.mxu0
      %5449 = vmatprep.mubr.bf16.mxu0 0
      %5450 = vmatmul.mubr.bf16.gmra.mxu0 %v5396
      %v5451 = vpop.f32.mrf.mxu0
      %v5452 = vadd.f32 0.0, %v5451
      %v5453 = vpop.f32.mrf.mxu0
      %v5454 = vpop.f32.mrf.mxu0
      %v5455 = vadd.f32 0.0, %v5454
      %v5456 = vpop.f32.mrf.mxu0
      %5457 = vmatprep.mubr.bf16.mxu0 0
      %5458 = vmatmul.mubr.bf16.gmra.mxu0 %v5399
      %v5459 = vpop.f32.mrf.mxu0
      %v5460 = vadd.f32 0.0, %v5459
      %v5461 = vpop.f32.mrf.mxu0
      %v5462 = vpop.f32.mrf.mxu0
      %v5463 = vadd.f32 0.0, %v5462
      %v5464 = vpop.f32.mrf.mxu0
      %5465 = vdwg.mxu0
      %5466 = vrot.lane.b32.xlu0 %v1127, 40
      %v5467 = vpop.permute.xlu0 %5466
      %5468 = vrot.lane.b32.xlu0 %v1128, 40
      %v5469 = vpop.permute.xlu0 %5468
      %5470 = vrot.lane.b32.xlu0 %v1129, 40
      %v5471 = vpop.permute.xlu0 %5470
      %5472 = vrot.lane.b32.xlu0 %v1130, 40
      %v5473 = vpop.permute.xlu0 %5472
      %v5479 = vsel %vm1544, %v5365, 0
      %v5482 = vsel %vm1544, %v5366, 0
      %v5485 = vsel %vm1544, %v5367, 0
      %v5488 = vsel %vm1544, %v5368, 0
      %5490 = vmatprep.subr.bf16.mxu0 0
      %5491 = vmatpush1.bf16.msra.mxu0 0
      %5492 = vmatprep.subr.bf16.mxu0 0
      %5493 = vmatpush1.bf16.msra.mxu0 0
      %5494 = vmatprep.subr.bf16.mxu0 0
      %5495 = vmatpush1.bf16.msra.mxu0 0
      %5496 = vmatprep.subr.bf16.mxu0 0
      %5497 = vmatpush1.bf16.msra.mxu0 0
      %5498 = vmatprep.subr.bf16.mxu0 0
      %5499 = vmatpush1.bf16.msra.mxu0 %v5473
      %5500 = vmatprep.subr.bf16.mxu0 0
      %5501 = vmatpush1.bf16.msra.mxu0 %v5471
      %5502 = vmatprep.subr.bf16.mxu0 0
      %5503 = vmatpush1.bf16.msra.mxu0 %v5469
      %5504 = vmatprep.subr.bf16.mxu0 0
      %5505 = vmatpush1.bf16.msra.mxu0 %v5467
      %5506 = vmatprep.subr.bf16.mxu0 0
      %5507 = vmatpush2.bf16.msra.mxu0 0
      %5508 = vmatprep.subr.bf16.mxu0 0
      %5509 = vmatpush2.bf16.msra.mxu0 0
      %5510 = vmatprep.subr.bf16.mxu0 0
      %5511 = vmatpush2.bf16.msra.mxu0 0
      %5512 = vmatprep.subr.bf16.mxu0 0
      %5513 = vmatpush2.bf16.msra.mxu0 0
      %5514 = vmatprep.subr.bf16.mxu0 0
      %5515 = vmatpush2.bf16.msra.mxu0 0
      %5516 = vmatprep.subr.bf16.mxu0 0
      %5517 = vmatpush2.bf16.msra.mxu0 0
      %5518 = vmatprep.subr.bf16.mxu0 0
      %5519 = vmatpush2.bf16.msra.mxu0 0
      %5520 = vmatprep.subr.bf16.mxu0 0
      %5521 = vmatpush2.bf16.msra.mxu0 0
      %5522 = vmatprep.mubr.bf16.mxu0 0
      %5523 = vmatmul.mubr.bf16.gmra.mxu0 %v5479
      %v5524 = vpop.f32.mrf.mxu0
      %v5525 = vadd.f32 0.0, %v5524
      %v5526 = vpop.f32.mrf.mxu0
      %v5527 = vpop.f32.mrf.mxu0
      %v5528 = vadd.f32 0.0, %v5527
      %v5529 = vpop.f32.mrf.mxu0
      %5530 = vmatprep.mubr.bf16.mxu0 0
      %5531 = vmatmul.mubr.bf16.gmra.mxu0 %v5482
      %v5532 = vpop.f32.mrf.mxu0
      %v5533 = vadd.f32 0.0, %v5532
      %v5534 = vpop.f32.mrf.mxu0
      %v5535 = vpop.f32.mrf.mxu0
      %v5536 = vadd.f32 0.0, %v5535
      %v5537 = vpop.f32.mrf.mxu0
      %5538 = vmatprep.mubr.bf16.mxu0 0
      %5539 = vmatmul.mubr.bf16.gmra.mxu0 %v5485
      %v5540 = vpop.f32.mrf.mxu0
      %v5541 = vadd.f32 0.0, %v5540
      %v5542 = vpop.f32.mrf.mxu0
      %v5543 = vpop.f32.mrf.mxu0
      %v5544 = vadd.f32 0.0, %v5543
      %v5545 = vpop.f32.mrf.mxu0
      %5546 = vmatprep.mubr.bf16.mxu0 0
      %5547 = vmatmul.mubr.bf16.gmra.mxu0 %v5488
      %v5548 = vpop.f32.mrf.mxu0
      %v5549 = vadd.f32 0.0, %v5548
      %v5550 = vpop.f32.mrf.mxu0
      %v5551 = vpop.f32.mrf.mxu0
      %v5552 = vadd.f32 0.0, %v5551
      %v5553 = vpop.f32.mrf.mxu0
      %5554 = vdwg.mxu0
      %5555 = vrot.lane.b32.xlu0 %v1131, 40
      %v5556 = vpop.permute.xlu0 %5555
      %5557 = vrot.lane.b32.xlu0 %v1132, 40
      %v5558 = vpop.permute.xlu0 %5557
      %5559 = vrot.lane.b32.xlu0 %v1133, 40
      %v5560 = vpop.permute.xlu0 %5559
      %5561 = vrot.lane.b32.xlu0 %v1134, 40
      %v5562 = vpop.permute.xlu0 %5561
      %v5568 = vsel %vm1544, %v5369, 0
      %v5571 = vsel %vm1544, %v5370, 0
      %v5574 = vsel %vm1544, %v5371, 0
      %v5577 = vsel %vm1544, %v5372, 0
      %5579 = vmatprep.subr.bf16.mxu0 0
      %5580 = vmatpush1.bf16.msra.mxu0 0
      %5581 = vmatprep.subr.bf16.mxu0 0
      %5582 = vmatpush1.bf16.msra.mxu0 0
      %5583 = vmatprep.subr.bf16.mxu0 0
      %5584 = vmatpush1.bf16.msra.mxu0 0
      %5585 = vmatprep.subr.bf16.mxu0 0
      %5586 = vmatpush1.bf16.msra.mxu0 0
      %5587 = vmatprep.subr.bf16.mxu0 0
      %5588 = vmatpush1.bf16.msra.mxu0 %v5562
      %5589 = vmatprep.subr.bf16.mxu0 0
      %5590 = vmatpush1.bf16.msra.mxu0 %v5560
      %5591 = vmatprep.subr.bf16.mxu0 0
      %5592 = vmatpush1.bf16.msra.mxu0 %v5558
      %5593 = vmatprep.subr.bf16.mxu0 0
      %5594 = vmatpush1.bf16.msra.mxu0 %v5556
      %5595 = vmatprep.subr.bf16.mxu0 0
      %5596 = vmatpush2.bf16.msra.mxu0 0
      %5597 = vmatprep.subr.bf16.mxu0 0
      %5598 = vmatpush2.bf16.msra.mxu0 0
      %5599 = vmatprep.subr.bf16.mxu0 0
      %5600 = vmatpush2.bf16.msra.mxu0 0
      %5601 = vmatprep.subr.bf16.mxu0 0
      %5602 = vmatpush2.bf16.msra.mxu0 0
      %5603 = vmatprep.subr.bf16.mxu0 0
      %5604 = vmatpush2.bf16.msra.mxu0 0
      %5605 = vmatprep.subr.bf16.mxu0 0
      %5606 = vmatpush2.bf16.msra.mxu0 0
      %5607 = vmatprep.subr.bf16.mxu0 0
      %5608 = vmatpush2.bf16.msra.mxu0 0
      %5609 = vmatprep.subr.bf16.mxu0 0
      %5610 = vmatpush2.bf16.msra.mxu0 0
      %5611 = vmatprep.mubr.bf16.mxu0 0
      %5612 = vmatmul.mubr.bf16.gmra.mxu0 %v5568
      %v5613 = vpop.f32.mrf.mxu0
      %v5614 = vadd.f32 0.0, %v5613
      %v5615 = vpop.f32.mrf.mxu0
      %v5616 = vpop.f32.mrf.mxu0
      %v5617 = vadd.f32 0.0, %v5616
      %v5618 = vpop.f32.mrf.mxu0
      %5619 = vmatprep.mubr.bf16.mxu0 0
      %5620 = vmatmul.mubr.bf16.gmra.mxu0 %v5571
      %v5621 = vpop.f32.mrf.mxu0
      %v5622 = vadd.f32 0.0, %v5621
      %v5623 = vpop.f32.mrf.mxu0
      %v5624 = vpop.f32.mrf.mxu0
      %v5625 = vadd.f32 0.0, %v5624
      %v5626 = vpop.f32.mrf.mxu0
      %5627 = vmatprep.mubr.bf16.mxu0 0
      %5628 = vmatmul.mubr.bf16.gmra.mxu0 %v5574
      %v5629 = vpop.f32.mrf.mxu0
      %v5630 = vadd.f32 0.0, %v5629
      %v5631 = vpop.f32.mrf.mxu0
      %v5632 = vpop.f32.mrf.mxu0
      %v5633 = vadd.f32 0.0, %v5632
      %v5634 = vpop.f32.mrf.mxu0
      %5635 = vmatprep.mubr.bf16.mxu0 0
      %5636 = vmatmul.mubr.bf16.gmra.mxu0 %v5577
      %v5637 = vpop.f32.mrf.mxu0
      %v5638 = vadd.f32 0.0, %v5637
      %v5639 = vpop.f32.mrf.mxu0
      %v5640 = vpop.f32.mrf.mxu0
      %v5641 = vadd.f32 0.0, %v5640
      %v5642 = vpop.f32.mrf.mxu0
      %5643 = vdwg.mxu0
      %5644 = vrot.lane.b32.xlu0 %v1135, 40
      %v5645 = vpop.permute.xlu0 %5644
      %5646 = vrot.lane.b32.xlu0 %v1136, 40
      %v5647 = vpop.permute.xlu0 %5646
      %5648 = vrot.lane.b32.xlu0 %v1137, 40
      %v5649 = vpop.permute.xlu0 %5648
      %5650 = vrot.lane.b32.xlu0 %v1138, 40
      %v5651 = vpop.permute.xlu0 %5650
      %v5657 = vsel %vm1544, %v5373, 0
      %v5660 = vsel %vm1544, %v5374, 0
      %v5663 = vsel %vm1544, %v5375, 0
      %v5666 = vsel %vm1544, %v5376, 0
      %5668 = vmatprep.subr.bf16.mxu0 0
      %5669 = vmatpush1.bf16.msra.mxu0 0
      %5670 = vmatprep.subr.bf16.mxu0 0
      %5671 = vmatpush1.bf16.msra.mxu0 0
      %5672 = vmatprep.subr.bf16.mxu0 0
      %5673 = vmatpush1.bf16.msra.mxu0 0
      %5674 = vmatprep.subr.bf16.mxu0 0
      %5675 = vmatpush1.bf16.msra.mxu0 0
      %5676 = vmatprep.subr.bf16.mxu0 0
      %5677 = vmatpush1.bf16.msra.mxu0 %v5651
      %5678 = vmatprep.subr.bf16.mxu0 0
      %5679 = vmatpush1.bf16.msra.mxu0 %v5649
      %5680 = vmatprep.subr.bf16.mxu0 0
      %5681 = vmatpush1.bf16.msra.mxu0 %v5647
      %5682 = vmatprep.subr.bf16.mxu0 0
      %5683 = vmatpush1.bf16.msra.mxu0 %v5645
      %5684 = vmatprep.subr.bf16.mxu0 0
      %5685 = vmatpush2.bf16.msra.mxu0 0
      %5686 = vmatprep.subr.bf16.mxu0 0
      %5687 = vmatpush2.bf16.msra.mxu0 0
      %5688 = vmatprep.subr.bf16.mxu0 0
      %5689 = vmatpush2.bf16.msra.mxu0 0
      %5690 = vmatprep.subr.bf16.mxu0 0
      %5691 = vmatpush2.bf16.msra.mxu0 0
      %5692 = vmatprep.subr.bf16.mxu0 0
      %5693 = vmatpush2.bf16.msra.mxu0 0
      %5694 = vmatprep.subr.bf16.mxu0 0
      %5695 = vmatpush2.bf16.msra.mxu0 0
      %5696 = vmatprep.subr.bf16.mxu0 0
      %5697 = vmatpush2.bf16.msra.mxu0 0
      %5698 = vmatprep.subr.bf16.mxu0 0
      %5699 = vmatpush2.bf16.msra.mxu0 0
      %5700 = vmatprep.mubr.bf16.mxu0 0
      %5701 = vmatmul.mubr.bf16.gmra.mxu0 %v5657
      %v5702 = vpop.f32.mrf.mxu0
      %v5703 = vadd.f32 0.0, %v5702
      %v5704 = vpop.f32.mrf.mxu0
      %v5705 = vpop.f32.mrf.mxu0
      %v5706 = vadd.f32 0.0, %v5705
      %v5707 = vpop.f32.mrf.mxu0
      %5708 = vmatprep.mubr.bf16.mxu0 0
      %5709 = vmatmul.mubr.bf16.gmra.mxu0 %v5660
      %v5710 = vpop.f32.mrf.mxu0
      %v5711 = vadd.f32 0.0, %v5710
      %v5712 = vpop.f32.mrf.mxu0
      %v5713 = vpop.f32.mrf.mxu0
      %v5714 = vadd.f32 0.0, %v5713
      %v5715 = vpop.f32.mrf.mxu0
      %5716 = vmatprep.mubr.bf16.mxu0 0
      %5717 = vmatmul.mubr.bf16.gmra.mxu0 %v5663
      %v5718 = vpop.f32.mrf.mxu0
      %v5719 = vadd.f32 0.0, %v5718
      %v5720 = vpop.f32.mrf.mxu0
      %v5721 = vpop.f32.mrf.mxu0
      %v5722 = vadd.f32 0.0, %v5721
      %v5723 = vpop.f32.mrf.mxu0
      %5724 = vmatprep.mubr.bf16.mxu0 0
      %5725 = vmatmul.mubr.bf16.gmra.mxu0 %v5666
      %v5726 = vpop.f32.mrf.mxu0
      %v5727 = vadd.f32 0.0, %v5726
      %v5728 = vpop.f32.mrf.mxu0
      %v5729 = vpop.f32.mrf.mxu0
      %v5730 = vadd.f32 0.0, %v5729
      %v5731 = vpop.f32.mrf.mxu0
      %5732 = vdwg.mxu0
      %5765 = vrot.lane.b32.xlu0 %v3148, 8
      %v5766 = vpop.permute.xlu0 %5765
      %5767 = vrot.lane.b32.xlu0 %v3151, 8
      %v5768 = vpop.permute.xlu0 %5767
      %5769 = vrot.lane.b32.xlu0 %v3156, 8
      %v5770 = vpop.permute.xlu0 %5769
      %5771 = vrot.lane.b32.xlu0 %v3159, 8
      %v5772 = vpop.permute.xlu0 %5771
      %5773 = vrot.lane.b32.xlu0 %v3164, 8
      %v5774 = vpop.permute.xlu0 %5773
      %5775 = vrot.lane.b32.xlu0 %v3167, 8
      %v5776 = vpop.permute.xlu0 %5775
      %5777 = vrot.lane.b32.xlu0 %v3172, 8
      %v5778 = vpop.permute.xlu0 %5777
      %5779 = vrot.lane.b32.xlu0 %v3175, 8
      %v5780 = vpop.permute.xlu0 %5779
      %5781 = vrot.lane.b32.xlu0 %v3237, 8
      %v5782 = vpop.permute.xlu0 %5781
      %5783 = vrot.lane.b32.xlu0 %v3240, 8
      %v5784 = vpop.permute.xlu0 %5783
      %5785 = vrot.lane.b32.xlu0 %v3245, 8
      %v5786 = vpop.permute.xlu0 %5785
      %5787 = vrot.lane.b32.xlu0 %v3248, 8
      %v5788 = vpop.permute.xlu0 %5787
      %5789 = vrot.lane.b32.xlu0 %v3253, 8
      %v5790 = vpop.permute.xlu0 %5789
      %5791 = vrot.lane.b32.xlu0 %v3256, 8
      %v5792 = vpop.permute.xlu0 %5791
      %5793 = vrot.lane.b32.xlu0 %v3261, 8
      %v5794 = vpop.permute.xlu0 %5793
      %5795 = vrot.lane.b32.xlu0 %v3264, 8
      %v5796 = vpop.permute.xlu0 %5795
      %5797 = vrot.lane.b32.xlu0 %v3326, 8
      %v5798 = vpop.permute.xlu0 %5797
      %5799 = vrot.lane.b32.xlu0 %v3329, 8
      %v5800 = vpop.permute.xlu0 %5799
      %5801 = vrot.lane.b32.xlu0 %v3334, 8
      %v5802 = vpop.permute.xlu0 %5801
      %5803 = vrot.lane.b32.xlu0 %v3337, 8
      %v5804 = vpop.permute.xlu0 %5803
      %5805 = vrot.lane.b32.xlu0 %v3342, 8
      %v5806 = vpop.permute.xlu0 %5805
      %5807 = vrot.lane.b32.xlu0 %v3345, 8
      %v5808 = vpop.permute.xlu0 %5807
      %5809 = vrot.lane.b32.xlu0 %v3350, 8
      %v5810 = vpop.permute.xlu0 %5809
      %5811 = vrot.lane.b32.xlu0 %v3353, 8
      %v5812 = vpop.permute.xlu0 %5811
      %5813 = vrot.lane.b32.xlu0 %v3415, 8
      %v5814 = vpop.permute.xlu0 %5813
      %5815 = vrot.lane.b32.xlu0 %v3418, 8
      %v5816 = vpop.permute.xlu0 %5815
      %5817 = vrot.lane.b32.xlu0 %v3423, 8
      %v5818 = vpop.permute.xlu0 %5817
      %5819 = vrot.lane.b32.xlu0 %v3426, 8
      %v5820 = vpop.permute.xlu0 %5819
      %5821 = vrot.lane.b32.xlu0 %v3431, 8
      %v5822 = vpop.permute.xlu0 %5821
      %5823 = vrot.lane.b32.xlu0 %v3434, 8
      %v5824 = vpop.permute.xlu0 %5823
      %5825 = vrot.lane.b32.xlu0 %v3439, 8
      %v5826 = vpop.permute.xlu0 %5825
      %5827 = vrot.lane.b32.xlu0 %v3442, 8
      %v5828 = vpop.permute.xlu0 %5827
      %5893 = vrot.lane.b32.xlu0 %v4292, 16
      %v5894 = vpop.permute.xlu0 %5893
      %5895 = vrot.lane.b32.xlu0 %v4295, 16
      %v5896 = vpop.permute.xlu0 %5895
      %5897 = vrot.lane.b32.xlu0 %v4300, 16
      %v5898 = vpop.permute.xlu0 %5897
      %5899 = vrot.lane.b32.xlu0 %v4303, 16
      %v5900 = vpop.permute.xlu0 %5899
      %5901 = vrot.lane.b32.xlu0 %v4308, 16
      %v5902 = vpop.permute.xlu0 %5901
      %5903 = vrot.lane.b32.xlu0 %v4311, 16
      %v5904 = vpop.permute.xlu0 %5903
      %5905 = vrot.lane.b32.xlu0 %v4316, 16
      %v5906 = vpop.permute.xlu0 %5905
      %5907 = vrot.lane.b32.xlu0 %v4319, 16
      %v5908 = vpop.permute.xlu0 %5907
      %5909 = vrot.lane.b32.xlu0 %v4381, 16
      %v5910 = vpop.permute.xlu0 %5909
      %5911 = vrot.lane.b32.xlu0 %v4384, 16
      %v5912 = vpop.permute.xlu0 %5911
      %5913 = vrot.lane.b32.xlu0 %v4389, 16
      %v5914 = vpop.permute.xlu0 %5913
      %5915 = vrot.lane.b32.xlu0 %v4392, 16
      %v5916 = vpop.permute.xlu0 %5915
      %5917 = vrot.lane.b32.xlu0 %v4397, 16
      %v5918 = vpop.permute.xlu0 %5917
      %5919 = vrot.lane.b32.xlu0 %v4400, 16
      %v5920 = vpop.permute.xlu0 %5919
      %5921 = vrot.lane.b32.xlu0 %v4405, 16
      %v5922 = vpop.permute.xlu0 %5921
      %5923 = vrot.lane.b32.xlu0 %v4408, 16
      %v5924 = vpop.permute.xlu0 %5923
      %5925 = vrot.lane.b32.xlu0 %v4470, 16
      %v5926 = vpop.permute.xlu0 %5925
      %5927 = vrot.lane.b32.xlu0 %v4473, 16
      %v5928 = vpop.permute.xlu0 %5927
      %5929 = vrot.lane.b32.xlu0 %v4478, 16
      %v5930 = vpop.permute.xlu0 %5929
      %5931 = vrot.lane.b32.xlu0 %v4481, 16
      %v5932 = vpop.permute.xlu0 %5931
      %5933 = vrot.lane.b32.xlu0 %v4486, 16
      %v5934 = vpop.permute.xlu0 %5933
      %5935 = vrot.lane.b32.xlu0 %v4489, 16
      %v5936 = vpop.permute.xlu0 %5935
      %5937 = vrot.lane.b32.xlu0 %v4494, 16
      %v5938 = vpop.permute.xlu0 %5937
      %5939 = vrot.lane.b32.xlu0 %v4497, 16
      %v5940 = vpop.permute.xlu0 %5939
      %5941 = vrot.lane.b32.xlu0 %v4559, 16
      %v5942 = vpop.permute.xlu0 %5941
      %5943 = vrot.lane.b32.xlu0 %v4562, 16
      %v5944 = vpop.permute.xlu0 %5943
      %5945 = vrot.lane.b32.xlu0 %v4567, 16
      %v5946 = vpop.permute.xlu0 %5945
      %5947 = vrot.lane.b32.xlu0 %v4570, 16
      %v5948 = vpop.permute.xlu0 %5947
      %5949 = vrot.lane.b32.xlu0 %v4575, 16
      %v5950 = vpop.permute.xlu0 %5949
      %5951 = vrot.lane.b32.xlu0 %v4578, 16
      %v5952 = vpop.permute.xlu0 %5951
      %5953 = vrot.lane.b32.xlu0 %v4583, 16
      %v5954 = vpop.permute.xlu0 %5953
      %5955 = vrot.lane.b32.xlu0 %v4586, 16
      %v5956 = vpop.permute.xlu0 %5955
      %6021 = vrot.lane.b32.xlu0 %v5436, 24
      %v6022 = vpop.permute.xlu0 %6021
      %6023 = vrot.lane.b32.xlu0 %v5439, 24
      %v6024 = vpop.permute.xlu0 %6023
      %6025 = vrot.lane.b32.xlu0 %v5444, 24
      %v6026 = vpop.permute.xlu0 %6025
      %6027 = vrot.lane.b32.xlu0 %v5447, 24
      %v6028 = vpop.permute.xlu0 %6027
      %6029 = vrot.lane.b32.xlu0 %v5452, 24
      %v6030 = vpop.permute.xlu0 %6029
      %6031 = vrot.lane.b32.xlu0 %v5455, 24
      %v6032 = vpop.permute.xlu0 %6031
      %6033 = vrot.lane.b32.xlu0 %v5460, 24
      %v6034 = vpop.permute.xlu0 %6033
      %6035 = vrot.lane.b32.xlu0 %v5463, 24
      %v6036 = vpop.permute.xlu0 %6035
      %6037 = vrot.lane.b32.xlu0 %v5525, 24
      %v6038 = vpop.permute.xlu0 %6037
      %6039 = vrot.lane.b32.xlu0 %v5528, 24
      %v6040 = vpop.permute.xlu0 %6039
      %6041 = vrot.lane.b32.xlu0 %v5533, 24
      %v6042 = vpop.permute.xlu0 %6041
      %6043 = vrot.lane.b32.xlu0 %v5536, 24
      %v6044 = vpop.permute.xlu0 %6043
      %6045 = vrot.lane.b32.xlu0 %v5541, 24
      %v6046 = vpop.permute.xlu0 %6045
      %6047 = vrot.lane.b32.xlu0 %v5544, 24
      %v6048 = vpop.permute.xlu0 %6047
      %6049 = vrot.lane.b32.xlu0 %v5549, 24
      %v6050 = vpop.permute.xlu0 %6049
      %6051 = vrot.lane.b32.xlu0 %v5552, 24
      %v6052 = vpop.permute.xlu0 %6051
      %6053 = vrot.lane.b32.xlu0 %v5614, 24
      %v6054 = vpop.permute.xlu0 %6053
      %6055 = vrot.lane.b32.xlu0 %v5617, 24
      %v6056 = vpop.permute.xlu0 %6055
      %6057 = vrot.lane.b32.xlu0 %v5622, 24
      %v6058 = vpop.permute.xlu0 %6057
      %6059 = vrot.lane.b32.xlu0 %v5625, 24
      %v6060 = vpop.permute.xlu0 %6059
      %6061 = vrot.lane.b32.xlu0 %v5630, 24
      %v6062 = vpop.permute.xlu0 %6061
      %6063 = vrot.lane.b32.xlu0 %v5633, 24
      %v6064 = vpop.permute.xlu0 %6063
      %6065 = vrot.lane.b32.xlu0 %v5638, 24
      %v6066 = vpop.permute.xlu0 %6065
      %6067 = vrot.lane.b32.xlu0 %v5641, 24
      %v6068 = vpop.permute.xlu0 %6067
      %6069 = vrot.lane.b32.xlu0 %v5703, 24
      %v6070 = vpop.permute.xlu0 %6069
      %6071 = vrot.lane.b32.xlu0 %v5706, 24
      %v6072 = vpop.permute.xlu0 %6071
      %6073 = vrot.lane.b32.xlu0 %v5711, 24
      %v6074 = vpop.permute.xlu0 %6073
      %6075 = vrot.lane.b32.xlu0 %v5714, 24
      %v6076 = vpop.permute.xlu0 %6075
      %6077 = vrot.lane.b32.xlu0 %v5719, 24
      %v6078 = vpop.permute.xlu0 %6077
      %6079 = vrot.lane.b32.xlu0 %v5722, 24
      %v6080 = vpop.permute.xlu0 %6079
      %6081 = vrot.lane.b32.xlu0 %v5727, 24
      %v6082 = vpop.permute.xlu0 %6081
      %6083 = vrot.lane.b32.xlu0 %v5730, 24
      %v6084 = vpop.permute.xlu0 %6083
      %v6117 = vsel %vm1151, %v1976, %v5766
      %v6118 = vsel %vm1151, %v1979, %v5768
      %v6119 = vsel %vm1151, %v1984, %v5770
      %v6120 = vsel %vm1151, %v1987, %v5772
      %v6121 = vsel %vm1151, %v1992, %v5774
      %v6122 = vsel %vm1151, %v1995, %v5776
      %v6123 = vsel %vm1151, %v2000, %v5778
      %v6124 = vsel %vm1151, %v2003, %v5780
      %v6125 = vsel %vm1151, %v2069, %v5782
      %v6126 = vsel %vm1151, %v2072, %v5784
      %v6127 = vsel %vm1151, %v2077, %v5786
      %v6128 = vsel %vm1151, %v2080, %v5788
      %v6129 = vsel %vm1151, %v2085, %v5790
      %v6130 = vsel %vm1151, %v2088, %v5792
      %v6131 = vsel %vm1151, %v2093, %v5794
      %v6132 = vsel %vm1151, %v2096, %v5796
      %v6133 = vsel %vm1151, %v2162, %v5798
      %v6134 = vsel %vm1151, %v2165, %v5800
      %v6135 = vsel %vm1151, %v2170, %v5802
      %v6136 = vsel %vm1151, %v2173, %v5804
      %v6137 = vsel %vm1151, %v2178, %v5806
      %v6138 = vsel %vm1151, %v2181, %v5808
      %v6139 = vsel %vm1151, %v2186, %v5810
      %v6140 = vsel %vm1151, %v2189, %v5812
      %v6141 = vsel %vm1151, %v2255, %v5814
      %v6142 = vsel %vm1151, %v2258, %v5816
      %v6143 = vsel %vm1151, %v2263, %v5818
      %v6144 = vsel %vm1151, %v2266, %v5820
      %v6145 = vsel %vm1151, %v2271, %v5822
      %v6146 = vsel %vm1151, %v2274, %v5824
      %v6147 = vsel %vm1151, %v2279, %v5826
      %v6148 = vsel %vm1151, %v2282, %v5828
      %vm6149 = vcmask 130048
      %v6150 = vsel %vm6149, %v6117, %v5894
      %v6151 = vsel %vm6149, %v6118, %v5896
      %v6152 = vsel %vm6149, %v6119, %v5898
      %v6153 = vsel %vm6149, %v6120, %v5900
      %v6154 = vsel %vm6149, %v6121, %v5902
      %v6155 = vsel %vm6149, %v6122, %v5904
      %v6156 = vsel %vm6149, %v6123, %v5906
      %v6157 = vsel %vm6149, %v6124, %v5908
      %v6158 = vsel %vm6149, %v6125, %v5910
      %v6159 = vsel %vm6149, %v6126, %v5912
      %v6160 = vsel %vm6149, %v6127, %v5914
      %v6161 = vsel %vm6149, %v6128, %v5916
      %v6162 = vsel %vm6149, %v6129, %v5918
      %v6163 = vsel %vm6149, %v6130, %v5920
      %v6164 = vsel %vm6149, %v6131, %v5922
      %v6165 = vsel %vm6149, %v6132, %v5924
      %v6166 = vsel %vm6149, %v6133, %v5926
      %v6167 = vsel %vm6149, %v6134, %v5928
      %v6168 = vsel %vm6149, %v6135, %v5930
      %v6169 = vsel %vm6149, %v6136, %v5932
      %v6170 = vsel %vm6149, %v6137, %v5934
      %v6171 = vsel %vm6149, %v6138, %v5936
      %v6172 = vsel %vm6149, %v6139, %v5938
      %v6173 = vsel %vm6149, %v6140, %v5940
      %v6174 = vsel %vm6149, %v6141, %v5942
      %v6175 = vsel %vm6149, %v6142, %v5944
      %v6176 = vsel %vm6149, %v6143, %v5946
      %v6177 = vsel %vm6149, %v6144, %v5948
      %v6178 = vsel %vm6149, %v6145, %v5950
      %v6179 = vsel %vm6149, %v6146, %v5952
      %v6180 = vsel %vm6149, %v6147, %v5954
      %v6181 = vsel %vm6149, %v6148, %v5956
      %vm6182 = vcmask 195584
      %v6183 = vsel %vm6182, %v6150, %v6022
      %v6184 = vsel %vm6182, %v6151, %v6024
      %v6185 = vsel %vm6182, %v6152, %v6026
      %v6186 = vsel %vm6182, %v6153, %v6028
      %v6187 = vsel %vm6182, %v6154, %v6030
      %v6188 = vsel %vm6182, %v6155, %v6032
      %v6189 = vsel %vm6182, %v6156, %v6034
      %v6190 = vsel %vm6182, %v6157, %v6036
      %v6191 = vsel %vm6182, %v6158, %v6038
      %v6192 = vsel %vm6182, %v6159, %v6040
      %v6193 = vsel %vm6182, %v6160, %v6042
      %v6194 = vsel %vm6182, %v6161, %v6044
      %v6195 = vsel %vm6182, %v6162, %v6046
      %v6196 = vsel %vm6182, %v6163, %v6048
      %v6197 = vsel %vm6182, %v6164, %v6050
      %v6198 = vsel %vm6182, %v6165, %v6052
      %v6199 = vsel %vm6182, %v6166, %v6054
      %v6200 = vsel %vm6182, %v6167, %v6056
      %v6201 = vsel %vm6182, %v6168, %v6058
      %v6202 = vsel %vm6182, %v6169, %v6060
      %v6203 = vsel %vm6182, %v6170, %v6062
      %v6204 = vsel %vm6182, %v6171, %v6064
      %v6205 = vsel %vm6182, %v6172, %v6066
      %v6206 = vsel %vm6182, %v6173, %v6068
      %v6207 = vsel %vm6182, %v6174, %v6070
      %v6208 = vsel %vm6182, %v6175, %v6072
      %v6209 = vsel %vm6182, %v6176, %v6074
      %v6210 = vsel %vm6182, %v6177, %v6076
      %v6211 = vsel %vm6182, %v6178, %v6078
      %v6212 = vsel %vm6182, %v6179, %v6080
      %v6213 = vsel %vm6182, %v6180, %v6082
      %v6214 = vsel %vm6182, %v6181, %v6084
      %v6215 = vpack.c.bf16 %v6184, %v6183
      %v6216 = vpack.c.bf16 %v6186, %v6185
      %v6217 = vpack.c.bf16 %v6188, %v6187
      %v6218 = vpack.c.bf16 %v6190, %v6189
      %v6219 = vpack.c.bf16 %v6192, %v6191
      %v6220 = vpack.c.bf16 %v6194, %v6193
      %v6221 = vpack.c.bf16 %v6196, %v6195
      %v6222 = vpack.c.bf16 %v6198, %v6197
      %v6223 = vpack.c.bf16 %v6200, %v6199
      %v6224 = vpack.c.bf16 %v6202, %v6201
      %v6225 = vpack.c.bf16 %v6204, %v6203
      %v6226 = vpack.c.bf16 %v6206, %v6205
      %v6227 = vpack.c.bf16 %v6208, %v6207
      %v6228 = vpack.c.bf16 %v6210, %v6209
      %v6229 = vpack.c.bf16 %v6212, %v6211
      %v6230 = vpack.c.bf16 %v6214, %v6213
      %v6231 = vld [vmem:[%s3] sm:$0xf]
      %v6232 = vld [vmem:[%s3 + $0x4] sm:$0xf]
      %v6233 = vld [vmem:[%s3 + $0x8] sm:$0xf]
      %v6234 = vld [vmem:[%s3 + $0xc] sm:$0xf]
      %v6235 = vld [vmem:[%s1 + $0x5] sm:$0x1]
      %v6236 = vlaneseq
      %v6237 = vshrl.u32 %v6236, 7
      %v6238 = vsub.s32 0, %v6237
      %v6239 = vrot.slane %v6235, %v6238
      %v6244 = vunpack.c.l.b16 %v6231
      %v6245 = vunpack.c.l.b16 %v6232
      %v6246 = vunpack.c.l.b16 %v6233
      %v6247 = vunpack.c.l.b16 %v6234
      %v6248 = vpack.c.b16 %v6245, %v6244
      %v6249 = vpack.c.b16 %v6247, %v6246
      %v6253 = vsel %vm241, %v6215, 0
      %v6256 = vsel %vm241, %v6216, 0
      %v6259 = vsel %vm241, %v6217, 0
      %v6262 = vsel %vm241, %v6218, 0
      %v6265 = vsel %vm241, %v6219, 0
      %v6268 = vsel %vm241, %v6220, 0
      %v6271 = vsel %vm241, %v6221, 0
      %v6274 = vsel %vm241, %v6222, 0
      %v6277 = vsel %vm241, %v6223, 0
      %v6280 = vsel %vm241, %v6224, 0
      %v6283 = vsel %vm241, %v6225, 0
      %v6286 = vsel %vm241, %v6226, 0
      %v6289 = vsel %vm241, %v6227, 0
      %v6292 = vsel %vm241, %v6228, 0
      %v6295 = vsel %vm241, %v6229, 0
      %v6298 = vsel %vm241, %v6230, 0
      %6300 = vmatprep.subr.bf16.mxu0 0
      %6301 = vmatpush1.bf16.msra.mxu0 0
      %6302 = vmatprep.subr.bf16.mxu0 0
      %6303 = vmatpush1.bf16.msra.mxu0 0
      %6304 = vmatprep.subr.bf16.mxu0 0
      %6305 = vmatpush1.bf16.msra.mxu0 0
      %6306 = vmatprep.subr.bf16.mxu0 0
      %6307 = vmatpush1.bf16.msra.mxu0 0
      %6308 = vmatprep.subr.bf16.mxu0 0
      %6309 = vmatpush1.bf16.msra.mxu0 0
      %6310 = vmatprep.subr.bf16.mxu0 0
      %6311 = vmatpush1.bf16.msra.mxu0 0
      %6312 = vmatprep.subr.bf16.mxu0 0
      %6313 = vmatpush1.bf16.msra.mxu0 %v6249
      %6314 = vmatprep.subr.bf16.mxu0 0
      %6315 = vmatpush1.bf16.msra.mxu0 %v6248
      %6316 = vmatprep.subr.bf16.mxu0 0
      %6317 = vmatpush2.bf16.msra.mxu0 0
      %6318 = vmatprep.subr.bf16.mxu0 0
      %6319 = vmatpush2.bf16.msra.mxu0 0
      %6320 = vmatprep.subr.bf16.mxu0 0
      %6321 = vmatpush2.bf16.msra.mxu0 0
      %6322 = vmatprep.subr.bf16.mxu0 0
      %6323 = vmatpush2.bf16.msra.mxu0 0
      %6324 = vmatprep.subr.bf16.mxu0 0
      %6325 = vmatpush2.bf16.msra.mxu0 0
      %6326 = vmatprep.subr.bf16.mxu0 0
      %6327 = vmatpush2.bf16.msra.mxu0 0
      %6328 = vmatprep.subr.bf16.mxu0 0
      %6329 = vmatpush2.bf16.msra.mxu0 0
      %6330 = vmatprep.subr.bf16.mxu0 0
      %6331 = vmatpush2.bf16.msra.mxu0 0
      %6332 = vmatprep.mubr.bf16.mxu0 0
      %6333 = vmatmul.mubr.bf16.gmra.mxu0 %v6253
      %v6334 = vpop.f32.mrf.mxu0
      %v6335 = vadd.f32 %v6239, %v6334
      %v6336 = vpop.f32.mrf.mxu0
      %v6337 = vpop.f32.mrf.mxu0
      %v6338 = vadd.f32 %v6239, %v6337
      %v6339 = vpop.f32.mrf.mxu0
      %6340 = vmatprep.mubr.bf16.mxu0 0
      %6341 = vmatmul.mubr.bf16.gmra.mxu0 %v6256
      %v6342 = vpop.f32.mrf.mxu0
      %v6343 = vadd.f32 %v6239, %v6342
      %v6344 = vpop.f32.mrf.mxu0
      %v6345 = vpop.f32.mrf.mxu0
      %v6346 = vadd.f32 %v6239, %v6345
      %v6347 = vpop.f32.mrf.mxu0
      %6348 = vmatprep.mubr.bf16.mxu0 0
      %6349 = vmatmul.mubr.bf16.gmra.mxu0 %v6259
      %v6350 = vpop.f32.mrf.mxu0
      %v6351 = vadd.f32 %v6239, %v6350
      %v6352 = vpop.f32.mrf.mxu0
      %v6353 = vpop.f32.mrf.mxu0
      %v6354 = vadd.f32 %v6239, %v6353
      %v6355 = vpop.f32.mrf.mxu0
      %6356 = vmatprep.mubr.bf16.mxu0 0
      %6357 = vmatmul.mubr.bf16.gmra.mxu0 %v6262
      %v6358 = vpop.f32.mrf.mxu0
      %v6359 = vadd.f32 %v6239, %v6358
      %v6360 = vpop.f32.mrf.mxu0
      %v6361 = vpop.f32.mrf.mxu0
      %v6362 = vadd.f32 %v6239, %v6361
      %v6363 = vpop.f32.mrf.mxu0
      %6364 = vmatprep.mubr.bf16.mxu0 0
      %6365 = vmatmul.mubr.bf16.gmra.mxu0 %v6265
      %v6366 = vpop.f32.mrf.mxu0
      %v6367 = vadd.f32 %v6239, %v6366
      %v6368 = vpop.f32.mrf.mxu0
      %v6369 = vpop.f32.mrf.mxu0
      %v6370 = vadd.f32 %v6239, %v6369
      %v6371 = vpop.f32.mrf.mxu0
      %6372 = vmatprep.mubr.bf16.mxu0 0
      %6373 = vmatmul.mubr.bf16.gmra.mxu0 %v6268
      %v6374 = vpop.f32.mrf.mxu0
      %v6375 = vadd.f32 %v6239, %v6374
      %v6376 = vpop.f32.mrf.mxu0
      %v6377 = vpop.f32.mrf.mxu0
      %v6378 = vadd.f32 %v6239, %v6377
      %v6379 = vpop.f32.mrf.mxu0
      %6380 = vmatprep.mubr.bf16.mxu0 0
      %6381 = vmatmul.mubr.bf16.gmra.mxu0 %v6271
      %v6382 = vpop.f32.mrf.mxu0
      %v6383 = vadd.f32 %v6239, %v6382
      %v6384 = vpop.f32.mrf.mxu0
      %v6385 = vpop.f32.mrf.mxu0
      %v6386 = vadd.f32 %v6239, %v6385
      %v6387 = vpop.f32.mrf.mxu0
      %6388 = vmatprep.mubr.bf16.mxu0 0
      %6389 = vmatmul.mubr.bf16.gmra.mxu0 %v6274
      %v6390 = vpop.f32.mrf.mxu0
      %v6391 = vadd.f32 %v6239, %v6390
      %v6392 = vpop.f32.mrf.mxu0
      %v6393 = vpop.f32.mrf.mxu0
      %v6394 = vadd.f32 %v6239, %v6393
      %v6395 = vpop.f32.mrf.mxu0
      %6396 = vmatprep.mubr.bf16.mxu0 0
      %6397 = vmatmul.mubr.bf16.gmra.mxu0 %v6277
      %v6398 = vpop.f32.mrf.mxu0
      %v6399 = vadd.f32 %v6239, %v6398
      %v6400 = vpop.f32.mrf.mxu0
      %v6401 = vpop.f32.mrf.mxu0
      %v6402 = vadd.f32 %v6239, %v6401
      %v6403 = vpop.f32.mrf.mxu0
      %6404 = vmatprep.mubr.bf16.mxu0 0
      %6405 = vmatmul.mubr.bf16.gmra.mxu0 %v6280
      %v6406 = vpop.f32.mrf.mxu0
      %v6407 = vadd.f32 %v6239, %v6406
      %v6408 = vpop.f32.mrf.mxu0
      %v6409 = vpop.f32.mrf.mxu0
      %v6410 = vadd.f32 %v6239, %v6409
      %v6411 = vpop.f32.mrf.mxu0
      %6412 = vmatprep.mubr.bf16.mxu0 0
      %6413 = vmatmul.mubr.bf16.gmra.mxu0 %v6283
      %v6414 = vpop.f32.mrf.mxu0
      %v6415 = vadd.f32 %v6239, %v6414
      %v6416 = vpop.f32.mrf.mxu0
      %v6417 = vpop.f32.mrf.mxu0
      %v6418 = vadd.f32 %v6239, %v6417
      %v6419 = vpop.f32.mrf.mxu0
      %6420 = vmatprep.mubr.bf16.mxu0 0
      %6421 = vmatmul.mubr.bf16.gmra.mxu0 %v6286
      %v6422 = vpop.f32.mrf.mxu0
      %v6423 = vadd.f32 %v6239, %v6422
      %v6424 = vpop.f32.mrf.mxu0
      %v6425 = vpop.f32.mrf.mxu0
      %v6426 = vadd.f32 %v6239, %v6425
      %v6427 = vpop.f32.mrf.mxu0
      %6428 = vmatprep.mubr.bf16.mxu0 0
      %6429 = vmatmul.mubr.bf16.gmra.mxu0 %v6289
      %v6430 = vpop.f32.mrf.mxu0
      %v6431 = vadd.f32 %v6239, %v6430
      %v6432 = vpop.f32.mrf.mxu0
      %v6433 = vpop.f32.mrf.mxu0
      %v6434 = vadd.f32 %v6239, %v6433
      %v6435 = vpop.f32.mrf.mxu0
      %6436 = vmatprep.mubr.bf16.mxu0 0
      %6437 = vmatmul.mubr.bf16.gmra.mxu0 %v6292
      %v6438 = vpop.f32.mrf.mxu0
      %v6439 = vadd.f32 %v6239, %v6438
      %v6440 = vpop.f32.mrf.mxu0
      %v6441 = vpop.f32.mrf.mxu0
      %v6442 = vadd.f32 %v6239, %v6441
      %v6443 = vpop.f32.mrf.mxu0
      %6444 = vmatprep.mubr.bf16.mxu0 0
      %6445 = vmatmul.mubr.bf16.gmra.mxu0 %v6295
      %v6446 = vpop.f32.mrf.mxu0
      %v6447 = vadd.f32 %v6239, %v6446
      %v6448 = vpop.f32.mrf.mxu0
      %v6449 = vpop.f32.mrf.mxu0
      %v6450 = vadd.f32 %v6239, %v6449
      %v6451 = vpop.f32.mrf.mxu0
      %6452 = vmatprep.mubr.bf16.mxu0 0
      %6453 = vmatmul.mubr.bf16.gmra.mxu0 %v6298
      %v6454 = vpop.f32.mrf.mxu0
      %v6455 = vadd.f32 %v6239, %v6454
      %v6456 = vpop.f32.mrf.mxu0
      %v6457 = vpop.f32.mrf.mxu0
      %v6458 = vadd.f32 %v6239, %v6457
      %v6459 = vpop.f32.mrf.mxu0
      %6460 = vdwg.mxu0
      %v6461 = vadd.f32 %v207, %v6335
      %v6462 = vadd.f32 %v208, %v6338
      %v6463 = vadd.f32 %v209, %v6343
      %v6464 = vadd.f32 %v210, %v6346
      %v6465 = vadd.f32 %v211, %v6351
      %v6466 = vadd.f32 %v212, %v6354
      %v6467 = vadd.f32 %v213, %v6359
      %v6468 = vadd.f32 %v214, %v6362
      %v6469 = vadd.f32 %v215, %v6367
      %v6470 = vadd.f32 %v216, %v6370
      %v6471 = vadd.f32 %v217, %v6375
      %v6472 = vadd.f32 %v218, %v6378
      %v6473 = vadd.f32 %v219, %v6383
      %v6474 = vadd.f32 %v220, %v6386
      %v6475 = vadd.f32 %v221, %v6391
      %v6476 = vadd.f32 %v222, %v6394
      %v6477 = vadd.f32 %v223, %v6399
      %v6478 = vadd.f32 %v224, %v6402
      %v6479 = vadd.f32 %v225, %v6407
      %v6480 = vadd.f32 %v226, %v6410
      %v6481 = vadd.f32 %v227, %v6415
      %v6482 = vadd.f32 %v228, %v6418
      %v6483 = vadd.f32 %v229, %v6423
      %v6484 = vadd.f32 %v230, %v6426
      %v6485 = vadd.f32 %v231, %v6431
      %v6486 = vadd.f32 %v232, %v6434
      %v6487 = vadd.f32 %v233, %v6439
      %v6488 = vadd.f32 %v234, %v6442
      %v6489 = vadd.f32 %v235, %v6447
      %v6490 = vadd.f32 %v236, %v6450
      %v6491 = vadd.f32 %v237, %v6455
      %v6492 = vadd.f32 %v238, %v6458
      %6493 = vst.msk [vmem:[%s204] sm:$0xff] %vm241, %v6461
      %6494 = vst.msk [vmem:[%s204 + $0x8] sm:$0xff] %vm241, %v6462
      %6495 = vst.msk [vmem:[%s204 + $0x10] sm:$0xff] %vm241, %v6463
      %6496 = vst.msk [vmem:[%s204 + $0x18] sm:$0xff] %vm241, %v6464
      %6497 = vst.msk [vmem:[%s204 + $0x20] sm:$0xff] %vm241, %v6465
      %6498 = vst.msk [vmem:[%s204 + $0x28] sm:$0xff] %vm241, %v6466
      %6499 = vst.msk [vmem:[%s204 + $0x30] sm:$0xff] %vm241, %v6467
      %6500 = vst.msk [vmem:[%s204 + $0x38] sm:$0xff] %vm241, %v6468
      %6501 = vst.msk [vmem:[%s204 + $0x40] sm:$0xff] %vm241, %v6469
      %6502 = vst.msk [vmem:[%s204 + $0x48] sm:$0xff] %vm241, %v6470
      %6503 = vst.msk [vmem:[%s204 + $0x50] sm:$0xff] %vm241, %v6471
      %6504 = vst.msk [vmem:[%s204 + $0x58] sm:$0xff] %vm241, %v6472
      %6505 = vst.msk [vmem:[%s204 + $0x60] sm:$0xff] %vm241, %v6473
      %6506 = vst.msk [vmem:[%s204 + $0x68] sm:$0xff] %vm241, %v6474
      %6507 = vst.msk [vmem:[%s204 + $0x70] sm:$0xff] %vm241, %v6475
      %6508 = vst.msk [vmem:[%s204 + $0x78] sm:$0xff] %vm241, %v6476
      %6509 = vst.msk [vmem:[%s204 + $0x80] sm:$0xff] %vm241, %v6477
      %6510 = vst.msk [vmem:[%s204 + $0x88] sm:$0xff] %vm241, %v6478
      %6511 = vst.msk [vmem:[%s204 + $0x90] sm:$0xff] %vm241, %v6479
      %6512 = vst.msk [vmem:[%s204 + $0x98] sm:$0xff] %vm241, %v6480
      %6513 = vst.msk [vmem:[%s204 + $0xa0] sm:$0xff] %vm241, %v6481
      %6514 = vst.msk [vmem:[%s204 + $0xa8] sm:$0xff] %vm241, %v6482
      %6515 = vst.msk [vmem:[%s204 + $0xb0] sm:$0xff] %vm241, %v6483
      %6516 = vst.msk [vmem:[%s204 + $0xb8] sm:$0xff] %vm241, %v6484
      %6517 = vst.msk [vmem:[%s204 + $0xc0] sm:$0xff] %vm241, %v6485
      %6518 = vst.msk [vmem:[%s204 + $0xc8] sm:$0xff] %vm241, %v6486
      %6519 = vst.msk [vmem:[%s204 + $0xd0] sm:$0xff] %vm241, %v6487
      %6520 = vst.msk [vmem:[%s204 + $0xd8] sm:$0xff] %vm241, %v6488
      %6521 = vst.msk [vmem:[%s204 + $0xe0] sm:$0xff] %vm241, %v6489
      %6522 = vst.msk [vmem:[%s204 + $0xe8] sm:$0xff] %vm241, %v6490
      %6523 = vst.msk [vmem:[%s204 + $0xf0] sm:$0xff] %vm241, %v6491
      %6524 = vst.msk [vmem:[%s204 + $0xf8] sm:$0xff] %vm241, %v6492
      %s6525 = smul.u32 4, %s15
      %p6526 = scmp.lt.s32.totalorder %s6525, 7
      %s6527 = scalar_select %p6526, %s6525, 7
      %s6528 = smul.addr %s6527, 8
      %s6529 = smul.addr %s6528, 8
      %s6530 = scalar_lea.vmem %s4, %s6529
      // Predicated region
      $region37: #{self_attention_2d.1} parent=35 // pred_check
        %p6531 = pneg %p122
      $region38: #{self_attention_2d.1} parent=35 // pred_check_branch
        %6533 = sbr.rel (%p6531) target = $region40
      $region39: #{self_attention_2d.1} parent=35 // pred_region
        %s6534 = smul.u32 4, %s15
      $region40: #{self_attention_2d.1} parent=35 // pred_fallthru
        _
    $region36: #{self_attention_2d.1} parent=5 // pred_fallthru
      _
    %p6535 = scmp.le.s32.totalorder 2, %s10
    // Predicated region
    $region41: #{self_attention_2d.1} parent=5 // pred_check
      %p6536 = pneg %p6535
    $region42: #{self_attention_2d.1} parent=5 // pred_check_branch
      %6538 = sbr.rel (%p6536) target = $region44
    $region43: #{self_attention_2d.1} parent=5 // pred_region
      %s6539 = ssub.s32 %s10, 2
      // Predicated region
      $region45: #{self_attention_2d.1} parent=43 // pred_check
        %p6540 = pneg %p128
      $region46: #{self_attention_2d.1} parent=43 // pred_check_branch
        %6542 = sbr.rel (%p6540) target = $region48
      $region47: #{self_attention_2d.1} parent=43 // pred_region
        %s6543 = smul.u32 4, %s16
        %p6544 = scmp.lt.s32.totalorder %s6543, 7
        %s6545 = scalar_select %p6544, %s6543, 7
        %s6546 = smul.addr %s6545, 8
        %s6547 = smul.addr %s6546, 8
        %s6548 = scalar_lea.vmem %s4, %s6547
      $region48: #{self_attention_2d.1} parent=43 // pred_fallthru
        _
    $region44: #{self_attention_2d.1} parent=5 // pred_fallthru
      _
  $region6: #{self_attention_2d.1} parent=0 // loop_footer
    %s14 = sadd.s32 1, %s10
  $region7: #{self_attention_2d.1} parent=0 // loop_footer_branch
    %9 = sbr.rel target = $region3
  $region8: #{self_attention_2d.1} parent=0 // loop_exit
    _

</llo_original>
